<compile_context>
chip_gen: v7x
topology: tpu7x:2x2x1
jax: 0.10.0
libtpu: 0.0.40
codegen_flags: <defaults>
</compile_context>

<pallas_src>
import math

import jax
import jax.numpy as jnp
from jax.experimental import pallas as pl
from jax.experimental.pallas import tpu as pltpu

# ---------------- model config (small, consistent with the module) -------------
HIDDEN = 32          # bert.config.hidden_size (synthetic; real PhoBERT = 768)
HEADS = 4
HEAD_DIM = HIDDEN // HEADS
FFN = 64             # intermediate size
LAYERS = 2
VOCAB = 64
MAX_POS = 32
N_CLASSES = 3
PAD_CLASSES = 128    # lane-dense classifier output slab
LN_EPS = 1e-5
BATCH = 2
SEQ = 8
ROWS = BATCH * SEQ

# lane-aligned packing offsets
QKV_LANES = 3 * 128  # padded fused QKV width (Q/K/V each in its own 128-lane block)
Q_OFF, K_OFF, V_OFF = 0, 128, 256
HEADW_LANES = 256    # pooler weight at lanes [0:H], fc weight at lanes [128:256]
FC_OFF = 128
GVEC_LANES = 128


# --------------------------- fused encoder kernel -------------------------------
def _encoder_kernel(emb_ref, mask_ref, gvecs_ref, lvecs_ref,
                    wqkv_ref, wo_ref, w1_ref, w2_ref, whead_ref,
                    o_ref):
    def layernorm(x, g, b):
        mu = jnp.mean(x, axis=-1, keepdims=True)
        var = jnp.mean((x - mu) ** 2, axis=-1, keepdims=True)
        return (x - mu) * jax.lax.rsqrt(var + LN_EPS) * g + b

    def mm(x, w):
        # bf16 operands feed the MXU natively on all generations; f32 accumulate.
        return jnp.dot(x.astype(jnp.bfloat16), w.astype(jnp.bfloat16),
                       preferred_element_type=jnp.float32)

    # --- global packed vectors: emb-LN gamma/beta, pooler bias, fc bias ---
    gv = gvecs_ref[...]                                    # (4, 128) f32
    emb_g = gv[0:1, :HIDDEN]
    emb_b = gv[1:2, :HIDDEN]
    b_pool = gv[2:3, :HIDDEN]
    b_fc = gv[3:4, :]                                      # (1, 128)

    # --- embedding LayerNorm ---
    h = layernorm(emb_ref[...], emb_g, emb_b)              # (ROWS, H) f32

    # Additive key-side mask bias, (B, S); broadcast per head below.
    mask_bias = (1.0 - mask_ref[...]) * (-1e9)

    for l in range(LAYERS):
        # --- per-layer packed vectors ---
        lv = lvecs_ref[l]                                  # (8, 384) f32
        b_qkv = lv[0:1, :]                                 # (1, 384) padded like w_qkv
        b_o = lv[1:2, :HIDDEN]
        ln1_g = lv[2:3, :HIDDEN]
        ln1_b = lv[3:4, :HIDDEN]
        b_1 = lv[4:5, :FFN]
        b_2 = lv[5:6, :HIDDEN]
        ln2_g = lv[6:7, :HIDDEN]
        ln2_b = lv[7:8, :HIDDEN]

        # ---- fused QKV projection: one (ROWS, 3*128) matmul (1/sqrt(d) folded
        #      into the Q weight columns at init time) ----
        qkv = mm(h, wqkv_ref[l]) + b_qkv                   # (ROWS, 384)

        # ---- per-(batch, head) attention, entirely in vregs ----
        batch_ctx = []
        for bi in range(BATCH):
            r0 = bi * SEQ
            bias_b = mask_bias[bi:bi + 1, :]               # (1, S)
            head_ctx = []
            for hd in range(HEADS):
                c0 = hd * HEAD_DIM
                q_bh = qkv[r0:r0 + SEQ, Q_OFF + c0:Q_OFF + c0 + HEAD_DIM]
                k_bh = qkv[r0:r0 + SEQ, K_OFF + c0:K_OFF + c0 + HEAD_DIM]
                v_bh = qkv[r0:r0 + SEQ, V_OFF + c0:V_OFF + c0 + HEAD_DIM]
                # scores[q, k] = sum_d q[q, d] * k[k, d]   (already pre-scaled)
                s_bh = jax.lax.dot_general(
                    q_bh.astype(jnp.bfloat16), k_bh.astype(jnp.bfloat16),
                    (((1,), (1,)), ((), ())),
                    preferred_element_type=jnp.float32)
                s_bh = s_bh + bias_b
                s_bh = s_bh - jnp.max(s_bh, axis=-1, keepdims=True)
                p = jnp.exp(s_bh)
                p = p * pl.reciprocal(jnp.sum(p, axis=-1, keepdims=True),
                                      approx=True)
                head_ctx.append(jnp.dot(p.astype(jnp.bfloat16),
                                        v_bh.astype(jnp.bfloat16),
                                        preferred_element_type=jnp.float32))
            # heads along lanes -> (S, HIDDEN)
            batch_ctx.append(jnp.concatenate(head_ctx, axis=-1))
        # batches along sublanes -> (ROWS, HIDDEN); no VMEM scratch round trip
        ctx = jnp.concatenate(batch_ctx, axis=0)

        # ---- attention output projection + residual LayerNorm ----
        attn_out = mm(ctx, wo_ref[l]) + b_o
        h = layernorm(attn_out + h, ln1_g, ln1_b)

        # ---- FFN (tanh-approx GELU -> EUP; synthetic encoder, so approx is OK) ----
        ff = mm(h, w1_ref[l]) + b_1
        ff = jax.nn.gelu(ff, approximate=True)
        ff = mm(ff, w2_ref[l]) + b_2
        h = layernorm(ff + h, ln2_g, ln2_b)

    # ---- pooler: tanh(W * hidden[:, 0] + b) on the [CLS] rows (values only) ----
    cls_rows = jnp.concatenate(
        [h[bi * SEQ:bi * SEQ + 1, :] for bi in range(BATCH)], axis=0)   # (B, H)
    w_head = whead_ref[...]                                             # (H, 256) bf16
    pooled = jnp.tanh(mm(cls_rows, w_head[:, :HIDDEN]) + b_pool)

    # ---- dropout (eval: identity) then fc head into a lane-dense (B, 128) slab ----
    # TODO(synk): nn.Dropout(p=0.4) is identity in eval mode; train-mode stochastic
    # drop (pltpu.prng_seed/prng_random_bits) omitted.
    o_ref[...] = mm(pooled, w_head[:, FC_OFF:FC_OFF + PAD_CLASSES]) + b_fc


# ------------------------------- parameter init ---------------------------------
def init_params(key):
    def nrm(k, shape, std=0.02):
        return std * jax.random.normal(k, shape, dtype=jnp.float32)

    keys = iter(jax.random.split(key, 8 + LAYERS * 4))
    p = {}
    p["word_emb"] = nrm(next(keys), (VOCAB, HIDDEN))
    p["pos_emb"] = nrm(next(keys), (MAX_POS, HIDDEN))
    p["type_emb"] = nrm(next(keys), (1, HIDDEN))

    # --- global packed small vectors: (4, 128) ---
    # row 0: emb LN gamma, row 1: emb LN beta, row 2: pooler bias, row 3: fc bias
    b_fc = jax.random.normal(next(keys), (N_CLASSES,), dtype=jnp.float32)
    gvecs = jnp.zeros((4, GVEC_LANES), jnp.float32)
    gvecs = gvecs.at[0, :HIDDEN].set(1.0)
    gvecs = gvecs.at[3, :N_CLASSES].set(b_fc)
    p["gvecs"] = gvecs

    # --- per-layer packed small vectors: (LAYERS, 8, 384) ---
    # rows: 0 b_qkv(padded) | 1 bo | 2 ln1_g | 3 ln1_b | 4 b1 | 5 b2 | 6 ln2_g | 7 ln2_b
    lvecs = jnp.zeros((LAYERS, 8, QKV_LANES), jnp.float32)
    lvecs = lvecs.at[:, 2, :HIDDEN].set(1.0)
    lvecs = lvecs.at[:, 6, :HIDDEN].set(1.0)
    p["lvecs"] = lvecs

    scale = 1.0 / math.sqrt(HEAD_DIM)
    wqkv, wo, w1, w2 = [], [], [], []
    for _ in range(LAYERS):
        w_all = nrm(next(keys), (HIDDEN, 3 * HIDDEN))
        pad = jnp.zeros((HIDDEN, QKV_LANES), jnp.float32)
        pad = pad.at[:, Q_OFF:Q_OFF + HIDDEN].set(w_all[:, :HIDDEN] * scale)
        pad = pad.at[:, K_OFF:K_OFF + HIDDEN].set(w_all[:, HIDDEN:2 * HIDDEN])
        pad = pad.at[:, V_OFF:V_OFF + HIDDEN].set(w_all[:, 2 * HIDDEN:])
        wqkv.append(pad)
        wo.append(nrm(next(keys), (HIDDEN, HIDDEN)))
        w1.append(nrm(next(keys), (HIDDEN, FFN)))
        w2.append(nrm(next(keys), (FFN, HIDDEN)))
    p["w_qkv"] = jnp.stack(wqkv).astype(jnp.bfloat16)   # (L, H, 384)
    p["wo"] = jnp.stack(wo).astype(jnp.bfloat16)        # (L, H, H)
    p["w1"] = jnp.stack(w1).astype(jnp.bfloat16)        # (L, H, FFN)
    p["w2"] = jnp.stack(w2).astype(jnp.bfloat16)        # (L, FFN, H)

    # --- pooler + fc head packed into one lane-aligned weight: (H, 256) ---
    # fc: weight ~ N(0, 0.02); bias ~ N(0, 1) (matches nn.init.normal_ in the module)
    w_pool = nrm(next(keys), (HIDDEN, HIDDEN))
    w_fc = nrm(next(keys), (HIDDEN, N_CLASSES))
    w_head = jnp.zeros((HIDDEN, HEADW_LANES), jnp.float32)
    w_head = w_head.at[:, :HIDDEN].set(w_pool)
    w_head = w_head.at[:, FC_OFF:FC_OFF + N_CLASSES].set(w_fc)
    p["w_head"] = w_head.astype(jnp.bfloat16)
    return p


# ------------------------------- forward pass ------------------------------------
def sentiment_classifier_forward(params, input_ids, attention_mask):
    b, s = input_ids.shape

    # Embedding gathers stay in plain JAX (glue); everything after is one kernel.
    word = params["word_emb"][input_ids]                        # (B, S, H)
    pos = params["pos_emb"][jnp.arange(s)][None, :, :]          # (1, S, H)
    typ = params["type_emb"][0][None, None, :]                  # (1, 1, H)
    emb = (word + pos + typ).reshape(b * s, HIDDEN)
    mask_f = attention_mask.astype(jnp.float32)                 # (B, S)

    vmem = pl.BlockSpec(memory_space=pltpu.MemorySpace.VMEM)
    logits_pad = pl.pallas_call(
        _encoder_kernel,
        out_shape=jax.ShapeDtypeStruct((b, PAD_CLASSES), jnp.float32),
        in_specs=[vmem] * 9,
        out_specs=vmem,
    )(emb, mask_f,
      params["gvecs"], params["lvecs"],
      params["w_qkv"], params["wo"], params["w1"], params["w2"],
      params["w_head"])

    return logits_pad[:, :N_CLASSES]                            # (B, n_classes)


# ------------------------------------ main ---------------------------------------
if __name__ == "__main__":
    key = jax.random.PRNGKey(0)
    pkey, ikey = jax.random.split(key)
    params = init_params(pkey)

    input_ids = jax.random.randint(ikey, (BATCH, SEQ), 0, VOCAB, dtype=jnp.int32)
    attention_mask = jnp.ones((BATCH, SEQ), dtype=jnp.int32).at[:, SEQ - 2:].set(0)

    forward = jax.jit(sentiment_classifier_forward)
    logits = forward(params, input_ids, attention_mask)
    logits = jax.block_until_ready(logits)
    assert logits.shape == (BATCH, N_CLASSES) and logits.dtype == jnp.float32
    print("KERNEL_OK")
</pallas_src>

<mosaic_0001>
module attributes {stable_mosaic.version = 11 : i64} {
  func.func @_encoder_kernel(%arg0: memref<16x32xf32, #tpu.memory_space<vmem>>, %arg1: memref<2x8xf32, #tpu.memory_space<vmem>>, %arg2: memref<4x128xf32, #tpu.memory_space<vmem>>, %arg3: memref<2x8x384xf32, #tpu.memory_space<vmem>>, %arg4: memref<2x32x384xbf16, #tpu.memory_space<vmem>>, %arg5: memref<2x32x32xbf16, #tpu.memory_space<vmem>>, %arg6: memref<2x32x64xbf16, #tpu.memory_space<vmem>>, %arg7: memref<2x64x32xbf16, #tpu.memory_space<vmem>>, %arg8: memref<32x256xbf16, #tpu.memory_space<vmem>>, %arg9: memref<2x128xf32, #tpu.memory_space<vmem>>) attributes {dimension_semantics = [], scalar_prefetch = 0 : i64, scratch_operands = 0 : i64, tpu.core_type = #tpu.core_type<tc>} {
    %c0 = arith.constant 0 : index
    %c0_0 = arith.constant 0 : index
    %0 = vector.load %arg2[%c0, %c0_0] : memref<4x128xf32, #tpu.memory_space<vmem>>, vector<4x128xf32>
    %1 = vector.extract_strided_slice %0 {offsets = [0, 0], sizes = [1, 32], strides = [1, 1]} : vector<4x128xf32> to vector<1x32xf32>
    %2 = vector.extract_strided_slice %0 {offsets = [1, 0], sizes = [1, 32], strides = [1, 1]} : vector<4x128xf32> to vector<1x32xf32>
    %3 = vector.extract_strided_slice %0 {offsets = [2, 0], sizes = [1, 32], strides = [1, 1]} : vector<4x128xf32> to vector<1x32xf32>
    %4 = vector.extract_strided_slice %0 {offsets = [3, 0], sizes = [1, 128], strides = [1, 1]} : vector<4x128xf32> to vector<1x128xf32>
    %c0_1 = arith.constant 0 : index
    %c0_2 = arith.constant 0 : index
    %5 = vector.load %arg0[%c0_1, %c0_2] : memref<16x32xf32, #tpu.memory_space<vmem>>, vector<16x32xf32>
    %cst = arith.constant dense<0.000000e+00> : vector<16xf32>
    %6 = vector.multi_reduction <add>, %5, %cst [1] : vector<16x32xf32> to vector<16xf32>
    %7 = vector.shape_cast %6 : vector<16xf32> to vector<16x1xf32>
    %cst_3 = arith.constant 3.200000e+01 : f32
    %8 = vector.broadcast %cst_3 : f32 to vector<16x1xf32>
    %9 = arith.divf %7, %8 : vector<16x1xf32>
    %10 = vector.broadcast %9 : vector<16x1xf32> to vector<16x32xf32>
    %11 = arith.subf %5, %10 : vector<16x32xf32>
    %12 = arith.mulf %11, %11 : vector<16x32xf32>
    %cst_4 = arith.constant dense<0.000000e+00> : vector<16xf32>
    %13 = vector.multi_reduction <add>, %12, %cst_4 [1] : vector<16x32xf32> to vector<16xf32>
    %14 = vector.shape_cast %13 : vector<16xf32> to vector<16x1xf32>
    %cst_5 = arith.constant 3.200000e+01 : f32
    %15 = vector.broadcast %cst_5 : f32 to vector<16x1xf32>
    %16 = arith.divf %14, %15 : vector<16x1xf32>
    %17 = vector.broadcast %9 : vector<16x1xf32> to vector<16x32xf32>
    %18 = arith.subf %5, %17 : vector<16x32xf32>
    %cst_6 = arith.constant 9.99999974E-6 : f32
    %19 = vector.broadcast %cst_6 : f32 to vector<16x1xf32>
    %20 = arith.addf %16, %19 : vector<16x1xf32>
    %21 = math.rsqrt %20 : vector<16x1xf32>
    %22 = vector.broadcast %21 : vector<16x1xf32> to vector<16x32xf32>
    %23 = arith.mulf %18, %22 : vector<16x32xf32>
    %24 = vector.broadcast %1 : vector<1x32xf32> to vector<16x32xf32>
    %25 = arith.mulf %23, %24 : vector<16x32xf32>
    %26 = vector.broadcast %2 : vector<1x32xf32> to vector<16x32xf32>
    %27 = arith.addf %25, %26 : vector<16x32xf32>
    %c0_7 = arith.constant 0 : index
    %c0_8 = arith.constant 0 : index
    %28 = vector.load %arg1[%c0_7, %c0_8] : memref<2x8xf32, #tpu.memory_space<vmem>>, vector<2x8xf32>
    %cst_9 = arith.constant 1.000000e+00 : f32
    %29 = vector.broadcast %cst_9 : f32 to vector<2x8xf32>
    %30 = arith.subf %29, %28 : vector<2x8xf32>
    %cst_10 = arith.constant -1.000000e+09 : f32
    %31 = vector.broadcast %cst_10 : f32 to vector<2x8xf32>
    %32 = arith.mulf %30, %31 : vector<2x8xf32>
    %c0_11 = arith.constant 0 : index
    %c0_12 = arith.constant 0 : index
    %c0_13 = arith.constant 0 : index
    %33 = vector.load %arg3[%c0_11, %c0_12, %c0_13] : memref<2x8x384xf32, #tpu.memory_space<vmem>>, vector<1x8x384xf32>
    %34 = vector.shape_cast %33 : vector<1x8x384xf32> to vector<8x384xf32>
    %35 = vector.extract_strided_slice %34 {offsets = [0, 0], sizes = [1, 384], strides = [1, 1]} : vector<8x384xf32> to vector<1x384xf32>
    %36 = vector.extract_strided_slice %34 {offsets = [1, 0], sizes = [1, 32], strides = [1, 1]} : vector<8x384xf32> to vector<1x32xf32>
    %37 = vector.extract_strided_slice %34 {offsets = [2, 0], sizes = [1, 32], strides = [1, 1]} : vector<8x384xf32> to vector<1x32xf32>
    %38 = vector.extract_strided_slice %34 {offsets = [3, 0], sizes = [1, 32], strides = [1, 1]} : vector<8x384xf32> to vector<1x32xf32>
    %39 = vector.extract_strided_slice %34 {offsets = [4, 0], sizes = [1, 64], strides = [1, 1]} : vector<8x384xf32> to vector<1x64xf32>
    %40 = vector.extract_strided_slice %34 {offsets = [5, 0], sizes = [1, 32], strides = [1, 1]} : vector<8x384xf32> to vector<1x32xf32>
    %41 = vector.extract_strided_slice %34 {offsets = [6, 0], sizes = [1, 32], strides = [1, 1]} : vector<8x384xf32> to vector<1x32xf32>
    %42 = vector.extract_strided_slice %34 {offsets = [7, 0], sizes = [1, 32], strides = [1, 1]} : vector<8x384xf32> to vector<1x32xf32>
    %c0_14 = arith.constant 0 : index
    %c0_15 = arith.constant 0 : index
    %c0_16 = arith.constant 0 : index
    %43 = vector.load %arg4[%c0_14, %c0_15, %c0_16] : memref<2x32x384xbf16, #tpu.memory_space<vmem>>, vector<1x32x384xbf16>
    %44 = vector.shape_cast %43 : vector<1x32x384xbf16> to vector<32x384xbf16>
    %45 = arith.truncf %27 : vector<16x32xf32> to vector<16x32xbf16>
    %cst_17 = arith.constant dense<0.000000e+00> : vector<16x384xf32>
    %46 = tpu.matmul %45, %44, %cst_17 {dimension_numbers = #tpu.dot_dimension_numbers<[1], [0], [0], [1], [0, 0, 1, 1], [], []>} : vector<16x32xbf16>, vector<32x384xbf16>, vector<16x384xf32> -> vector<16x384xf32>
    %47 = vector.broadcast %35 : vector<1x384xf32> to vector<16x384xf32>
    %48 = arith.addf %46, %47 : vector<16x384xf32>
    %49 = vector.extract_strided_slice %32 {offsets = [0, 0], sizes = [1, 8], strides = [1, 1]} : vector<2x8xf32> to vector<1x8xf32>
    %50 = vector.extract_strided_slice %48 {offsets = [0, 0], sizes = [8, 8], strides = [1, 1]} : vector<16x384xf32> to vector<8x8xf32>
    %51 = vector.extract_strided_slice %48 {offsets = [0, 128], sizes = [8, 8], strides = [1, 1]} : vector<16x384xf32> to vector<8x8xf32>
    %52 = vector.extract_strided_slice %48 {offsets = [0, 256], sizes = [8, 8], strides = [1, 1]} : vector<16x384xf32> to vector<8x8xf32>
    %53 = arith.truncf %50 : vector<8x8xf32> to vector<8x8xbf16>
    %54 = arith.truncf %51 : vector<8x8xf32> to vector<8x8xbf16>
    %cst_18 = arith.constant dense<0.000000e+00> : vector<8x8xf32>
    %55 = tpu.matmul %53, %54, %cst_18 {dimension_numbers = #tpu.dot_dimension_numbers<[1], [1], [0], [0], [0, 0, 1, 0], [], []>} : vector<8x8xbf16>, vector<8x8xbf16>, vector<8x8xf32> -> vector<8x8xf32>
    %56 = vector.broadcast %49 : vector<1x8xf32> to vector<8x8xf32>
    %57 = arith.addf %55, %56 : vector<8x8xf32>
    %cst_19 = arith.constant dense<0xFF800000> : vector<8xf32>
    %58 = vector.multi_reduction <maximumf>, %57, %cst_19 [1] : vector<8x8xf32> to vector<8xf32>
    %59 = vector.shape_cast %58 : vector<8xf32> to vector<8x1xf32>
    %60 = vector.broadcast %59 : vector<8x1xf32> to vector<8x8xf32>
    %61 = arith.subf %57, %60 : vector<8x8xf32>
    %62 = math.exp %61 : vector<8x8xf32>
    %cst_20 = arith.constant dense<0.000000e+00> : vector<8xf32>
    %63 = vector.multi_reduction <add>, %62, %cst_20 [1] : vector<8x8xf32> to vector<8xf32>
    %64 = vector.shape_cast %63 : vector<8xf32> to vector<8x1xf32>
    %65 = tpu.reciprocal %64 {approx = true} : vector<8x1xf32> -> vector<8x1xf32>
    %66 = vector.broadcast %65 : vector<8x1xf32> to vector<8x8xf32>
    %67 = arith.mulf %62, %66 : vector<8x8xf32>
    %68 = arith.truncf %67 : vector<8x8xf32> to vector<8x8xbf16>
    %69 = arith.truncf %52 : vector<8x8xf32> to vector<8x8xbf16>
    %cst_21 = arith.constant dense<0.000000e+00> : vector<8x8xf32>
    %70 = tpu.matmul %68, %69, %cst_21 {dimension_numbers = #tpu.dot_dimension_numbers<[1], [0], [0], [1], [0, 0, 1, 1], [], []>} : vector<8x8xbf16>, vector<8x8xbf16>, vector<8x8xf32> -> vector<8x8xf32>
    %71 = vector.extract_strided_slice %48 {offsets = [0, 8], sizes = [8, 8], strides = [1, 1]} : vector<16x384xf32> to vector<8x8xf32>
    %72 = vector.extract_strided_slice %48 {offsets = [0, 136], sizes = [8, 8], strides = [1, 1]} : vector<16x384xf32> to vector<8x8xf32>
    %73 = vector.extract_strided_slice %48 {offsets = [0, 264], sizes = [8, 8], strides = [1, 1]} : vector<16x384xf32> to vector<8x8xf32>
    %74 = arith.truncf %71 : vector<8x8xf32> to vector<8x8xbf16>
    %75 = arith.truncf %72 : vector<8x8xf32> to vector<8x8xbf16>
    %cst_22 = arith.constant dense<0.000000e+00> : vector<8x8xf32>
    %76 = tpu.matmul %74, %75, %cst_22 {dimension_numbers = #tpu.dot_dimension_numbers<[1], [1], [0], [0], [0, 0, 1, 0], [], []>} : vector<8x8xbf16>, vector<8x8xbf16>, vector<8x8xf32> -> vector<8x8xf32>
    %77 = vector.broadcast %49 : vector<1x8xf32> to vector<8x8xf32>
    %78 = arith.addf %76, %77 : vector<8x8xf32>
    %cst_23 = arith.constant dense<0xFF800000> : vector<8xf32>
    %79 = vector.multi_reduction <maximumf>, %78, %cst_23 [1] : vector<8x8xf32> to vector<8xf32>
    %80 = vector.shape_cast %79 : vector<8xf32> to vector<8x1xf32>
    %81 = vector.broadcast %80 : vector<8x1xf32> to vector<8x8xf32>
    %82 = arith.subf %78, %81 : vector<8x8xf32>
    %83 = math.exp %82 : vector<8x8xf32>
    %cst_24 = arith.constant dense<0.000000e+00> : vector<8xf32>
    %84 = vector.multi_reduction <add>, %83, %cst_24 [1] : vector<8x8xf32> to vector<8xf32>
    %85 = vector.shape_cast %84 : vector<8xf32> to vector<8x1xf32>
    %86 = tpu.reciprocal %85 {approx = true} : vector<8x1xf32> -> vector<8x1xf32>
    %87 = vector.broadcast %86 : vector<8x1xf32> to vector<8x8xf32>
    %88 = arith.mulf %83, %87 : vector<8x8xf32>
    %89 = arith.truncf %88 : vector<8x8xf32> to vector<8x8xbf16>
    %90 = arith.truncf %73 : vector<8x8xf32> to vector<8x8xbf16>
    %cst_25 = arith.constant dense<0.000000e+00> : vector<8x8xf32>
    %91 = tpu.matmul %89, %90, %cst_25 {dimension_numbers = #tpu.dot_dimension_numbers<[1], [0], [0], [1], [0, 0, 1, 1], [], []>} : vector<8x8xbf16>, vector<8x8xbf16>, vector<8x8xf32> -> vector<8x8xf32>
    %92 = vector.extract_strided_slice %48 {offsets = [0, 16], sizes = [8, 8], strides = [1, 1]} : vector<16x384xf32> to vector<8x8xf32>
    %93 = vector.extract_strided_slice %48 {offsets = [0, 144], sizes = [8, 8], strides = [1, 1]} : vector<16x384xf32> to vector<8x8xf32>
    %94 = vector.extract_strided_slice %48 {offsets = [0, 272], sizes = [8, 8], strides = [1, 1]} : vector<16x384xf32> to vector<8x8xf32>
    %95 = arith.truncf %92 : vector<8x8xf32> to vector<8x8xbf16>
    %96 = arith.truncf %93 : vector<8x8xf32> to vector<8x8xbf16>
    %cst_26 = arith.constant dense<0.000000e+00> : vector<8x8xf32>
    %97 = tpu.matmul %95, %96, %cst_26 {dimension_numbers = #tpu.dot_dimension_numbers<[1], [1], [0], [0], [0, 0, 1, 0], [], []>} : vector<8x8xbf16>, vector<8x8xbf16>, vector<8x8xf32> -> vector<8x8xf32>
    %98 = vector.broadcast %49 : vector<1x8xf32> to vector<8x8xf32>
    %99 = arith.addf %97, %98 : vector<8x8xf32>
    %cst_27 = arith.constant dense<0xFF800000> : vector<8xf32>
    %100 = vector.multi_reduction <maximumf>, %99, %cst_27 [1] : vector<8x8xf32> to vector<8xf32>
    %101 = vector.shape_cast %100 : vector<8xf32> to vector<8x1xf32>
    %102 = vector.broadcast %101 : vector<8x1xf32> to vector<8x8xf32>
    %103 = arith.subf %99, %102 : vector<8x8xf32>
    %104 = math.exp %103 : vector<8x8xf32>
    %cst_28 = arith.constant dense<0.000000e+00> : vector<8xf32>
    %105 = vector.multi_reduction <add>, %104, %cst_28 [1] : vector<8x8xf32> to vector<8xf32>
    %106 = vector.shape_cast %105 : vector<8xf32> to vector<8x1xf32>
    %107 = tpu.reciprocal %106 {approx = true} : vector<8x1xf32> -> vector<8x1xf32>
    %108 = vector.broadcast %107 : vector<8x1xf32> to vector<8x8xf32>
    %109 = arith.mulf %104, %108 : vector<8x8xf32>
    %110 = arith.truncf %109 : vector<8x8xf32> to vector<8x8xbf16>
    %111 = arith.truncf %94 : vector<8x8xf32> to vector<8x8xbf16>
    %cst_29 = arith.constant dense<0.000000e+00> : vector<8x8xf32>
    %112 = tpu.matmul %110, %111, %cst_29 {dimension_numbers = #tpu.dot_dimension_numbers<[1], [0], [0], [1], [0, 0, 1, 1], [], []>} : vector<8x8xbf16>, vector<8x8xbf16>, vector<8x8xf32> -> vector<8x8xf32>
    %113 = vector.extract_strided_slice %48 {offsets = [0, 24], sizes = [8, 8], strides = [1, 1]} : vector<16x384xf32> to vector<8x8xf32>
    %114 = vector.extract_strided_slice %48 {offsets = [0, 152], sizes = [8, 8], strides = [1, 1]} : vector<16x384xf32> to vector<8x8xf32>
    %115 = vector.extract_strided_slice %48 {offsets = [0, 280], sizes = [8, 8], strides = [1, 1]} : vector<16x384xf32> to vector<8x8xf32>
    %116 = arith.truncf %113 : vector<8x8xf32> to vector<8x8xbf16>
    %117 = arith.truncf %114 : vector<8x8xf32> to vector<8x8xbf16>
    %cst_30 = arith.constant dense<0.000000e+00> : vector<8x8xf32>
    %118 = tpu.matmul %116, %117, %cst_30 {dimension_numbers = #tpu.dot_dimension_numbers<[1], [1], [0], [0], [0, 0, 1, 0], [], []>} : vector<8x8xbf16>, vector<8x8xbf16>, vector<8x8xf32> -> vector<8x8xf32>
    %119 = vector.broadcast %49 : vector<1x8xf32> to vector<8x8xf32>
    %120 = arith.addf %118, %119 : vector<8x8xf32>
    %cst_31 = arith.constant dense<0xFF800000> : vector<8xf32>
    %121 = vector.multi_reduction <maximumf>, %120, %cst_31 [1] : vector<8x8xf32> to vector<8xf32>
    %122 = vector.shape_cast %121 : vector<8xf32> to vector<8x1xf32>
    %123 = vector.broadcast %122 : vector<8x1xf32> to vector<8x8xf32>
    %124 = arith.subf %120, %123 : vector<8x8xf32>
    %125 = math.exp %124 : vector<8x8xf32>
    %cst_32 = arith.constant dense<0.000000e+00> : vector<8xf32>
    %126 = vector.multi_reduction <add>, %125, %cst_32 [1] : vector<8x8xf32> to vector<8xf32>
    %127 = vector.shape_cast %126 : vector<8xf32> to vector<8x1xf32>
    %128 = tpu.reciprocal %127 {approx = true} : vector<8x1xf32> -> vector<8x1xf32>
    %129 = vector.broadcast %128 : vector<8x1xf32> to vector<8x8xf32>
    %130 = arith.mulf %125, %129 : vector<8x8xf32>
    %131 = arith.truncf %130 : vector<8x8xf32> to vector<8x8xbf16>
    %132 = arith.truncf %115 : vector<8x8xf32> to vector<8x8xbf16>
    %cst_33 = arith.constant dense<0.000000e+00> : vector<8x8xf32>
    %133 = tpu.matmul %131, %132, %cst_33 {dimension_numbers = #tpu.dot_dimension_numbers<[1], [0], [0], [1], [0, 0, 1, 1], [], []>} : vector<8x8xbf16>, vector<8x8xbf16>, vector<8x8xf32> -> vector<8x8xf32>
    %134 = tpu.concatenate %70, %91, %112, %133 in 1 : vector<8x8xf32>, vector<8x8xf32>, vector<8x8xf32>, vector<8x8xf32> -> vector<8x32xf32>
    %135 = vector.extract_strided_slice %32 {offsets = [1, 0], sizes = [1, 8], strides = [1, 1]} : vector<2x8xf32> to vector<1x8xf32>
    %136 = vector.extract_strided_slice %48 {offsets = [8, 0], sizes = [8, 8], strides = [1, 1]} : vector<16x384xf32> to vector<8x8xf32>
    %137 = vector.extract_strided_slice %48 {offsets = [8, 128], sizes = [8, 8], strides = [1, 1]} : vector<16x384xf32> to vector<8x8xf32>
    %138 = vector.extract_strided_slice %48 {offsets = [8, 256], sizes = [8, 8], strides = [1, 1]} : vector<16x384xf32> to vector<8x8xf32>
    %139 = arith.truncf %136 : vector<8x8xf32> to vector<8x8xbf16>
    %140 = arith.truncf %137 : vector<8x8xf32> to vector<8x8xbf16>
    %cst_34 = arith.constant dense<0.000000e+00> : vector<8x8xf32>
    %141 = tpu.matmul %139, %140, %cst_34 {dimension_numbers = #tpu.dot_dimension_numbers<[1], [1], [0], [0], [0, 0, 1, 0], [], []>} : vector<8x8xbf16>, vector<8x8xbf16>, vector<8x8xf32> -> vector<8x8xf32>
    %142 = vector.broadcast %135 : vector<1x8xf32> to vector<8x8xf32>
    %143 = arith.addf %141, %142 : vector<8x8xf32>
    %cst_35 = arith.constant dense<0xFF800000> : vector<8xf32>
    %144 = vector.multi_reduction <maximumf>, %143, %cst_35 [1] : vector<8x8xf32> to vector<8xf32>
    %145 = vector.shape_cast %144 : vector<8xf32> to vector<8x1xf32>
    %146 = vector.broadcast %145 : vector<8x1xf32> to vector<8x8xf32>
    %147 = arith.subf %143, %146 : vector<8x8xf32>
    %148 = math.exp %147 : vector<8x8xf32>
    %cst_36 = arith.constant dense<0.000000e+00> : vector<8xf32>
    %149 = vector.multi_reduction <add>, %148, %cst_36 [1] : vector<8x8xf32> to vector<8xf32>
    %150 = vector.shape_cast %149 : vector<8xf32> to vector<8x1xf32>
    %151 = tpu.reciprocal %150 {approx = true} : vector<8x1xf32> -> vector<8x1xf32>
    %152 = vector.broadcast %151 : vector<8x1xf32> to vector<8x8xf32>
    %153 = arith.mulf %148, %152 : vector<8x8xf32>
    %154 = arith.truncf %153 : vector<8x8xf32> to vector<8x8xbf16>
    %155 = arith.truncf %138 : vector<8x8xf32> to vector<8x8xbf16>
    %cst_37 = arith.constant dense<0.000000e+00> : vector<8x8xf32>
    %156 = tpu.matmul %154, %155, %cst_37 {dimension_numbers = #tpu.dot_dimension_numbers<[1], [0], [0], [1], [0, 0, 1, 1], [], []>} : vector<8x8xbf16>, vector<8x8xbf16>, vector<8x8xf32> -> vector<8x8xf32>
    %157 = vector.extract_strided_slice %48 {offsets = [8, 8], sizes = [8, 8], strides = [1, 1]} : vector<16x384xf32> to vector<8x8xf32>
    %158 = vector.extract_strided_slice %48 {offsets = [8, 136], sizes = [8, 8], strides = [1, 1]} : vector<16x384xf32> to vector<8x8xf32>
    %159 = vector.extract_strided_slice %48 {offsets = [8, 264], sizes = [8, 8], strides = [1, 1]} : vector<16x384xf32> to vector<8x8xf32>
    %160 = arith.truncf %157 : vector<8x8xf32> to vector<8x8xbf16>
    %161 = arith.truncf %158 : vector<8x8xf32> to vector<8x8xbf16>
    %cst_38 = arith.constant dense<0.000000e+00> : vector<8x8xf32>
    %162 = tpu.matmul %160, %161, %cst_38 {dimension_numbers = #tpu.dot_dimension_numbers<[1], [1], [0], [0], [0, 0, 1, 0], [], []>} : vector<8x8xbf16>, vector<8x8xbf16>, vector<8x8xf32> -> vector<8x8xf32>
    %163 = vector.broadcast %135 : vector<1x8xf32> to vector<8x8xf32>
    %164 = arith.addf %162, %163 : vector<8x8xf32>
    %cst_39 = arith.constant dense<0xFF800000> : vector<8xf32>
    %165 = vector.multi_reduction <maximumf>, %164, %cst_39 [1] : vector<8x8xf32> to vector<8xf32>
    %166 = vector.shape_cast %165 : vector<8xf32> to vector<8x1xf32>
    %167 = vector.broadcast %166 : vector<8x1xf32> to vector<8x8xf32>
    %168 = arith.subf %164, %167 : vector<8x8xf32>
    %169 = math.exp %168 : vector<8x8xf32>
    %cst_40 = arith.constant dense<0.000000e+00> : vector<8xf32>
    %170 = vector.multi_reduction <add>, %169, %cst_40 [1] : vector<8x8xf32> to vector<8xf32>
    %171 = vector.shape_cast %170 : vector<8xf32> to vector<8x1xf32>
    %172 = tpu.reciprocal %171 {approx = true} : vector<8x1xf32> -> vector<8x1xf32>
    %173 = vector.broadcast %172 : vector<8x1xf32> to vector<8x8xf32>
    %174 = arith.mulf %169, %173 : vector<8x8xf32>
    %175 = arith.truncf %174 : vector<8x8xf32> to vector<8x8xbf16>
    %176 = arith.truncf %159 : vector<8x8xf32> to vector<8x8xbf16>
    %cst_41 = arith.constant dense<0.000000e+00> : vector<8x8xf32>
    %177 = tpu.matmul %175, %176, %cst_41 {dimension_numbers = #tpu.dot_dimension_numbers<[1], [0], [0], [1], [0, 0, 1, 1], [], []>} : vector<8x8xbf16>, vector<8x8xbf16>, vector<8x8xf32> -> vector<8x8xf32>
    %178 = vector.extract_strided_slice %48 {offsets = [8, 16], sizes = [8, 8], strides = [1, 1]} : vector<16x384xf32> to vector<8x8xf32>
    %179 = vector.extract_strided_slice %48 {offsets = [8, 144], sizes = [8, 8], strides = [1, 1]} : vector<16x384xf32> to vector<8x8xf32>
    %180 = vector.extract_strided_slice %48 {offsets = [8, 272], sizes = [8, 8], strides = [1, 1]} : vector<16x384xf32> to vector<8x8xf32>
    %181 = arith.truncf %178 : vector<8x8xf32> to vector<8x8xbf16>
    %182 = arith.truncf %179 : vector<8x8xf32> to vector<8x8xbf16>
    %cst_42 = arith.constant dense<0.000000e+00> : vector<8x8xf32>
    %183 = tpu.matmul %181, %182, %cst_42 {dimension_numbers = #tpu.dot_dimension_numbers<[1], [1], [0], [0], [0, 0, 1, 0], [], []>} : vector<8x8xbf16>, vector<8x8xbf16>, vector<8x8xf32> -> vector<8x8xf32>
    %184 = vector.broadcast %135 : vector<1x8xf32> to vector<8x8xf32>
    %185 = arith.addf %183, %184 : vector<8x8xf32>
    %cst_43 = arith.constant dense<0xFF800000> : vector<8xf32>
    %186 = vector.multi_reduction <maximumf>, %185, %cst_43 [1] : vector<8x8xf32> to vector<8xf32>
    %187 = vector.shape_cast %186 : vector<8xf32> to vector<8x1xf32>
    %188 = vector.broadcast %187 : vector<8x1xf32> to vector<8x8xf32>
    %189 = arith.subf %185, %188 : vector<8x8xf32>
    %190 = math.exp %189 : vector<8x8xf32>
    %cst_44 = arith.constant dense<0.000000e+00> : vector<8xf32>
    %191 = vector.multi_reduction <add>, %190, %cst_44 [1] : vector<8x8xf32> to vector<8xf32>
    %192 = vector.shape_cast %191 : vector<8xf32> to vector<8x1xf32>
    %193 = tpu.reciprocal %192 {approx = true} : vector<8x1xf32> -> vector<8x1xf32>
    %194 = vector.broadcast %193 : vector<8x1xf32> to vector<8x8xf32>
    %195 = arith.mulf %190, %194 : vector<8x8xf32>
    %196 = arith.truncf %195 : vector<8x8xf32> to vector<8x8xbf16>
    %197 = arith.truncf %180 : vector<8x8xf32> to vector<8x8xbf16>
    %cst_45 = arith.constant dense<0.000000e+00> : vector<8x8xf32>
    %198 = tpu.matmul %196, %197, %cst_45 {dimension_numbers = #tpu.dot_dimension_numbers<[1], [0], [0], [1], [0, 0, 1, 1], [], []>} : vector<8x8xbf16>, vector<8x8xbf16>, vector<8x8xf32> -> vector<8x8xf32>
    %199 = vector.extract_strided_slice %48 {offsets = [8, 24], sizes = [8, 8], strides = [1, 1]} : vector<16x384xf32> to vector<8x8xf32>
    %200 = vector.extract_strided_slice %48 {offsets = [8, 152], sizes = [8, 8], strides = [1, 1]} : vector<16x384xf32> to vector<8x8xf32>
    %201 = vector.extract_strided_slice %48 {offsets = [8, 280], sizes = [8, 8], strides = [1, 1]} : vector<16x384xf32> to vector<8x8xf32>
    %202 = arith.truncf %199 : vector<8x8xf32> to vector<8x8xbf16>
    %203 = arith.truncf %200 : vector<8x8xf32> to vector<8x8xbf16>
    %cst_46 = arith.constant dense<0.000000e+00> : vector<8x8xf32>
    %204 = tpu.matmul %202, %203, %cst_46 {dimension_numbers = #tpu.dot_dimension_numbers<[1], [1], [0], [0], [0, 0, 1, 0], [], []>} : vector<8x8xbf16>, vector<8x8xbf16>, vector<8x8xf32> -> vector<8x8xf32>
    %205 = vector.broadcast %135 : vector<1x8xf32> to vector<8x8xf32>
    %206 = arith.addf %204, %205 : vector<8x8xf32>
    %cst_47 = arith.constant dense<0xFF800000> : vector<8xf32>
    %207 = vector.multi_reduction <maximumf>, %206, %cst_47 [1] : vector<8x8xf32> to vector<8xf32>
    %208 = vector.shape_cast %207 : vector<8xf32> to vector<8x1xf32>
    %209 = vector.broadcast %208 : vector<8x1xf32> to vector<8x8xf32>
    %210 = arith.subf %206, %209 : vector<8x8xf32>
    %211 = math.exp %210 : vector<8x8xf32>
    %cst_48 = arith.constant dense<0.000000e+00> : vector<8xf32>
    %212 = vector.multi_reduction <add>, %211, %cst_48 [1] : vector<8x8xf32> to vector<8xf32>
    %213 = vector.shape_cast %212 : vector<8xf32> to vector<8x1xf32>
    %214 = tpu.reciprocal %213 {approx = true} : vector<8x1xf32> -> vector<8x1xf32>
    %215 = vector.broadcast %214 : vector<8x1xf32> to vector<8x8xf32>
    %216 = arith.mulf %211, %215 : vector<8x8xf32>
    %217 = arith.truncf %216 : vector<8x8xf32> to vector<8x8xbf16>
    %218 = arith.truncf %201 : vector<8x8xf32> to vector<8x8xbf16>
    %cst_49 = arith.constant dense<0.000000e+00> : vector<8x8xf32>
    %219 = tpu.matmul %217, %218, %cst_49 {dimension_numbers = #tpu.dot_dimension_numbers<[1], [0], [0], [1], [0, 0, 1, 1], [], []>} : vector<8x8xbf16>, vector<8x8xbf16>, vector<8x8xf32> -> vector<8x8xf32>
    %220 = tpu.concatenate %156, %177, %198, %219 in 1 : vector<8x8xf32>, vector<8x8xf32>, vector<8x8xf32>, vector<8x8xf32> -> vector<8x32xf32>
    %221 = tpu.concatenate %134, %220 in 0 : vector<8x32xf32>, vector<8x32xf32> -> vector<16x32xf32>
    %c0_50 = arith.constant 0 : index
    %c0_51 = arith.constant 0 : index
    %c0_52 = arith.constant 0 : index
    %222 = vector.load %arg5[%c0_50, %c0_51, %c0_52] : memref<2x32x32xbf16, #tpu.memory_space<vmem>>, vector<1x32x32xbf16>
    %223 = vector.shape_cast %222 : vector<1x32x32xbf16> to vector<32x32xbf16>
    %224 = arith.truncf %221 : vector<16x32xf32> to vector<16x32xbf16>
    %cst_53 = arith.constant dense<0.000000e+00> : vector<16x32xf32>
    %225 = tpu.matmul %224, %223, %cst_53 {dimension_numbers = #tpu.dot_dimension_numbers<[1], [0], [0], [1], [0, 0, 1, 1], [], []>} : vector<16x32xbf16>, vector<32x32xbf16>, vector<16x32xf32> -> vector<16x32xf32>
    %226 = vector.broadcast %36 : vector<1x32xf32> to vector<16x32xf32>
    %227 = arith.addf %225, %226 : vector<16x32xf32>
    %228 = arith.addf %227, %27 : vector<16x32xf32>
    %cst_54 = arith.constant dense<0.000000e+00> : vector<16xf32>
    %229 = vector.multi_reduction <add>, %228, %cst_54 [1] : vector<16x32xf32> to vector<16xf32>
    %230 = vector.shape_cast %229 : vector<16xf32> to vector<16x1xf32>
    %cst_55 = arith.constant 3.200000e+01 : f32
    %231 = vector.broadcast %cst_55 : f32 to vector<16x1xf32>
    %232 = arith.divf %230, %231 : vector<16x1xf32>
    %233 = vector.broadcast %232 : vector<16x1xf32> to vector<16x32xf32>
    %234 = arith.subf %228, %233 : vector<16x32xf32>
    %235 = arith.mulf %234, %234 : vector<16x32xf32>
    %cst_56 = arith.constant dense<0.000000e+00> : vector<16xf32>
    %236 = vector.multi_reduction <add>, %235, %cst_56 [1] : vector<16x32xf32> to vector<16xf32>
    %237 = vector.shape_cast %236 : vector<16xf32> to vector<16x1xf32>
    %cst_57 = arith.constant 3.200000e+01 : f32
    %238 = vector.broadcast %cst_57 : f32 to vector<16x1xf32>
    %239 = arith.divf %237, %238 : vector<16x1xf32>
    %240 = vector.broadcast %232 : vector<16x1xf32> to vector<16x32xf32>
    %241 = arith.subf %228, %240 : vector<16x32xf32>
    %cst_58 = arith.constant 9.99999974E-6 : f32
    %242 = vector.broadcast %cst_58 : f32 to vector<16x1xf32>
    %243 = arith.addf %239, %242 : vector<16x1xf32>
    %244 = math.rsqrt %243 : vector<16x1xf32>
    %245 = vector.broadcast %244 : vector<16x1xf32> to vector<16x32xf32>
    %246 = arith.mulf %241, %245 : vector<16x32xf32>
    %247 = vector.broadcast %37 : vector<1x32xf32> to vector<16x32xf32>
    %248 = arith.mulf %246, %247 : vector<16x32xf32>
    %249 = vector.broadcast %38 : vector<1x32xf32> to vector<16x32xf32>
    %250 = arith.addf %248, %249 : vector<16x32xf32>
    %c0_59 = arith.constant 0 : index
    %c0_60 = arith.constant 0 : index
    %c0_61 = arith.constant 0 : index
    %251 = vector.load %arg6[%c0_59, %c0_60, %c0_61] : memref<2x32x64xbf16, #tpu.memory_space<vmem>>, vector<1x32x64xbf16>
    %252 = vector.shape_cast %251 : vector<1x32x64xbf16> to vector<32x64xbf16>
    %253 = arith.truncf %250 : vector<16x32xf32> to vector<16x32xbf16>
    %cst_62 = arith.constant dense<0.000000e+00> : vector<16x64xf32>
    %254 = tpu.matmul %253, %252, %cst_62 {dimension_numbers = #tpu.dot_dimension_numbers<[1], [0], [0], [1], [0, 0, 1, 1], [], []>} : vector<16x32xbf16>, vector<32x64xbf16>, vector<16x64xf32> -> vector<16x64xf32>
    %255 = vector.broadcast %39 : vector<1x64xf32> to vector<16x64xf32>
    %256 = arith.addf %254, %255 : vector<16x64xf32>
    %257 = arith.mulf %256, %256 : vector<16x64xf32>
    %258 = arith.mulf %256, %257 : vector<16x64xf32>
    %cst_63 = arith.constant 4.471500e-02 : f32
    %259 = vector.broadcast %cst_63 : f32 to vector<16x64xf32>
    %260 = arith.mulf %259, %258 : vector<16x64xf32>
    %261 = arith.addf %256, %260 : vector<16x64xf32>
    %cst_64 = arith.constant 0.797884583 : f32
    %262 = vector.broadcast %cst_64 : f32 to vector<16x64xf32>
    %263 = arith.mulf %262, %261 : vector<16x64xf32>
    %264 = math.tanh %263 : vector<16x64xf32>
    %cst_65 = arith.constant 1.000000e+00 : f32
    %265 = vector.broadcast %cst_65 : f32 to vector<16x64xf32>
    %266 = arith.addf %265, %264 : vector<16x64xf32>
    %cst_66 = arith.constant 5.000000e-01 : f32
    %267 = vector.broadcast %cst_66 : f32 to vector<16x64xf32>
    %268 = arith.mulf %267, %266 : vector<16x64xf32>
    %269 = arith.mulf %256, %268 : vector<16x64xf32>
    %c0_67 = arith.constant 0 : index
    %c0_68 = arith.constant 0 : index
    %c0_69 = arith.constant 0 : index
    %270 = vector.load %arg7[%c0_67, %c0_68, %c0_69] : memref<2x64x32xbf16, #tpu.memory_space<vmem>>, vector<1x64x32xbf16>
    %271 = vector.shape_cast %270 : vector<1x64x32xbf16> to vector<64x32xbf16>
    %272 = arith.truncf %269 : vector<16x64xf32> to vector<16x64xbf16>
    %cst_70 = arith.constant dense<0.000000e+00> : vector<16x32xf32>
    %273 = tpu.matmul %272, %271, %cst_70 {dimension_numbers = #tpu.dot_dimension_numbers<[1], [0], [0], [1], [0, 0, 1, 1], [], []>} : vector<16x64xbf16>, vector<64x32xbf16>, vector<16x32xf32> -> vector<16x32xf32>
    %274 = vector.broadcast %40 : vector<1x32xf32> to vector<16x32xf32>
    %275 = arith.addf %273, %274 : vector<16x32xf32>
    %276 = arith.addf %275, %250 : vector<16x32xf32>
    %cst_71 = arith.constant dense<0.000000e+00> : vector<16xf32>
    %277 = vector.multi_reduction <add>, %276, %cst_71 [1] : vector<16x32xf32> to vector<16xf32>
    %278 = vector.shape_cast %277 : vector<16xf32> to vector<16x1xf32>
    %cst_72 = arith.constant 3.200000e+01 : f32
    %279 = vector.broadcast %cst_72 : f32 to vector<16x1xf32>
    %280 = arith.divf %278, %279 : vector<16x1xf32>
    %281 = vector.broadcast %280 : vector<16x1xf32> to vector<16x32xf32>
    %282 = arith.subf %276, %281 : vector<16x32xf32>
    %283 = arith.mulf %282, %282 : vector<16x32xf32>
    %cst_73 = arith.constant dense<0.000000e+00> : vector<16xf32>
    %284 = vector.multi_reduction <add>, %283, %cst_73 [1] : vector<16x32xf32> to vector<16xf32>
    %285 = vector.shape_cast %284 : vector<16xf32> to vector<16x1xf32>
    %cst_74 = arith.constant 3.200000e+01 : f32
    %286 = vector.broadcast %cst_74 : f32 to vector<16x1xf32>
    %287 = arith.divf %285, %286 : vector<16x1xf32>
    %288 = vector.broadcast %280 : vector<16x1xf32> to vector<16x32xf32>
    %289 = arith.subf %276, %288 : vector<16x32xf32>
    %cst_75 = arith.constant 9.99999974E-6 : f32
    %290 = vector.broadcast %cst_75 : f32 to vector<16x1xf32>
    %291 = arith.addf %287, %290 : vector<16x1xf32>
    %292 = math.rsqrt %291 : vector<16x1xf32>
    %293 = vector.broadcast %292 : vector<16x1xf32> to vector<16x32xf32>
    %294 = arith.mulf %289, %293 : vector<16x32xf32>
    %295 = vector.broadcast %41 : vector<1x32xf32> to vector<16x32xf32>
    %296 = arith.mulf %294, %295 : vector<16x32xf32>
    %297 = vector.broadcast %42 : vector<1x32xf32> to vector<16x32xf32>
    %298 = arith.addf %296, %297 : vector<16x32xf32>
    %c1 = arith.constant 1 : index
    %c0_76 = arith.constant 0 : index
    %c0_77 = arith.constant 0 : index
    %299 = vector.load %arg3[%c1, %c0_76, %c0_77] : memref<2x8x384xf32, #tpu.memory_space<vmem>>, vector<1x8x384xf32>
    %300 = vector.shape_cast %299 : vector<1x8x384xf32> to vector<8x384xf32>
    %301 = vector.extract_strided_slice %300 {offsets = [0, 0], sizes = [1, 384], strides = [1, 1]} : vector<8x384xf32> to vector<1x384xf32>
    %302 = vector.extract_strided_slice %300 {offsets = [1, 0], sizes = [1, 32], strides = [1, 1]} : vector<8x384xf32> to vector<1x32xf32>
    %303 = vector.extract_strided_slice %300 {offsets = [2, 0], sizes = [1, 32], strides = [1, 1]} : vector<8x384xf32> to vector<1x32xf32>
    %304 = vector.extract_strided_slice %300 {offsets = [3, 0], sizes = [1, 32], strides = [1, 1]} : vector<8x384xf32> to vector<1x32xf32>
    %305 = vector.extract_strided_slice %300 {offsets = [4, 0], sizes = [1, 64], strides = [1, 1]} : vector<8x384xf32> to vector<1x64xf32>
    %306 = vector.extract_strided_slice %300 {offsets = [5, 0], sizes = [1, 32], strides = [1, 1]} : vector<8x384xf32> to vector<1x32xf32>
    %307 = vector.extract_strided_slice %300 {offsets = [6, 0], sizes = [1, 32], strides = [1, 1]} : vector<8x384xf32> to vector<1x32xf32>
    %308 = vector.extract_strided_slice %300 {offsets = [7, 0], sizes = [1, 32], strides = [1, 1]} : vector<8x384xf32> to vector<1x32xf32>
    %c1_78 = arith.constant 1 : index
    %c0_79 = arith.constant 0 : index
    %c0_80 = arith.constant 0 : index
    %309 = vector.load %arg4[%c1_78, %c0_79, %c0_80] : memref<2x32x384xbf16, #tpu.memory_space<vmem>>, vector<1x32x384xbf16>
    %310 = vector.shape_cast %309 : vector<1x32x384xbf16> to vector<32x384xbf16>
    %311 = arith.truncf %298 : vector<16x32xf32> to vector<16x32xbf16>
    %cst_81 = arith.constant dense<0.000000e+00> : vector<16x384xf32>
    %312 = tpu.matmul %311, %310, %cst_81 {dimension_numbers = #tpu.dot_dimension_numbers<[1], [0], [0], [1], [0, 0, 1, 1], [], []>} : vector<16x32xbf16>, vector<32x384xbf16>, vector<16x384xf32> -> vector<16x384xf32>
    %313 = vector.broadcast %301 : vector<1x384xf32> to vector<16x384xf32>
    %314 = arith.addf %312, %313 : vector<16x384xf32>
    %315 = vector.extract_strided_slice %32 {offsets = [0, 0], sizes = [1, 8], strides = [1, 1]} : vector<2x8xf32> to vector<1x8xf32>
    %316 = vector.extract_strided_slice %314 {offsets = [0, 0], sizes = [8, 8], strides = [1, 1]} : vector<16x384xf32> to vector<8x8xf32>
    %317 = vector.extract_strided_slice %314 {offsets = [0, 128], sizes = [8, 8], strides = [1, 1]} : vector<16x384xf32> to vector<8x8xf32>
    %318 = vector.extract_strided_slice %314 {offsets = [0, 256], sizes = [8, 8], strides = [1, 1]} : vector<16x384xf32> to vector<8x8xf32>
    %319 = arith.truncf %316 : vector<8x8xf32> to vector<8x8xbf16>
    %320 = arith.truncf %317 : vector<8x8xf32> to vector<8x8xbf16>
    %cst_82 = arith.constant dense<0.000000e+00> : vector<8x8xf32>
    %321 = tpu.matmul %319, %320, %cst_82 {dimension_numbers = #tpu.dot_dimension_numbers<[1], [1], [0], [0], [0, 0, 1, 0], [], []>} : vector<8x8xbf16>, vector<8x8xbf16>, vector<8x8xf32> -> vector<8x8xf32>
    %322 = vector.broadcast %315 : vector<1x8xf32> to vector<8x8xf32>
    %323 = arith.addf %321, %322 : vector<8x8xf32>
    %cst_83 = arith.constant dense<0xFF800000> : vector<8xf32>
    %324 = vector.multi_reduction <maximumf>, %323, %cst_83 [1] : vector<8x8xf32> to vector<8xf32>
    %325 = vector.shape_cast %324 : vector<8xf32> to vector<8x1xf32>
    %326 = vector.broadcast %325 : vector<8x1xf32> to vector<8x8xf32>
    %327 = arith.subf %323, %326 : vector<8x8xf32>
    %328 = math.exp %327 : vector<8x8xf32>
    %cst_84 = arith.constant dense<0.000000e+00> : vector<8xf32>
    %329 = vector.multi_reduction <add>, %328, %cst_84 [1] : vector<8x8xf32> to vector<8xf32>
    %330 = vector.shape_cast %329 : vector<8xf32> to vector<8x1xf32>
    %331 = tpu.reciprocal %330 {approx = true} : vector<8x1xf32> -> vector<8x1xf32>
    %332 = vector.broadcast %331 : vector<8x1xf32> to vector<8x8xf32>
    %333 = arith.mulf %328, %332 : vector<8x8xf32>
    %334 = arith.truncf %333 : vector<8x8xf32> to vector<8x8xbf16>
    %335 = arith.truncf %318 : vector<8x8xf32> to vector<8x8xbf16>
    %cst_85 = arith.constant dense<0.000000e+00> : vector<8x8xf32>
    %336 = tpu.matmul %334, %335, %cst_85 {dimension_numbers = #tpu.dot_dimension_numbers<[1], [0], [0], [1], [0, 0, 1, 1], [], []>} : vector<8x8xbf16>, vector<8x8xbf16>, vector<8x8xf32> -> vector<8x8xf32>
    %337 = vector.extract_strided_slice %314 {offsets = [0, 8], sizes = [8, 8], strides = [1, 1]} : vector<16x384xf32> to vector<8x8xf32>
    %338 = vector.extract_strided_slice %314 {offsets = [0, 136], sizes = [8, 8], strides = [1, 1]} : vector<16x384xf32> to vector<8x8xf32>
    %339 = vector.extract_strided_slice %314 {offsets = [0, 264], sizes = [8, 8], strides = [1, 1]} : vector<16x384xf32> to vector<8x8xf32>
    %340 = arith.truncf %337 : vector<8x8xf32> to vector<8x8xbf16>
    %341 = arith.truncf %338 : vector<8x8xf32> to vector<8x8xbf16>
    %cst_86 = arith.constant dense<0.000000e+00> : vector<8x8xf32>
    %342 = tpu.matmul %340, %341, %cst_86 {dimension_numbers = #tpu.dot_dimension_numbers<[1], [1], [0], [0], [0, 0, 1, 0], [], []>} : vector<8x8xbf16>, vector<8x8xbf16>, vector<8x8xf32> -> vector<8x8xf32>
    %343 = vector.broadcast %315 : vector<1x8xf32> to vector<8x8xf32>
    %344 = arith.addf %342, %343 : vector<8x8xf32>
    %cst_87 = arith.constant dense<0xFF800000> : vector<8xf32>
    %345 = vector.multi_reduction <maximumf>, %344, %cst_87 [1] : vector<8x8xf32> to vector<8xf32>
    %346 = vector.shape_cast %345 : vector<8xf32> to vector<8x1xf32>
    %347 = vector.broadcast %346 : vector<8x1xf32> to vector<8x8xf32>
    %348 = arith.subf %344, %347 : vector<8x8xf32>
    %349 = math.exp %348 : vector<8x8xf32>
    %cst_88 = arith.constant dense<0.000000e+00> : vector<8xf32>
    %350 = vector.multi_reduction <add>, %349, %cst_88 [1] : vector<8x8xf32> to vector<8xf32>
    %351 = vector.shape_cast %350 : vector<8xf32> to vector<8x1xf32>
    %352 = tpu.reciprocal %351 {approx = true} : vector<8x1xf32> -> vector<8x1xf32>
    %353 = vector.broadcast %352 : vector<8x1xf32> to vector<8x8xf32>
    %354 = arith.mulf %349, %353 : vector<8x8xf32>
    %355 = arith.truncf %354 : vector<8x8xf32> to vector<8x8xbf16>
    %356 = arith.truncf %339 : vector<8x8xf32> to vector<8x8xbf16>
    %cst_89 = arith.constant dense<0.000000e+00> : vector<8x8xf32>
    %357 = tpu.matmul %355, %356, %cst_89 {dimension_numbers = #tpu.dot_dimension_numbers<[1], [0], [0], [1], [0, 0, 1, 1], [], []>} : vector<8x8xbf16>, vector<8x8xbf16>, vector<8x8xf32> -> vector<8x8xf32>
    %358 = vector.extract_strided_slice %314 {offsets = [0, 16], sizes = [8, 8], strides = [1, 1]} : vector<16x384xf32> to vector<8x8xf32>
    %359 = vector.extract_strided_slice %314 {offsets = [0, 144], sizes = [8, 8], strides = [1, 1]} : vector<16x384xf32> to vector<8x8xf32>
    %360 = vector.extract_strided_slice %314 {offsets = [0, 272], sizes = [8, 8], strides = [1, 1]} : vector<16x384xf32> to vector<8x8xf32>
    %361 = arith.truncf %358 : vector<8x8xf32> to vector<8x8xbf16>
    %362 = arith.truncf %359 : vector<8x8xf32> to vector<8x8xbf16>
    %cst_90 = arith.constant dense<0.000000e+00> : vector<8x8xf32>
    %363 = tpu.matmul %361, %362, %cst_90 {dimension_numbers = #tpu.dot_dimension_numbers<[1], [1], [0], [0], [0, 0, 1, 0], [], []>} : vector<8x8xbf16>, vector<8x8xbf16>, vector<8x8xf32> -> vector<8x8xf32>
    %364 = vector.broadcast %315 : vector<1x8xf32> to vector<8x8xf32>
    %365 = arith.addf %363, %364 : vector<8x8xf32>
    %cst_91 = arith.constant dense<0xFF800000> : vector<8xf32>
    %366 = vector.multi_reduction <maximumf>, %365, %cst_91 [1] : vector<8x8xf32> to vector<8xf32>
    %367 = vector.shape_cast %366 : vector<8xf32> to vector<8x1xf32>
    %368 = vector.broadcast %367 : vector<8x1xf32> to vector<8x8xf32>
    %369 = arith.subf %365, %368 : vector<8x8xf32>
    %370 = math.exp %369 : vector<8x8xf32>
    %cst_92 = arith.constant dense<0.000000e+00> : vector<8xf32>
    %371 = vector.multi_reduction <add>, %370, %cst_92 [1] : vector<8x8xf32> to vector<8xf32>
    %372 = vector.shape_cast %371 : vector<8xf32> to vector<8x1xf32>
    %373 = tpu.reciprocal %372 {approx = true} : vector<8x1xf32> -> vector<8x1xf32>
    %374 = vector.broadcast %373 : vector<8x1xf32> to vector<8x8xf32>
    %375 = arith.mulf %370, %374 : vector<8x8xf32>
    %376 = arith.truncf %375 : vector<8x8xf32> to vector<8x8xbf16>
    %377 = arith.truncf %360 : vector<8x8xf32> to vector<8x8xbf16>
    %cst_93 = arith.constant dense<0.000000e+00> : vector<8x8xf32>
    %378 = tpu.matmul %376, %377, %cst_93 {dimension_numbers = #tpu.dot_dimension_numbers<[1], [0], [0], [1], [0, 0, 1, 1], [], []>} : vector<8x8xbf16>, vector<8x8xbf16>, vector<8x8xf32> -> vector<8x8xf32>
    %379 = vector.extract_strided_slice %314 {offsets = [0, 24], sizes = [8, 8], strides = [1, 1]} : vector<16x384xf32> to vector<8x8xf32>
    %380 = vector.extract_strided_slice %314 {offsets = [0, 152], sizes = [8, 8], strides = [1, 1]} : vector<16x384xf32> to vector<8x8xf32>
    %381 = vector.extract_strided_slice %314 {offsets = [0, 280], sizes = [8, 8], strides = [1, 1]} : vector<16x384xf32> to vector<8x8xf32>
    %382 = arith.truncf %379 : vector<8x8xf32> to vector<8x8xbf16>
    %383 = arith.truncf %380 : vector<8x8xf32> to vector<8x8xbf16>
    %cst_94 = arith.constant dense<0.000000e+00> : vector<8x8xf32>
    %384 = tpu.matmul %382, %383, %cst_94 {dimension_numbers = #tpu.dot_dimension_numbers<[1], [1], [0], [0], [0, 0, 1, 0], [], []>} : vector<8x8xbf16>, vector<8x8xbf16>, vector<8x8xf32> -> vector<8x8xf32>
    %385 = vector.broadcast %315 : vector<1x8xf32> to vector<8x8xf32>
    %386 = arith.addf %384, %385 : vector<8x8xf32>
    %cst_95 = arith.constant dense<0xFF800000> : vector<8xf32>
    %387 = vector.multi_reduction <maximumf>, %386, %cst_95 [1] : vector<8x8xf32> to vector<8xf32>
    %388 = vector.shape_cast %387 : vector<8xf32> to vector<8x1xf32>
    %389 = vector.broadcast %388 : vector<8x1xf32> to vector<8x8xf32>
    %390 = arith.subf %386, %389 : vector<8x8xf32>
    %391 = math.exp %390 : vector<8x8xf32>
    %cst_96 = arith.constant dense<0.000000e+00> : vector<8xf32>
    %392 = vector.multi_reduction <add>, %391, %cst_96 [1] : vector<8x8xf32> to vector<8xf32>
    %393 = vector.shape_cast %392 : vector<8xf32> to vector<8x1xf32>
    %394 = tpu.reciprocal %393 {approx = true} : vector<8x1xf32> -> vector<8x1xf32>
    %395 = vector.broadcast %394 : vector<8x1xf32> to vector<8x8xf32>
    %396 = arith.mulf %391, %395 : vector<8x8xf32>
    %397 = arith.truncf %396 : vector<8x8xf32> to vector<8x8xbf16>
    %398 = arith.truncf %381 : vector<8x8xf32> to vector<8x8xbf16>
    %cst_97 = arith.constant dense<0.000000e+00> : vector<8x8xf32>
    %399 = tpu.matmul %397, %398, %cst_97 {dimension_numbers = #tpu.dot_dimension_numbers<[1], [0], [0], [1], [0, 0, 1, 1], [], []>} : vector<8x8xbf16>, vector<8x8xbf16>, vector<8x8xf32> -> vector<8x8xf32>
    %400 = tpu.concatenate %336, %357, %378, %399 in 1 : vector<8x8xf32>, vector<8x8xf32>, vector<8x8xf32>, vector<8x8xf32> -> vector<8x32xf32>
    %401 = vector.extract_strided_slice %32 {offsets = [1, 0], sizes = [1, 8], strides = [1, 1]} : vector<2x8xf32> to vector<1x8xf32>
    %402 = vector.extract_strided_slice %314 {offsets = [8, 0], sizes = [8, 8], strides = [1, 1]} : vector<16x384xf32> to vector<8x8xf32>
    %403 = vector.extract_strided_slice %314 {offsets = [8, 128], sizes = [8, 8], strides = [1, 1]} : vector<16x384xf32> to vector<8x8xf32>
    %404 = vector.extract_strided_slice %314 {offsets = [8, 256], sizes = [8, 8], strides = [1, 1]} : vector<16x384xf32> to vector<8x8xf32>
    %405 = arith.truncf %402 : vector<8x8xf32> to vector<8x8xbf16>
    %406 = arith.truncf %403 : vector<8x8xf32> to vector<8x8xbf16>
    %cst_98 = arith.constant dense<0.000000e+00> : vector<8x8xf32>
    %407 = tpu.matmul %405, %406, %cst_98 {dimension_numbers = #tpu.dot_dimension_numbers<[1], [1], [0], [0], [0, 0, 1, 0], [], []>} : vector<8x8xbf16>, vector<8x8xbf16>, vector<8x8xf32> -> vector<8x8xf32>
    %408 = vector.broadcast %401 : vector<1x8xf32> to vector<8x8xf32>
    %409 = arith.addf %407, %408 : vector<8x8xf32>
    %cst_99 = arith.constant dense<0xFF800000> : vector<8xf32>
    %410 = vector.multi_reduction <maximumf>, %409, %cst_99 [1] : vector<8x8xf32> to vector<8xf32>
    %411 = vector.shape_cast %410 : vector<8xf32> to vector<8x1xf32>
    %412 = vector.broadcast %411 : vector<8x1xf32> to vector<8x8xf32>
    %413 = arith.subf %409, %412 : vector<8x8xf32>
    %414 = math.exp %413 : vector<8x8xf32>
    %cst_100 = arith.constant dense<0.000000e+00> : vector<8xf32>
    %415 = vector.multi_reduction <add>, %414, %cst_100 [1] : vector<8x8xf32> to vector<8xf32>
    %416 = vector.shape_cast %415 : vector<8xf32> to vector<8x1xf32>
    %417 = tpu.reciprocal %416 {approx = true} : vector<8x1xf32> -> vector<8x1xf32>
    %418 = vector.broadcast %417 : vector<8x1xf32> to vector<8x8xf32>
    %419 = arith.mulf %414, %418 : vector<8x8xf32>
    %420 = arith.truncf %419 : vector<8x8xf32> to vector<8x8xbf16>
    %421 = arith.truncf %404 : vector<8x8xf32> to vector<8x8xbf16>
    %cst_101 = arith.constant dense<0.000000e+00> : vector<8x8xf32>
    %422 = tpu.matmul %420, %421, %cst_101 {dimension_numbers = #tpu.dot_dimension_numbers<[1], [0], [0], [1], [0, 0, 1, 1], [], []>} : vector<8x8xbf16>, vector<8x8xbf16>, vector<8x8xf32> -> vector<8x8xf32>
    %423 = vector.extract_strided_slice %314 {offsets = [8, 8], sizes = [8, 8], strides = [1, 1]} : vector<16x384xf32> to vector<8x8xf32>
    %424 = vector.extract_strided_slice %314 {offsets = [8, 136], sizes = [8, 8], strides = [1, 1]} : vector<16x384xf32> to vector<8x8xf32>
    %425 = vector.extract_strided_slice %314 {offsets = [8, 264], sizes = [8, 8], strides = [1, 1]} : vector<16x384xf32> to vector<8x8xf32>
    %426 = arith.truncf %423 : vector<8x8xf32> to vector<8x8xbf16>
    %427 = arith.truncf %424 : vector<8x8xf32> to vector<8x8xbf16>
    %cst_102 = arith.constant dense<0.000000e+00> : vector<8x8xf32>
    %428 = tpu.matmul %426, %427, %cst_102 {dimension_numbers = #tpu.dot_dimension_numbers<[1], [1], [0], [0], [0, 0, 1, 0], [], []>} : vector<8x8xbf16>, vector<8x8xbf16>, vector<8x8xf32> -> vector<8x8xf32>
    %429 = vector.broadcast %401 : vector<1x8xf32> to vector<8x8xf32>
    %430 = arith.addf %428, %429 : vector<8x8xf32>
    %cst_103 = arith.constant dense<0xFF800000> : vector<8xf32>
    %431 = vector.multi_reduction <maximumf>, %430, %cst_103 [1] : vector<8x8xf32> to vector<8xf32>
    %432 = vector.shape_cast %431 : vector<8xf32> to vector<8x1xf32>
    %433 = vector.broadcast %432 : vector<8x1xf32> to vector<8x8xf32>
    %434 = arith.subf %430, %433 : vector<8x8xf32>
    %435 = math.exp %434 : vector<8x8xf32>
    %cst_104 = arith.constant dense<0.000000e+00> : vector<8xf32>
    %436 = vector.multi_reduction <add>, %435, %cst_104 [1] : vector<8x8xf32> to vector<8xf32>
    %437 = vector.shape_cast %436 : vector<8xf32> to vector<8x1xf32>
    %438 = tpu.reciprocal %437 {approx = true} : vector<8x1xf32> -> vector<8x1xf32>
    %439 = vector.broadcast %438 : vector<8x1xf32> to vector<8x8xf32>
    %440 = arith.mulf %435, %439 : vector<8x8xf32>
    %441 = arith.truncf %440 : vector<8x8xf32> to vector<8x8xbf16>
    %442 = arith.truncf %425 : vector<8x8xf32> to vector<8x8xbf16>
    %cst_105 = arith.constant dense<0.000000e+00> : vector<8x8xf32>
    %443 = tpu.matmul %441, %442, %cst_105 {dimension_numbers = #tpu.dot_dimension_numbers<[1], [0], [0], [1], [0, 0, 1, 1], [], []>} : vector<8x8xbf16>, vector<8x8xbf16>, vector<8x8xf32> -> vector<8x8xf32>
    %444 = vector.extract_strided_slice %314 {offsets = [8, 16], sizes = [8, 8], strides = [1, 1]} : vector<16x384xf32> to vector<8x8xf32>
    %445 = vector.extract_strided_slice %314 {offsets = [8, 144], sizes = [8, 8], strides = [1, 1]} : vector<16x384xf32> to vector<8x8xf32>
    %446 = vector.extract_strided_slice %314 {offsets = [8, 272], sizes = [8, 8], strides = [1, 1]} : vector<16x384xf32> to vector<8x8xf32>
    %447 = arith.truncf %444 : vector<8x8xf32> to vector<8x8xbf16>
    %448 = arith.truncf %445 : vector<8x8xf32> to vector<8x8xbf16>
    %cst_106 = arith.constant dense<0.000000e+00> : vector<8x8xf32>
    %449 = tpu.matmul %447, %448, %cst_106 {dimension_numbers = #tpu.dot_dimension_numbers<[1], [1], [0], [0], [0, 0, 1, 0], [], []>} : vector<8x8xbf16>, vector<8x8xbf16>, vector<8x8xf32> -> vector<8x8xf32>
    %450 = vector.broadcast %401 : vector<1x8xf32> to vector<8x8xf32>
    %451 = arith.addf %449, %450 : vector<8x8xf32>
    %cst_107 = arith.constant dense<0xFF800000> : vector<8xf32>
    %452 = vector.multi_reduction <maximumf>, %451, %cst_107 [1] : vector<8x8xf32> to vector<8xf32>
    %453 = vector.shape_cast %452 : vector<8xf32> to vector<8x1xf32>
    %454 = vector.broadcast %453 : vector<8x1xf32> to vector<8x8xf32>
    %455 = arith.subf %451, %454 : vector<8x8xf32>
    %456 = math.exp %455 : vector<8x8xf32>
    %cst_108 = arith.constant dense<0.000000e+00> : vector<8xf32>
    %457 = vector.multi_reduction <add>, %456, %cst_108 [1] : vector<8x8xf32> to vector<8xf32>
    %458 = vector.shape_cast %457 : vector<8xf32> to vector<8x1xf32>
    %459 = tpu.reciprocal %458 {approx = true} : vector<8x1xf32> -> vector<8x1xf32>
    %460 = vector.broadcast %459 : vector<8x1xf32> to vector<8x8xf32>
    %461 = arith.mulf %456, %460 : vector<8x8xf32>
    %462 = arith.truncf %461 : vector<8x8xf32> to vector<8x8xbf16>
    %463 = arith.truncf %446 : vector<8x8xf32> to vector<8x8xbf16>
    %cst_109 = arith.constant dense<0.000000e+00> : vector<8x8xf32>
    %464 = tpu.matmul %462, %463, %cst_109 {dimension_numbers = #tpu.dot_dimension_numbers<[1], [0], [0], [1], [0, 0, 1, 1], [], []>} : vector<8x8xbf16>, vector<8x8xbf16>, vector<8x8xf32> -> vector<8x8xf32>
    %465 = vector.extract_strided_slice %314 {offsets = [8, 24], sizes = [8, 8], strides = [1, 1]} : vector<16x384xf32> to vector<8x8xf32>
    %466 = vector.extract_strided_slice %314 {offsets = [8, 152], sizes = [8, 8], strides = [1, 1]} : vector<16x384xf32> to vector<8x8xf32>
    %467 = vector.extract_strided_slice %314 {offsets = [8, 280], sizes = [8, 8], strides = [1, 1]} : vector<16x384xf32> to vector<8x8xf32>
    %468 = arith.truncf %465 : vector<8x8xf32> to vector<8x8xbf16>
    %469 = arith.truncf %466 : vector<8x8xf32> to vector<8x8xbf16>
    %cst_110 = arith.constant dense<0.000000e+00> : vector<8x8xf32>
    %470 = tpu.matmul %468, %469, %cst_110 {dimension_numbers = #tpu.dot_dimension_numbers<[1], [1], [0], [0], [0, 0, 1, 0], [], []>} : vector<8x8xbf16>, vector<8x8xbf16>, vector<8x8xf32> -> vector<8x8xf32>
    %471 = vector.broadcast %401 : vector<1x8xf32> to vector<8x8xf32>
    %472 = arith.addf %470, %471 : vector<8x8xf32>
    %cst_111 = arith.constant dense<0xFF800000> : vector<8xf32>
    %473 = vector.multi_reduction <maximumf>, %472, %cst_111 [1] : vector<8x8xf32> to vector<8xf32>
    %474 = vector.shape_cast %473 : vector<8xf32> to vector<8x1xf32>
    %475 = vector.broadcast %474 : vector<8x1xf32> to vector<8x8xf32>
    %476 = arith.subf %472, %475 : vector<8x8xf32>
    %477 = math.exp %476 : vector<8x8xf32>
    %cst_112 = arith.constant dense<0.000000e+00> : vector<8xf32>
    %478 = vector.multi_reduction <add>, %477, %cst_112 [1] : vector<8x8xf32> to vector<8xf32>
    %479 = vector.shape_cast %478 : vector<8xf32> to vector<8x1xf32>
    %480 = tpu.reciprocal %479 {approx = true} : vector<8x1xf32> -> vector<8x1xf32>
    %481 = vector.broadcast %480 : vector<8x1xf32> to vector<8x8xf32>
    %482 = arith.mulf %477, %481 : vector<8x8xf32>
    %483 = arith.truncf %482 : vector<8x8xf32> to vector<8x8xbf16>
    %484 = arith.truncf %467 : vector<8x8xf32> to vector<8x8xbf16>
    %cst_113 = arith.constant dense<0.000000e+00> : vector<8x8xf32>
    %485 = tpu.matmul %483, %484, %cst_113 {dimension_numbers = #tpu.dot_dimension_numbers<[1], [0], [0], [1], [0, 0, 1, 1], [], []>} : vector<8x8xbf16>, vector<8x8xbf16>, vector<8x8xf32> -> vector<8x8xf32>
    %486 = tpu.concatenate %422, %443, %464, %485 in 1 : vector<8x8xf32>, vector<8x8xf32>, vector<8x8xf32>, vector<8x8xf32> -> vector<8x32xf32>
    %487 = tpu.concatenate %400, %486 in 0 : vector<8x32xf32>, vector<8x32xf32> -> vector<16x32xf32>
    %c1_114 = arith.constant 1 : index
    %c0_115 = arith.constant 0 : index
    %c0_116 = arith.constant 0 : index
    %488 = vector.load %arg5[%c1_114, %c0_115, %c0_116] : memref<2x32x32xbf16, #tpu.memory_space<vmem>>, vector<1x32x32xbf16>
    %489 = vector.shape_cast %488 : vector<1x32x32xbf16> to vector<32x32xbf16>
    %490 = arith.truncf %487 : vector<16x32xf32> to vector<16x32xbf16>
    %cst_117 = arith.constant dense<0.000000e+00> : vector<16x32xf32>
    %491 = tpu.matmul %490, %489, %cst_117 {dimension_numbers = #tpu.dot_dimension_numbers<[1], [0], [0], [1], [0, 0, 1, 1], [], []>} : vector<16x32xbf16>, vector<32x32xbf16>, vector<16x32xf32> -> vector<16x32xf32>
    %492 = vector.broadcast %302 : vector<1x32xf32> to vector<16x32xf32>
    %493 = arith.addf %491, %492 : vector<16x32xf32>
    %494 = arith.addf %493, %298 : vector<16x32xf32>
    %cst_118 = arith.constant dense<0.000000e+00> : vector<16xf32>
    %495 = vector.multi_reduction <add>, %494, %cst_118 [1] : vector<16x32xf32> to vector<16xf32>
    %496 = vector.shape_cast %495 : vector<16xf32> to vector<16x1xf32>
    %cst_119 = arith.constant 3.200000e+01 : f32
    %497 = vector.broadcast %cst_119 : f32 to vector<16x1xf32>
    %498 = arith.divf %496, %497 : vector<16x1xf32>
    %499 = vector.broadcast %498 : vector<16x1xf32> to vector<16x32xf32>
    %500 = arith.subf %494, %499 : vector<16x32xf32>
    %501 = arith.mulf %500, %500 : vector<16x32xf32>
    %cst_120 = arith.constant dense<0.000000e+00> : vector<16xf32>
    %502 = vector.multi_reduction <add>, %501, %cst_120 [1] : vector<16x32xf32> to vector<16xf32>
    %503 = vector.shape_cast %502 : vector<16xf32> to vector<16x1xf32>
    %cst_121 = arith.constant 3.200000e+01 : f32
    %504 = vector.broadcast %cst_121 : f32 to vector<16x1xf32>
    %505 = arith.divf %503, %504 : vector<16x1xf32>
    %506 = vector.broadcast %498 : vector<16x1xf32> to vector<16x32xf32>
    %507 = arith.subf %494, %506 : vector<16x32xf32>
    %cst_122 = arith.constant 9.99999974E-6 : f32
    %508 = vector.broadcast %cst_122 : f32 to vector<16x1xf32>
    %509 = arith.addf %505, %508 : vector<16x1xf32>
    %510 = math.rsqrt %509 : vector<16x1xf32>
    %511 = vector.broadcast %510 : vector<16x1xf32> to vector<16x32xf32>
    %512 = arith.mulf %507, %511 : vector<16x32xf32>
    %513 = vector.broadcast %303 : vector<1x32xf32> to vector<16x32xf32>
    %514 = arith.mulf %512, %513 : vector<16x32xf32>
    %515 = vector.broadcast %304 : vector<1x32xf32> to vector<16x32xf32>
    %516 = arith.addf %514, %515 : vector<16x32xf32>
    %c1_123 = arith.constant 1 : index
    %c0_124 = arith.constant 0 : index
    %c0_125 = arith.constant 0 : index
    %517 = vector.load %arg6[%c1_123, %c0_124, %c0_125] : memref<2x32x64xbf16, #tpu.memory_space<vmem>>, vector<1x32x64xbf16>
    %518 = vector.shape_cast %517 : vector<1x32x64xbf16> to vector<32x64xbf16>
    %519 = arith.truncf %516 : vector<16x32xf32> to vector<16x32xbf16>
    %cst_126 = arith.constant dense<0.000000e+00> : vector<16x64xf32>
    %520 = tpu.matmul %519, %518, %cst_126 {dimension_numbers = #tpu.dot_dimension_numbers<[1], [0], [0], [1], [0, 0, 1, 1], [], []>} : vector<16x32xbf16>, vector<32x64xbf16>, vector<16x64xf32> -> vector<16x64xf32>
    %521 = vector.broadcast %305 : vector<1x64xf32> to vector<16x64xf32>
    %522 = arith.addf %520, %521 : vector<16x64xf32>
    %523 = arith.mulf %522, %522 : vector<16x64xf32>
    %524 = arith.mulf %522, %523 : vector<16x64xf32>
    %cst_127 = arith.constant 4.471500e-02 : f32
    %525 = vector.broadcast %cst_127 : f32 to vector<16x64xf32>
    %526 = arith.mulf %525, %524 : vector<16x64xf32>
    %527 = arith.addf %522, %526 : vector<16x64xf32>
    %cst_128 = arith.constant 0.797884583 : f32
    %528 = vector.broadcast %cst_128 : f32 to vector<16x64xf32>
    %529 = arith.mulf %528, %527 : vector<16x64xf32>
    %530 = math.tanh %529 : vector<16x64xf32>
    %cst_129 = arith.constant 1.000000e+00 : f32
    %531 = vector.broadcast %cst_129 : f32 to vector<16x64xf32>
    %532 = arith.addf %531, %530 : vector<16x64xf32>
    %cst_130 = arith.constant 5.000000e-01 : f32
    %533 = vector.broadcast %cst_130 : f32 to vector<16x64xf32>
    %534 = arith.mulf %533, %532 : vector<16x64xf32>
    %535 = arith.mulf %522, %534 : vector<16x64xf32>
    %c1_131 = arith.constant 1 : index
    %c0_132 = arith.constant 0 : index
    %c0_133 = arith.constant 0 : index
    %536 = vector.load %arg7[%c1_131, %c0_132, %c0_133] : memref<2x64x32xbf16, #tpu.memory_space<vmem>>, vector<1x64x32xbf16>
    %537 = vector.shape_cast %536 : vector<1x64x32xbf16> to vector<64x32xbf16>
    %538 = arith.truncf %535 : vector<16x64xf32> to vector<16x64xbf16>
    %cst_134 = arith.constant dense<0.000000e+00> : vector<16x32xf32>
    %539 = tpu.matmul %538, %537, %cst_134 {dimension_numbers = #tpu.dot_dimension_numbers<[1], [0], [0], [1], [0, 0, 1, 1], [], []>} : vector<16x64xbf16>, vector<64x32xbf16>, vector<16x32xf32> -> vector<16x32xf32>
    %540 = vector.broadcast %306 : vector<1x32xf32> to vector<16x32xf32>
    %541 = arith.addf %539, %540 : vector<16x32xf32>
    %542 = arith.addf %541, %516 : vector<16x32xf32>
    %cst_135 = arith.constant dense<0.000000e+00> : vector<16xf32>
    %543 = vector.multi_reduction <add>, %542, %cst_135 [1] : vector<16x32xf32> to vector<16xf32>
    %544 = vector.shape_cast %543 : vector<16xf32> to vector<16x1xf32>
    %cst_136 = arith.constant 3.200000e+01 : f32
    %545 = vector.broadcast %cst_136 : f32 to vector<16x1xf32>
    %546 = arith.divf %544, %545 : vector<16x1xf32>
    %547 = vector.broadcast %546 : vector<16x1xf32> to vector<16x32xf32>
    %548 = arith.subf %542, %547 : vector<16x32xf32>
    %549 = arith.mulf %548, %548 : vector<16x32xf32>
    %cst_137 = arith.constant dense<0.000000e+00> : vector<16xf32>
    %550 = vector.multi_reduction <add>, %549, %cst_137 [1] : vector<16x32xf32> to vector<16xf32>
    %551 = vector.shape_cast %550 : vector<16xf32> to vector<16x1xf32>
    %cst_138 = arith.constant 3.200000e+01 : f32
    %552 = vector.broadcast %cst_138 : f32 to vector<16x1xf32>
    %553 = arith.divf %551, %552 : vector<16x1xf32>
    %554 = vector.broadcast %546 : vector<16x1xf32> to vector<16x32xf32>
    %555 = arith.subf %542, %554 : vector<16x32xf32>
    %cst_139 = arith.constant 9.99999974E-6 : f32
    %556 = vector.broadcast %cst_139 : f32 to vector<16x1xf32>
    %557 = arith.addf %553, %556 : vector<16x1xf32>
    %558 = math.rsqrt %557 : vector<16x1xf32>
    %559 = vector.broadcast %558 : vector<16x1xf32> to vector<16x32xf32>
    %560 = arith.mulf %555, %559 : vector<16x32xf32>
    %561 = vector.broadcast %307 : vector<1x32xf32> to vector<16x32xf32>
    %562 = arith.mulf %560, %561 : vector<16x32xf32>
    %563 = vector.broadcast %308 : vector<1x32xf32> to vector<16x32xf32>
    %564 = arith.addf %562, %563 : vector<16x32xf32>
    %565 = vector.extract_strided_slice %564 {offsets = [0, 0], sizes = [1, 32], strides = [1, 1]} : vector<16x32xf32> to vector<1x32xf32>
    %566 = vector.extract_strided_slice %564 {offsets = [8, 0], sizes = [1, 32], strides = [1, 1]} : vector<16x32xf32> to vector<1x32xf32>
    %567 = tpu.concatenate %565, %566 in 0 : vector<1x32xf32>, vector<1x32xf32> -> vector<2x32xf32>
    %c0_140 = arith.constant 0 : index
    %c0_141 = arith.constant 0 : index
    %568 = vector.load %arg8[%c0_140, %c0_141] : memref<32x256xbf16, #tpu.memory_space<vmem>>, vector<32x256xbf16>
    %569 = vector.extract_strided_slice %568 {offsets = [0, 0], sizes = [32, 32], strides = [1, 1]} : vector<32x256xbf16> to vector<32x32xbf16>
    %570 = arith.truncf %567 : vector<2x32xf32> to vector<2x32xbf16>
    %cst_142 = arith.constant dense<0.000000e+00> : vector<2x32xf32>
    %571 = tpu.matmul %570, %569, %cst_142 {dimension_numbers = #tpu.dot_dimension_numbers<[1], [0], [0], [1], [0, 0, 1, 1], [], []>} : vector<2x32xbf16>, vector<32x32xbf16>, vector<2x32xf32> -> vector<2x32xf32>
    %572 = vector.broadcast %3 : vector<1x32xf32> to vector<2x32xf32>
    %573 = arith.addf %571, %572 : vector<2x32xf32>
    %574 = math.tanh %573 : vector<2x32xf32>
    %575 = vector.extract_strided_slice %568 {offsets = [0, 128], sizes = [32, 128], strides = [1, 1]} : vector<32x256xbf16> to vector<32x128xbf16>
    %576 = arith.truncf %574 : vector<2x32xf32> to vector<2x32xbf16>
    %cst_143 = arith.constant dense<0.000000e+00> : vector<2x128xf32>
    %577 = tpu.matmul %576, %575, %cst_143 {dimension_numbers = #tpu.dot_dimension_numbers<[1], [0], [0], [1], [0, 0, 1, 1], [], []>} : vector<2x32xbf16>, vector<32x128xbf16>, vector<2x128xf32> -> vector<2x128xf32>
    %578 = vector.broadcast %4 : vector<1x128xf32> to vector<2x128xf32>
    %579 = arith.addf %577, %578 : vector<2x128xf32>
    %c0_144 = arith.constant 0 : index
    %c0_145 = arith.constant 0 : index
    %580 = vector.load %arg9[%c0_144, %c0_145] : memref<2x128xf32, #tpu.memory_space<vmem>>, vector<2x128xf32>
    tpu.vector_store %arg9[%c0_144, %c0_145], %579 {strides = array<i32>} : memref<2x128xf32, #tpu.memory_space<vmem>>, vector<2x128xf32>,
    return
  }
}

</mosaic_0001>

<llo_original>
// kernel: sentiment_classifier_forward.1
$region0: #{sentiment_classifier_forward.1}
  #allocation0 [shape = 'u32[]', space=smem, size = 0x4, offset = 0x4, fixed_abs, tag = 'smem constant byte address 0x4 - core index']
  #allocation1 [shape = 'u32[144,128]{1,0:T(1,128)}', space=vmem, size = 0x12000, scoped, tag = 'internal scratch']
  %s0 = inlined_call_operand.vmem [shape: f32[16,32], index: 0, kind: input, shape index: {}]
  %s1 = inlined_call_operand.vmem [shape: f32[2,8], index: 1, kind: input, shape index: {}]
  %s2 = inlined_call_operand.vmem [shape: f32[4,128], index: 2, kind: input, shape index: {}]
  %s3 = inlined_call_operand.vmem [shape: f32[2,8,384], index: 3, kind: input, shape index: {}]
  %s4 = inlined_call_operand.vmem [shape: bf16[2,32,384], index: 4, kind: input, shape index: {}]
  %s5 = inlined_call_operand.vmem [shape: bf16[2,32,32], index: 5, kind: input, shape index: {}]
  %s6 = inlined_call_operand.vmem [shape: bf16[2,32,64], index: 6, kind: input, shape index: {}]
  %s7 = inlined_call_operand.vmem [shape: bf16[2,64,32], index: 7, kind: input, shape index: {}]
  %s8 = inlined_call_operand.vmem [shape: bf16[32,256], index: 8, kind: input, shape index: {}]
  %s9 = inlined_call_operand.hbm [shape: f32[2,128], index: 9, kind: output, shape index: {}]
  %s10 = sld [smem:[#allocation0]]
  $region46: #{sentiment_classifier_forward.1} parent=0
    _
  %s12 = ssub.s32 1, %s10
  %s13 = scalar_select 0, %s12, %s10
  $region1: #{sentiment_classifier_forward.1} parent=0
    #allocation2 [shape = 'u8[1024]{0}', space=vmem, size = 0x400, scoped, tag = 'output window, operand 0, single buffered']
    #allocation3 [shape = 's32[1]{0}', space=sflag, size = 0x4, scoped, tag = 'scoped memory for sentiment_classifier_forward.1']
    %14 = vsyncpa [#allocation3], 0
    // Predicated region
    $region2: #{sentiment_classifier_forward.1} parent=1 // pred_check
      _
    $region3: #{sentiment_classifier_forward.1} parent=1 // pred_check_branch
      %16 = sbr.rel (0) target = $region5
    $region4: #{sentiment_classifier_forward.1} parent=1 // pred_region
      _
    $region5: #{sentiment_classifier_forward.1} parent=1 // pred_fallthru
      _
    // Predicated region
    $region6: #{sentiment_classifier_forward.1} parent=1 // pred_check
      _
    $region7: #{sentiment_classifier_forward.1} parent=1 // pred_check_branch
      %18 = sbr.rel (0) target = $region9
    $region8: #{sentiment_classifier_forward.1} parent=1 // pred_region
      _
    $region9: #{sentiment_classifier_forward.1} parent=1 // pred_fallthru
      _
    // Predicated region
    $region10: #{sentiment_classifier_forward.1} parent=1 // pred_check
      _
    $region11: #{sentiment_classifier_forward.1} parent=1 // pred_check_branch
      %20 = sbr.rel (0) target = $region13
    $region12: #{sentiment_classifier_forward.1} parent=1 // pred_region
      _
    $region13: #{sentiment_classifier_forward.1} parent=1 // pred_fallthru
      _
    // Predicated region
    $region14: #{sentiment_classifier_forward.1} parent=1 // pred_check
      _
    $region15: #{sentiment_classifier_forward.1} parent=1 // pred_check_branch
      %22 = sbr.rel (0) target = $region17
    $region16: #{sentiment_classifier_forward.1} parent=1 // pred_region
      _
    $region17: #{sentiment_classifier_forward.1} parent=1 // pred_fallthru
      _
    // Predicated region
    $region18: #{sentiment_classifier_forward.1} parent=1 // pred_check
      _
    $region19: #{sentiment_classifier_forward.1} parent=1 // pred_check_branch
      %24 = sbr.rel (0) target = $region21
    $region20: #{sentiment_classifier_forward.1} parent=1 // pred_region
      _
    $region21: #{sentiment_classifier_forward.1} parent=1 // pred_fallthru
      _
    // Predicated region
    $region22: #{sentiment_classifier_forward.1} parent=1 // pred_check
      _
    $region23: #{sentiment_classifier_forward.1} parent=1 // pred_check_branch
      %26 = sbr.rel (0) target = $region25
    $region24: #{sentiment_classifier_forward.1} parent=1 // pred_region
      _
    $region25: #{sentiment_classifier_forward.1} parent=1 // pred_fallthru
      _
    // Predicated region
    $region26: #{sentiment_classifier_forward.1} parent=1 // pred_check
      _
    $region27: #{sentiment_classifier_forward.1} parent=1 // pred_check_branch
      %28 = sbr.rel (0) target = $region29
    $region28: #{sentiment_classifier_forward.1} parent=1 // pred_region
      _
    $region29: #{sentiment_classifier_forward.1} parent=1 // pred_fallthru
      _
    // Predicated region
    $region30: #{sentiment_classifier_forward.1} parent=1 // pred_check
      _
    $region31: #{sentiment_classifier_forward.1} parent=1 // pred_check_branch
      %30 = sbr.rel (0) target = $region33
    $region32: #{sentiment_classifier_forward.1} parent=1 // pred_region
      _
    $region33: #{sentiment_classifier_forward.1} parent=1 // pred_fallthru
      _
    // Predicated region
    $region34: #{sentiment_classifier_forward.1} parent=1 // pred_check
      _
    $region35: #{sentiment_classifier_forward.1} parent=1 // pred_check_branch
      %32 = sbr.rel (0) target = $region37
    $region36: #{sentiment_classifier_forward.1} parent=1 // pred_region
      _
    $region37: #{sentiment_classifier_forward.1} parent=1 // pred_fallthru
      _
    %v34 = vld [vmem:[%s2] sm:$0xf]
    %v35 = vld [vmem:[%s0] sm:$0xff]
    %v36 = vld [vmem:[%s0 + $0x8] sm:$0xff]
    %vm37 = vcmask 261120
    %v38 = vsel %vm37, %v35, 0.0
    %39 = vadd.xlane.f32.xlu0 %v38
    %v40 = vpop.xlane.xlu0 %39
    %v41 = vsel %vm37, %v36, 0.0
    %42 = vadd.xlane.f32.xlu0 %v41
    %v43 = vpop.xlane.xlu0 %42
    %v44 = vrcp.pop 32.0
    %v45 = vmul.f32 %v40, %v44
    %v46 = vmul.f32 %v43, %v44
    %v47 = vsub.f32 %v35, %v45
    %v48 = vsub.f32 %v36, %v46
    %v49 = vmul.f32 %v47, %v47
    %v50 = vmul.f32 %v48, %v48
    %v51 = vsel %vm37, %v49, 0.0
    %52 = vadd.xlane.f32.xlu0 %v51
    %v53 = vpop.xlane.xlu0 %52
    %v54 = vsel %vm37, %v50, 0.0
    %55 = vadd.xlane.f32.xlu0 %v54
    %v56 = vpop.xlane.xlu0 %55
    %v57 = vmul.f32 %v53, %v44
    %v58 = vmul.f32 %v56, %v44
    %v59 = vadd.f32 %v57, 1e-05
    %v60 = vadd.f32 %v58, 1e-05
    %v61 = vrsqrt.pop %v59
    %v62 = vrsqrt.pop %v60
    %v63 = vmul.f32 %v47, %v61
    %v64 = vmul.f32 %v48, %v62
    %v65 = vlaneseq
    %v66 = vshrl.u32 %v65, 7
    %v67 = vsub.s32 0, %v66
    %v68 = vrot.slane %v34, %v67
    %v69 = vmul.f32 %v63, %v68
    %v70 = vmul.f32 %v64, %v68
    %v71 = vlaneseq
    %v72 = vshrl.u32 %v71, 7
    %v73 = vsub.s32 1, %v72
    %v74 = vrot.slane %v34, %v73
    %v75 = vadd.f32 %v69, %v74
    %v76 = vadd.f32 %v70, %v74
    %v77 = vld [vmem:[%s1] sm:$0x3]
    %v78 = vsub.f32 1.0, %v77
    %v79 = vmul.f32 %v78, -1e+09
    %v80 = vld [vmem:[%s3] sm:$0xff]
    %v81 = vld [vmem:[%s3 + $0x8] sm:$0xff]
    %v82 = vld [vmem:[%s3 + $0x10] sm:$0xff]
    %v83 = vld [vmem:[%s4] sm:$0xff]
    %v84 = vld [vmem:[%s4 + $0x8] sm:$0xf]
    %v85 = vld [vmem:[%s4 + $0xc] sm:$0xff]
    %v86 = vld [vmem:[%s4 + $0x14] sm:$0xf]
    %v87 = vld [vmem:[%s4 + $0x18] sm:$0xff]
    %v88 = vld [vmem:[%s4 + $0x20] sm:$0xf]
    %v89 = vld [vmem:[%s4 + $0x24] sm:$0xff]
    %v90 = vld [vmem:[%s4 + $0x2c] sm:$0xf]
    %v91 = vpack.c.bf16 %v76, %v75
    %v92 = vlaneseq
    %v93 = vshrl.u32 %v92, 7
    %v94 = vsub.s32 0, %v93
    %v95 = vrot.slane %v80, %v94
    %v96 = vlaneseq
    %v97 = vshrl.u32 %v96, 7
    %v98 = vsub.s32 0, %v97
    %v99 = vrot.slane %v81, %v98
    %v100 = vlaneseq
    %v101 = vshrl.u32 %v100, 7
    %v102 = vsub.s32 0, %v101
    %v103 = vrot.slane %v82, %v102
    %v112 = vunpack.c.l.b16 %v83
    %v113 = vunpack.c.h.b16 %v83
    %v114 = vunpack.c.l.b16 %v84
    %v115 = vunpack.c.l.b16 %v85
    %v116 = vunpack.c.h.b16 %v85
    %v117 = vunpack.c.l.b16 %v86
    %v118 = vunpack.c.l.b16 %v87
    %v119 = vunpack.c.h.b16 %v87
    %v120 = vunpack.c.l.b16 %v88
    %v121 = vunpack.c.l.b16 %v89
    %v122 = vunpack.c.h.b16 %v89
    %v123 = vunpack.c.l.b16 %v90
    %v124 = vpack.c.b16 %v115, %v112
    %v125 = vpack.c.b16 %v116, %v113
    %v126 = vpack.c.b16 %v117, %v114
    %v127 = vpack.c.b16 %v121, %v118
    %v128 = vpack.c.b16 %v122, %v119
    %v129 = vpack.c.b16 %v123, %v120
    %v137 = vsel %vm37, %v91, 0
    %139 = vmatprep.subr.bf16.mxu0 %v125
    %140 = vmatpush1.bf16.msra.mxu0 %v124
    %141 = vmatprep.subr.bf16.mxu0 %v128
    %142 = vmatpush1.bf16.msra.mxu0 %v127
    %143 = vmatprep.subr.bf16.mxu0 0
    %144 = vmatpush1.bf16.msra.mxu0 0
    %145 = vmatprep.subr.bf16.mxu0 0
    %146 = vmatpush1.bf16.msra.mxu0 0
    %147 = vmatprep.subr.bf16.mxu0 0
    %148 = vmatpush1.bf16.msra.mxu0 0
    %149 = vmatprep.subr.bf16.mxu0 0
    %150 = vmatpush1.bf16.msra.mxu0 0
    %151 = vmatprep.subr.bf16.mxu0 0
    %152 = vmatpush1.bf16.msra.mxu0 0
    %153 = vmatprep.subr.bf16.mxu0 0
    %154 = vmatpush1.bf16.msra.mxu0 0
    %155 = vmatprep.subr.bf16.mxu0 0
    %156 = vmatpush1.bf16.msra.mxu0 0
    %157 = vmatprep.subr.bf16.mxu0 0
    %158 = vmatpush1.bf16.msra.mxu0 0
    %159 = vmatprep.subr.bf16.mxu0 0
    %160 = vmatpush1.bf16.msra.mxu0 0
    %161 = vmatprep.subr.bf16.mxu0 0
    %162 = vmatpush1.bf16.msra.mxu0 0
    %163 = vmatprep.subr.bf16.mxu0 0
    %164 = vmatpush1.bf16.msra.mxu0 0
    %165 = vmatprep.subr.bf16.mxu0 0
    %166 = vmatpush1.bf16.msra.mxu0 0
    %167 = vmatprep.subr.bf16.mxu0 0
    %168 = vmatpush1.bf16.msra.mxu0 0
    %169 = vmatprep.subr.bf16.mxu0 0
    %170 = vmatpush1.bf16.msra.mxu0 0
    %171 = vmatprep.mubr.bf16.mxu0 0
    %172 = vmatmul.mubr.bf16.gmra.mrb[0].mxu0 %v137
    %v173 = vpop.f32.mrb[0].mxu0
    %v174 = vadd.f32 %v95, %v173
    %v175 = vpop.f32.mrb[0].mxu0
    %v176 = vadd.f32 %v99, %v175
    %v177 = vpop.f32.mrb[0].mxu0
    %v178 = vadd.f32 %v95, %v177
    %v179 = vpop.f32.mrb[0].mxu0
    %v180 = vadd.f32 %v99, %v179
    %181 = vdwg.mxu0
    %182 = vmatprep.subr.bf16.mxu0 0
    %183 = vmatpush1.bf16.msra.mxu0 %v126
    %184 = vmatprep.subr.bf16.mxu0 0
    %185 = vmatpush1.bf16.msra.mxu0 %v129
    %186 = vmatprep.subr.bf16.mxu0 0
    %187 = vmatpush1.bf16.msra.mxu0 0
    %188 = vmatprep.subr.bf16.mxu0 0
    %189 = vmatpush1.bf16.msra.mxu0 0
    %190 = vmatprep.subr.bf16.mxu0 0
    %191 = vmatpush1.bf16.msra.mxu0 0
    %192 = vmatprep.subr.bf16.mxu0 0
    %193 = vmatpush1.bf16.msra.mxu0 0
    %194 = vmatprep.subr.bf16.mxu0 0
    %195 = vmatpush1.bf16.msra.mxu0 0
    %196 = vmatprep.subr.bf16.mxu0 0
    %197 = vmatpush1.bf16.msra.mxu0 0
    %198 = vmatprep.subr.bf16.mxu0 0
    %199 = vmatpush1.bf16.msra.mxu0 0
    %200 = vmatprep.subr.bf16.mxu0 0
    %201 = vmatpush1.bf16.msra.mxu0 0
    %202 = vmatprep.subr.bf16.mxu0 0
    %203 = vmatpush1.bf16.msra.mxu0 0
    %204 = vmatprep.subr.bf16.mxu0 0
    %205 = vmatpush1.bf16.msra.mxu0 0
    %206 = vmatprep.subr.bf16.mxu0 0
    %207 = vmatpush1.bf16.msra.mxu0 0
    %208 = vmatprep.subr.bf16.mxu0 0
    %209 = vmatpush1.bf16.msra.mxu0 0
    %210 = vmatprep.subr.bf16.mxu0 0
    %211 = vmatpush1.bf16.msra.mxu0 0
    %212 = vmatprep.subr.bf16.mxu0 0
    %213 = vmatpush1.bf16.msra.mxu0 0
    %214 = vmatprep.mubr.bf16.mxu0 0
    %215 = vmatmul.mubr.bf16.gmra.mrb[0].mxu0 %v137
    %v216 = vpop.f32.mrb[0].mxu0
    %v217 = vadd.f32 %v103, %v216
    %v218 = vpop.f32.mrb[0].mxu0
    %v219 = vpop.f32.mrb[0].mxu0
    %v220 = vadd.f32 %v103, %v219
    %v221 = vpop.f32.mrb[0].mxu0
    %222 = vdwg.mxu0
    %v223 = vpack.c.bf16 %v174, %v174
    %v224 = vpack.c.bf16 %v176, %v176
    %v225 = vlaneseq
    %v226 = vshrl.u32 %v225, 7
    %v227 = vsub.s32 0, %v226
    %v228 = vrot.slane %v79, %v227
    %vm229 = vcmask 64512
    %v231 = vsel %vm229, %v223, 0
    %v234 = vsel %vm229, %v224, 0
    %236 = vmatprep.subr.bf16.mxu0 0
    %237 = vmatpush1.bf16.xpose.msra.mxu0 %v234
    %238 = vmatprep.subr.bf16.mxu0 0
    %239 = vmatpush1.bf16.xpose.msra.mxu0 0
    %240 = vmatprep.subr.bf16.mxu0 0
    %241 = vmatpush1.bf16.xpose.msra.mxu0 0
    %242 = vmatprep.subr.bf16.mxu0 0
    %243 = vmatpush1.bf16.xpose.msra.mxu0 0
    %244 = vmatprep.subr.bf16.mxu0 0
    %245 = vmatpush1.bf16.xpose.msra.mxu0 0
    %246 = vmatprep.subr.bf16.mxu0 0
    %247 = vmatpush1.bf16.xpose.msra.mxu0 0
    %248 = vmatprep.subr.bf16.mxu0 0
    %249 = vmatpush1.bf16.xpose.msra.mxu0 0
    %250 = vmatprep.subr.bf16.mxu0 0
    %251 = vmatpush1.bf16.xpose.msra.mxu0 0
    %252 = vmatprep.subr.bf16.mxu0 0
    %253 = vmatpush1.bf16.xpose.msra.mxu0 0
    %254 = vmatprep.subr.bf16.mxu0 0
    %255 = vmatpush1.bf16.xpose.msra.mxu0 0
    %256 = vmatprep.subr.bf16.mxu0 0
    %257 = vmatpush1.bf16.xpose.msra.mxu0 0
    %258 = vmatprep.subr.bf16.mxu0 0
    %259 = vmatpush1.bf16.xpose.msra.mxu0 0
    %260 = vmatprep.subr.bf16.mxu0 0
    %261 = vmatpush1.bf16.xpose.msra.mxu0 0
    %262 = vmatprep.subr.bf16.mxu0 0
    %263 = vmatpush1.bf16.xpose.msra.mxu0 0
    %264 = vmatprep.subr.bf16.mxu0 0
    %265 = vmatpush1.bf16.xpose.msra.mxu0 0
    %266 = vmatprep.subr.bf16.mxu0 0
    %267 = vmatpush1.bf16.xpose.msra.mxu0 0
    %268 = vmatprep.mubr.bf16.mxu0 0
    %269 = vmatmul.mubr.bf16.gmra.mrb[0].mxu0 %v231
    %v270 = vpop.f32.mrb[0].mxu0
    %v271 = vadd.f32 %v228, %v270
    %v272 = vpop.f32.mrb[0].mxu0
    %v273 = vpop.f32.mrb[0].mxu0
    %v274 = vpop.f32.mrb[0].mxu0
    %275 = vdwg.mxu0
    %v276 = vsel %vm229, %v271, -inf
    %277 = vmax.xlane.f32.xlu0 %v276
    %v278 = vpop.xlane.xlu0 %277
    %v279 = vsub.f32 %v271, %v278
    %v280 = vmul.f32 %v279, 1.442695
    %v281 = vpow.pop %v280
    %v282 = vsel %vm229, %v281, 0.0
    %283 = vadd.xlane.f32.xlu0 %v282
    %v284 = vpop.xlane.xlu0 %283
    %v285 = vrcp.pop %v284
    %v286 = vmul.f32 %v281, %v285
    %v287 = vpack.c.bf16 %v286, %v286
    %v288 = vpack.c.bf16 %v217, %v217
    %v290 = vsel %vm229, %v287, 0
    %vm292 = vcmask 1043456
    %v294 = vsel %vm292, %v288, 0
    %296 = vmatprep.subr.bf16.mxu0 0
    %297 = vmatpush1.bf16.msra.mxu0 %v294
    %298 = vmatprep.subr.bf16.mxu0 0
    %299 = vmatpush1.bf16.msra.mxu0 0
    %300 = vmatprep.subr.bf16.mxu0 0
    %301 = vmatpush1.bf16.msra.mxu0 0
    %302 = vmatprep.subr.bf16.mxu0 0
    %303 = vmatpush1.bf16.msra.mxu0 0
    %304 = vmatprep.subr.bf16.mxu0 0
    %305 = vmatpush1.bf16.msra.mxu0 0
    %306 = vmatprep.subr.bf16.mxu0 0
    %307 = vmatpush1.bf16.msra.mxu0 0
    %308 = vmatprep.subr.bf16.mxu0 0
    %309 = vmatpush1.bf16.msra.mxu0 0
    %310 = vmatprep.subr.bf16.mxu0 0
    %311 = vmatpush1.bf16.msra.mxu0 0
    %312 = vmatprep.subr.bf16.mxu0 0
    %313 = vmatpush1.bf16.msra.mxu0 0
    %314 = vmatprep.subr.bf16.mxu0 0
    %315 = vmatpush1.bf16.msra.mxu0 0
    %316 = vmatprep.subr.bf16.mxu0 0
    %317 = vmatpush1.bf16.msra.mxu0 0
    %318 = vmatprep.subr.bf16.mxu0 0
    %319 = vmatpush1.bf16.msra.mxu0 0
    %320 = vmatprep.subr.bf16.mxu0 0
    %321 = vmatpush1.bf16.msra.mxu0 0
    %322 = vmatprep.subr.bf16.mxu0 0
    %323 = vmatpush1.bf16.msra.mxu0 0
    %324 = vmatprep.subr.bf16.mxu0 0
    %325 = vmatpush1.bf16.msra.mxu0 0
    %326 = vmatprep.subr.bf16.mxu0 0
    %327 = vmatpush1.bf16.msra.mxu0 0
    %328 = vmatprep.mubr.bf16.mxu0 0
    %329 = vmatmul.mubr.bf16.gmra.mrb[0].mxu0 %v290
    %v330 = vpop.f32.mrb[0].mxu0
    %v331 = vadd.f32 0.0, %v330
    %v332 = vpop.f32.mrb[0].mxu0
    %v333 = vpop.f32.mrb[0].mxu0
    %v334 = vpop.f32.mrb[0].mxu0
    %335 = vdwg.mxu0
    %337 = vrot.lane.b32.xlu0 %v223, 120
    %v338 = vpop.permute.xlu0 %337
    %340 = vrot.lane.b32.xlu0 %v224, 120
    %v341 = vpop.permute.xlu0 %340
    %v343 = vsel %vm229, %v338, 0
    %v346 = vsel %vm229, %v341, 0
    %348 = vmatprep.subr.bf16.mxu0 0
    %349 = vmatpush1.bf16.xpose.msra.mxu0 %v346
    %350 = vmatprep.subr.bf16.mxu0 0
    %351 = vmatpush1.bf16.xpose.msra.mxu0 0
    %352 = vmatprep.subr.bf16.mxu0 0
    %353 = vmatpush1.bf16.xpose.msra.mxu0 0
    %354 = vmatprep.subr.bf16.mxu0 0
    %355 = vmatpush1.bf16.xpose.msra.mxu0 0
    %356 = vmatprep.subr.bf16.mxu0 0
    %357 = vmatpush1.bf16.xpose.msra.mxu0 0
    %358 = vmatprep.subr.bf16.mxu0 0
    %359 = vmatpush1.bf16.xpose.msra.mxu0 0
    %360 = vmatprep.subr.bf16.mxu0 0
    %361 = vmatpush1.bf16.xpose.msra.mxu0 0
    %362 = vmatprep.subr.bf16.mxu0 0
    %363 = vmatpush1.bf16.xpose.msra.mxu0 0
    %364 = vmatprep.subr.bf16.mxu0 0
    %365 = vmatpush1.bf16.xpose.msra.mxu0 0
    %366 = vmatprep.subr.bf16.mxu0 0
    %367 = vmatpush1.bf16.xpose.msra.mxu0 0
    %368 = vmatprep.subr.bf16.mxu0 0
    %369 = vmatpush1.bf16.xpose.msra.mxu0 0
    %370 = vmatprep.subr.bf16.mxu0 0
    %371 = vmatpush1.bf16.xpose.msra.mxu0 0
    %372 = vmatprep.subr.bf16.mxu0 0
    %373 = vmatpush1.bf16.xpose.msra.mxu0 0
    %374 = vmatprep.subr.bf16.mxu0 0
    %375 = vmatpush1.bf16.xpose.msra.mxu0 0
    %376 = vmatprep.subr.bf16.mxu0 0
    %377 = vmatpush1.bf16.xpose.msra.mxu0 0
    %378 = vmatprep.subr.bf16.mxu0 0
    %379 = vmatpush1.bf16.xpose.msra.mxu0 0
    %380 = vmatprep.mubr.bf16.mxu0 0
    %381 = vmatmul.mubr.bf16.gmra.mrb[0].mxu0 %v343
    %v382 = vpop.f32.mrb[0].mxu0
    %v383 = vadd.f32 %v228, %v382
    %v384 = vpop.f32.mrb[0].mxu0
    %v385 = vpop.f32.mrb[0].mxu0
    %v386 = vpop.f32.mrb[0].mxu0
    %387 = vdwg.mxu0
    %v388 = vsel %vm229, %v383, -inf
    %389 = vmax.xlane.f32.xlu0 %v388
    %v390 = vpop.xlane.xlu0 %389
    %v391 = vsub.f32 %v383, %v390
    %v392 = vmul.f32 %v391, 1.442695
    %v393 = vpow.pop %v392
    %v394 = vsel %vm229, %v393, 0.0
    %395 = vadd.xlane.f32.xlu0 %v394
    %v396 = vpop.xlane.xlu0 %395
    %v397 = vrcp.pop %v396
    %v398 = vmul.f32 %v393, %v397
    %v399 = vpack.c.bf16 %v398, %v398
    %401 = vrot.lane.b32.xlu0 %v288, 120
    %v402 = vpop.permute.xlu0 %401
    %v404 = vsel %vm229, %v399, 0
    %v407 = vsel %vm292, %v402, 0
    %409 = vmatprep.subr.bf16.mxu0 0
    %410 = vmatpush1.bf16.msra.mxu0 %v407
    %411 = vmatprep.subr.bf16.mxu0 0
    %412 = vmatpush1.bf16.msra.mxu0 0
    %413 = vmatprep.subr.bf16.mxu0 0
    %414 = vmatpush1.bf16.msra.mxu0 0
    %415 = vmatprep.subr.bf16.mxu0 0
    %416 = vmatpush1.bf16.msra.mxu0 0
    %417 = vmatprep.subr.bf16.mxu0 0
    %418 = vmatpush1.bf16.msra.mxu0 0
    %419 = vmatprep.subr.bf16.mxu0 0
    %420 = vmatpush1.bf16.msra.mxu0 0
    %421 = vmatprep.subr.bf16.mxu0 0
    %422 = vmatpush1.bf16.msra.mxu0 0
    %423 = vmatprep.subr.bf16.mxu0 0
    %424 = vmatpush1.bf16.msra.mxu0 0
    %425 = vmatprep.subr.bf16.mxu0 0
    %426 = vmatpush1.bf16.msra.mxu0 0
    %427 = vmatprep.subr.bf16.mxu0 0
    %428 = vmatpush1.bf16.msra.mxu0 0
    %429 = vmatprep.subr.bf16.mxu0 0
    %430 = vmatpush1.bf16.msra.mxu0 0
    %431 = vmatprep.subr.bf16.mxu0 0
    %432 = vmatpush1.bf16.msra.mxu0 0
    %433 = vmatprep.subr.bf16.mxu0 0
    %434 = vmatpush1.bf16.msra.mxu0 0
    %435 = vmatprep.subr.bf16.mxu0 0
    %436 = vmatpush1.bf16.msra.mxu0 0
    %437 = vmatprep.subr.bf16.mxu0 0
    %438 = vmatpush1.bf16.msra.mxu0 0
    %439 = vmatprep.subr.bf16.mxu0 0
    %440 = vmatpush1.bf16.msra.mxu0 0
    %441 = vmatprep.mubr.bf16.mxu0 0
    %442 = vmatmul.mubr.bf16.gmra.mrb[0].mxu0 %v404
    %v443 = vpop.f32.mrb[0].mxu0
    %v444 = vadd.f32 0.0, %v443
    %v445 = vpop.f32.mrb[0].mxu0
    %v446 = vpop.f32.mrb[0].mxu0
    %v447 = vpop.f32.mrb[0].mxu0
    %448 = vdwg.mxu0
    %449 = vrot.lane.b32.xlu0 %v223, 112
    %v450 = vpop.permute.xlu0 %449
    %451 = vrot.lane.b32.xlu0 %v224, 112
    %v452 = vpop.permute.xlu0 %451
    %v454 = vsel %vm229, %v450, 0
    %v457 = vsel %vm229, %v452, 0
    %459 = vmatprep.subr.bf16.mxu0 0
    %460 = vmatpush1.bf16.xpose.msra.mxu0 %v457
    %461 = vmatprep.subr.bf16.mxu0 0
    %462 = vmatpush1.bf16.xpose.msra.mxu0 0
    %463 = vmatprep.subr.bf16.mxu0 0
    %464 = vmatpush1.bf16.xpose.msra.mxu0 0
    %465 = vmatprep.subr.bf16.mxu0 0
    %466 = vmatpush1.bf16.xpose.msra.mxu0 0
    %467 = vmatprep.subr.bf16.mxu0 0
    %468 = vmatpush1.bf16.xpose.msra.mxu0 0
    %469 = vmatprep.subr.bf16.mxu0 0
    %470 = vmatpush1.bf16.xpose.msra.mxu0 0
    %471 = vmatprep.subr.bf16.mxu0 0
    %472 = vmatpush1.bf16.xpose.msra.mxu0 0
    %473 = vmatprep.subr.bf16.mxu0 0
    %474 = vmatpush1.bf16.xpose.msra.mxu0 0
    %475 = vmatprep.subr.bf16.mxu0 0
    %476 = vmatpush1.bf16.xpose.msra.mxu0 0
    %477 = vmatprep.subr.bf16.mxu0 0
    %478 = vmatpush1.bf16.xpose.msra.mxu0 0
    %479 = vmatprep.subr.bf16.mxu0 0
    %480 = vmatpush1.bf16.xpose.msra.mxu0 0
    %481 = vmatprep.subr.bf16.mxu0 0
    %482 = vmatpush1.bf16.xpose.msra.mxu0 0
    %483 = vmatprep.subr.bf16.mxu0 0
    %484 = vmatpush1.bf16.xpose.msra.mxu0 0
    %485 = vmatprep.subr.bf16.mxu0 0
    %486 = vmatpush1.bf16.xpose.msra.mxu0 0
    %487 = vmatprep.subr.bf16.mxu0 0
    %488 = vmatpush1.bf16.xpose.msra.mxu0 0
    %489 = vmatprep.subr.bf16.mxu0 0
    %490 = vmatpush1.bf16.xpose.msra.mxu0 0
    %491 = vmatprep.mubr.bf16.mxu0 0
    %492 = vmatmul.mubr.bf16.gmra.mrb[0].mxu0 %v454
    %v493 = vpop.f32.mrb[0].mxu0
    %v494 = vadd.f32 %v228, %v493
    %v495 = vpop.f32.mrb[0].mxu0
    %v496 = vpop.f32.mrb[0].mxu0
    %v497 = vpop.f32.mrb[0].mxu0
    %498 = vdwg.mxu0
    %v499 = vsel %vm229, %v494, -inf
    %500 = vmax.xlane.f32.xlu0 %v499
    %v501 = vpop.xlane.xlu0 %500
    %v502 = vsub.f32 %v494, %v501
    %v503 = vmul.f32 %v502, 1.442695
    %v504 = vpow.pop %v503
    %v505 = vsel %vm229, %v504, 0.0
    %506 = vadd.xlane.f32.xlu0 %v505
    %v507 = vpop.xlane.xlu0 %506
    %v508 = vrcp.pop %v507
    %v509 = vmul.f32 %v504, %v508
    %v510 = vpack.c.bf16 %v509, %v509
    %511 = vrot.lane.b32.xlu0 %v288, 112
    %v512 = vpop.permute.xlu0 %511
    %v514 = vsel %vm229, %v510, 0
    %v517 = vsel %vm292, %v512, 0
    %519 = vmatprep.subr.bf16.mxu0 0
    %520 = vmatpush1.bf16.msra.mxu0 %v517
    %521 = vmatprep.subr.bf16.mxu0 0
    %522 = vmatpush1.bf16.msra.mxu0 0
    %523 = vmatprep.subr.bf16.mxu0 0
    %524 = vmatpush1.bf16.msra.mxu0 0
    %525 = vmatprep.subr.bf16.mxu0 0
    %526 = vmatpush1.bf16.msra.mxu0 0
    %527 = vmatprep.subr.bf16.mxu0 0
    %528 = vmatpush1.bf16.msra.mxu0 0
    %529 = vmatprep.subr.bf16.mxu0 0
    %530 = vmatpush1.bf16.msra.mxu0 0
    %531 = vmatprep.subr.bf16.mxu0 0
    %532 = vmatpush1.bf16.msra.mxu0 0
    %533 = vmatprep.subr.bf16.mxu0 0
    %534 = vmatpush1.bf16.msra.mxu0 0
    %535 = vmatprep.subr.bf16.mxu0 0
    %536 = vmatpush1.bf16.msra.mxu0 0
    %537 = vmatprep.subr.bf16.mxu0 0
    %538 = vmatpush1.bf16.msra.mxu0 0
    %539 = vmatprep.subr.bf16.mxu0 0
    %540 = vmatpush1.bf16.msra.mxu0 0
    %541 = vmatprep.subr.bf16.mxu0 0
    %542 = vmatpush1.bf16.msra.mxu0 0
    %543 = vmatprep.subr.bf16.mxu0 0
    %544 = vmatpush1.bf16.msra.mxu0 0
    %545 = vmatprep.subr.bf16.mxu0 0
    %546 = vmatpush1.bf16.msra.mxu0 0
    %547 = vmatprep.subr.bf16.mxu0 0
    %548 = vmatpush1.bf16.msra.mxu0 0
    %549 = vmatprep.subr.bf16.mxu0 0
    %550 = vmatpush1.bf16.msra.mxu0 0
    %551 = vmatprep.mubr.bf16.mxu0 0
    %552 = vmatmul.mubr.bf16.gmra.mrb[0].mxu0 %v514
    %v553 = vpop.f32.mrb[0].mxu0
    %v554 = vadd.f32 0.0, %v553
    %v555 = vpop.f32.mrb[0].mxu0
    %v556 = vpop.f32.mrb[0].mxu0
    %v557 = vpop.f32.mrb[0].mxu0
    %558 = vdwg.mxu0
    %559 = vrot.lane.b32.xlu0 %v223, 104
    %v560 = vpop.permute.xlu0 %559
    %561 = vrot.lane.b32.xlu0 %v224, 104
    %v562 = vpop.permute.xlu0 %561
    %v564 = vsel %vm229, %v560, 0
    %v567 = vsel %vm229, %v562, 0
    %569 = vmatprep.subr.bf16.mxu0 0
    %570 = vmatpush1.bf16.xpose.msra.mxu0 %v567
    %571 = vmatprep.subr.bf16.mxu0 0
    %572 = vmatpush1.bf16.xpose.msra.mxu0 0
    %573 = vmatprep.subr.bf16.mxu0 0
    %574 = vmatpush1.bf16.xpose.msra.mxu0 0
    %575 = vmatprep.subr.bf16.mxu0 0
    %576 = vmatpush1.bf16.xpose.msra.mxu0 0
    %577 = vmatprep.subr.bf16.mxu0 0
    %578 = vmatpush1.bf16.xpose.msra.mxu0 0
    %579 = vmatprep.subr.bf16.mxu0 0
    %580 = vmatpush1.bf16.xpose.msra.mxu0 0
    %581 = vmatprep.subr.bf16.mxu0 0
    %582 = vmatpush1.bf16.xpose.msra.mxu0 0
    %583 = vmatprep.subr.bf16.mxu0 0
    %584 = vmatpush1.bf16.xpose.msra.mxu0 0
    %585 = vmatprep.subr.bf16.mxu0 0
    %586 = vmatpush1.bf16.xpose.msra.mxu0 0
    %587 = vmatprep.subr.bf16.mxu0 0
    %588 = vmatpush1.bf16.xpose.msra.mxu0 0
    %589 = vmatprep.subr.bf16.mxu0 0
    %590 = vmatpush1.bf16.xpose.msra.mxu0 0
    %591 = vmatprep.subr.bf16.mxu0 0
    %592 = vmatpush1.bf16.xpose.msra.mxu0 0
    %593 = vmatprep.subr.bf16.mxu0 0
    %594 = vmatpush1.bf16.xpose.msra.mxu0 0
    %595 = vmatprep.subr.bf16.mxu0 0
    %596 = vmatpush1.bf16.xpose.msra.mxu0 0
    %597 = vmatprep.subr.bf16.mxu0 0
    %598 = vmatpush1.bf16.xpose.msra.mxu0 0
    %599 = vmatprep.subr.bf16.mxu0 0
    %600 = vmatpush1.bf16.xpose.msra.mxu0 0
    %601 = vmatprep.mubr.bf16.mxu0 0
    %602 = vmatmul.mubr.bf16.gmra.mrb[0].mxu0 %v564
    %v603 = vpop.f32.mrb[0].mxu0
    %v604 = vadd.f32 %v228, %v603
    %v605 = vpop.f32.mrb[0].mxu0
    %v606 = vpop.f32.mrb[0].mxu0
    %v607 = vpop.f32.mrb[0].mxu0
    %608 = vdwg.mxu0
    %v609 = vsel %vm229, %v604, -inf
    %610 = vmax.xlane.f32.xlu0 %v609
    %v611 = vpop.xlane.xlu0 %610
    %v612 = vsub.f32 %v604, %v611
    %v613 = vmul.f32 %v612, 1.442695
    %v614 = vpow.pop %v613
    %v615 = vsel %vm229, %v614, 0.0
    %616 = vadd.xlane.f32.xlu0 %v615
    %v617 = vpop.xlane.xlu0 %616
    %v618 = vrcp.pop %v617
    %v619 = vmul.f32 %v614, %v618
    %v620 = vpack.c.bf16 %v619, %v619
    %621 = vrot.lane.b32.xlu0 %v288, 104
    %v622 = vpop.permute.xlu0 %621
    %v624 = vsel %vm229, %v620, 0
    %v627 = vsel %vm292, %v622, 0
    %629 = vmatprep.subr.bf16.mxu0 0
    %630 = vmatpush1.bf16.msra.mxu0 %v627
    %631 = vmatprep.subr.bf16.mxu0 0
    %632 = vmatpush1.bf16.msra.mxu0 0
    %633 = vmatprep.subr.bf16.mxu0 0
    %634 = vmatpush1.bf16.msra.mxu0 0
    %635 = vmatprep.subr.bf16.mxu0 0
    %636 = vmatpush1.bf16.msra.mxu0 0
    %637 = vmatprep.subr.bf16.mxu0 0
    %638 = vmatpush1.bf16.msra.mxu0 0
    %639 = vmatprep.subr.bf16.mxu0 0
    %640 = vmatpush1.bf16.msra.mxu0 0
    %641 = vmatprep.subr.bf16.mxu0 0
    %642 = vmatpush1.bf16.msra.mxu0 0
    %643 = vmatprep.subr.bf16.mxu0 0
    %644 = vmatpush1.bf16.msra.mxu0 0
    %645 = vmatprep.subr.bf16.mxu0 0
    %646 = vmatpush1.bf16.msra.mxu0 0
    %647 = vmatprep.subr.bf16.mxu0 0
    %648 = vmatpush1.bf16.msra.mxu0 0
    %649 = vmatprep.subr.bf16.mxu0 0
    %650 = vmatpush1.bf16.msra.mxu0 0
    %651 = vmatprep.subr.bf16.mxu0 0
    %652 = vmatpush1.bf16.msra.mxu0 0
    %653 = vmatprep.subr.bf16.mxu0 0
    %654 = vmatpush1.bf16.msra.mxu0 0
    %655 = vmatprep.subr.bf16.mxu0 0
    %656 = vmatpush1.bf16.msra.mxu0 0
    %657 = vmatprep.subr.bf16.mxu0 0
    %658 = vmatpush1.bf16.msra.mxu0 0
    %659 = vmatprep.subr.bf16.mxu0 0
    %660 = vmatpush1.bf16.msra.mxu0 0
    %661 = vmatprep.mubr.bf16.mxu0 0
    %662 = vmatmul.mubr.bf16.gmra.mrb[0].mxu0 %v624
    %v663 = vpop.f32.mrb[0].mxu0
    %v664 = vadd.f32 0.0, %v663
    %v665 = vpop.f32.mrb[0].mxu0
    %v666 = vpop.f32.mrb[0].mxu0
    %v667 = vpop.f32.mrb[0].mxu0
    %668 = vdwg.mxu0
    %670 = vrot.lane.b32.xlu0 %v444, 8
    %v671 = vpop.permute.xlu0 %670
    %674 = vrot.lane.b32.xlu0 %v554, 16
    %v675 = vpop.permute.xlu0 %674
    %678 = vrot.lane.b32.xlu0 %v664, 24
    %v679 = vpop.permute.xlu0 %678
    %v681 = vsel %vm229, %v331, %v671
    %vm682 = vcmask 130048
    %v683 = vsel %vm682, %v681, %v675
    %vm684 = vcmask 195584
    %v685 = vsel %vm684, %v683, %v679
    %v686 = vpack.c.bf16 %v178, %v178
    %v687 = vpack.c.bf16 %v180, %v180
    %v688 = vlaneseq
    %v689 = vshrl.u32 %v688, 7
    %v690 = vsub.s32 1, %v689
    %v691 = vrot.slane %v79, %v690
    %v693 = vsel %vm229, %v686, 0
    %v696 = vsel %vm229, %v687, 0
    %698 = vmatprep.subr.bf16.mxu0 0
    %699 = vmatpush1.bf16.xpose.msra.mxu0 %v696
    %700 = vmatprep.subr.bf16.mxu0 0
    %701 = vmatpush1.bf16.xpose.msra.mxu0 0
    %702 = vmatprep.subr.bf16.mxu0 0
    %703 = vmatpush1.bf16.xpose.msra.mxu0 0
    %704 = vmatprep.subr.bf16.mxu0 0
    %705 = vmatpush1.bf16.xpose.msra.mxu0 0
    %706 = vmatprep.subr.bf16.mxu0 0
    %707 = vmatpush1.bf16.xpose.msra.mxu0 0
    %708 = vmatprep.subr.bf16.mxu0 0
    %709 = vmatpush1.bf16.xpose.msra.mxu0 0
    %710 = vmatprep.subr.bf16.mxu0 0
    %711 = vmatpush1.bf16.xpose.msra.mxu0 0
    %712 = vmatprep.subr.bf16.mxu0 0
    %713 = vmatpush1.bf16.xpose.msra.mxu0 0
    %714 = vmatprep.subr.bf16.mxu0 0
    %715 = vmatpush1.bf16.xpose.msra.mxu0 0
    %716 = vmatprep.subr.bf16.mxu0 0
    %717 = vmatpush1.bf16.xpose.msra.mxu0 0
    %718 = vmatprep.subr.bf16.mxu0 0
    %719 = vmatpush1.bf16.xpose.msra.mxu0 0
    %720 = vmatprep.subr.bf16.mxu0 0
    %721 = vmatpush1.bf16.xpose.msra.mxu0 0
    %722 = vmatprep.subr.bf16.mxu0 0
    %723 = vmatpush1.bf16.xpose.msra.mxu0 0
    %724 = vmatprep.subr.bf16.mxu0 0
    %725 = vmatpush1.bf16.xpose.msra.mxu0 0
    %726 = vmatprep.subr.bf16.mxu0 0
    %727 = vmatpush1.bf16.xpose.msra.mxu0 0
    %728 = vmatprep.subr.bf16.mxu0 0
    %729 = vmatpush1.bf16.xpose.msra.mxu0 0
    %730 = vmatprep.mubr.bf16.mxu0 0
    %731 = vmatmul.mubr.bf16.gmra.mrb[0].mxu0 %v693
    %v732 = vpop.f32.mrb[0].mxu0
    %v733 = vadd.f32 %v691, %v732
    %v734 = vpop.f32.mrb[0].mxu0
    %v735 = vpop.f32.mrb[0].mxu0
    %v736 = vpop.f32.mrb[0].mxu0
    %737 = vdwg.mxu0
    %v738 = vsel %vm229, %v733, -inf
    %739 = vmax.xlane.f32.xlu0 %v738
    %v740 = vpop.xlane.xlu0 %739
    %v741 = vsub.f32 %v733, %v740
    %v742 = vmul.f32 %v741, 1.442695
    %v743 = vpow.pop %v742
    %v744 = vsel %vm229, %v743, 0.0
    %745 = vadd.xlane.f32.xlu0 %v744
    %v746 = vpop.xlane.xlu0 %745
    %v747 = vrcp.pop %v746
    %v748 = vmul.f32 %v743, %v747
    %v749 = vpack.c.bf16 %v748, %v748
    %v750 = vpack.c.bf16 %v220, %v220
    %v752 = vsel %vm229, %v749, 0
    %v755 = vsel %vm292, %v750, 0
    %757 = vmatprep.subr.bf16.mxu0 0
    %758 = vmatpush1.bf16.msra.mxu0 %v755
    %759 = vmatprep.subr.bf16.mxu0 0
    %760 = vmatpush1.bf16.msra.mxu0 0
    %761 = vmatprep.subr.bf16.mxu0 0
    %762 = vmatpush1.bf16.msra.mxu0 0
    %763 = vmatprep.subr.bf16.mxu0 0
    %764 = vmatpush1.bf16.msra.mxu0 0
    %765 = vmatprep.subr.bf16.mxu0 0
    %766 = vmatpush1.bf16.msra.mxu0 0
    %767 = vmatprep.subr.bf16.mxu0 0
    %768 = vmatpush1.bf16.msra.mxu0 0
    %769 = vmatprep.subr.bf16.mxu0 0
    %770 = vmatpush1.bf16.msra.mxu0 0
    %771 = vmatprep.subr.bf16.mxu0 0
    %772 = vmatpush1.bf16.msra.mxu0 0
    %773 = vmatprep.subr.bf16.mxu0 0
    %774 = vmatpush1.bf16.msra.mxu0 0
    %775 = vmatprep.subr.bf16.mxu0 0
    %776 = vmatpush1.bf16.msra.mxu0 0
    %777 = vmatprep.subr.bf16.mxu0 0
    %778 = vmatpush1.bf16.msra.mxu0 0
    %779 = vmatprep.subr.bf16.mxu0 0
    %780 = vmatpush1.bf16.msra.mxu0 0
    %781 = vmatprep.subr.bf16.mxu0 0
    %782 = vmatpush1.bf16.msra.mxu0 0
    %783 = vmatprep.subr.bf16.mxu0 0
    %784 = vmatpush1.bf16.msra.mxu0 0
    %785 = vmatprep.subr.bf16.mxu0 0
    %786 = vmatpush1.bf16.msra.mxu0 0
    %787 = vmatprep.subr.bf16.mxu0 0
    %788 = vmatpush1.bf16.msra.mxu0 0
    %789 = vmatprep.mubr.bf16.mxu0 0
    %790 = vmatmul.mubr.bf16.gmra.mrb[0].mxu0 %v752
    %v791 = vpop.f32.mrb[0].mxu0
    %v792 = vadd.f32 0.0, %v791
    %v793 = vpop.f32.mrb[0].mxu0
    %v794 = vpop.f32.mrb[0].mxu0
    %v795 = vpop.f32.mrb[0].mxu0
    %796 = vdwg.mxu0
    %798 = vrot.lane.b32.xlu0 %v686, 120
    %v799 = vpop.permute.xlu0 %798
    %801 = vrot.lane.b32.xlu0 %v687, 120
    %v802 = vpop.permute.xlu0 %801
    %v804 = vsel %vm229, %v799, 0
    %v807 = vsel %vm229, %v802, 0
    %809 = vmatprep.subr.bf16.mxu0 0
    %810 = vmatpush1.bf16.xpose.msra.mxu0 %v807
    %811 = vmatprep.subr.bf16.mxu0 0
    %812 = vmatpush1.bf16.xpose.msra.mxu0 0
    %813 = vmatprep.subr.bf16.mxu0 0
    %814 = vmatpush1.bf16.xpose.msra.mxu0 0
    %815 = vmatprep.subr.bf16.mxu0 0
    %816 = vmatpush1.bf16.xpose.msra.mxu0 0
    %817 = vmatprep.subr.bf16.mxu0 0
    %818 = vmatpush1.bf16.xpose.msra.mxu0 0
    %819 = vmatprep.subr.bf16.mxu0 0
    %820 = vmatpush1.bf16.xpose.msra.mxu0 0
    %821 = vmatprep.subr.bf16.mxu0 0
    %822 = vmatpush1.bf16.xpose.msra.mxu0 0
    %823 = vmatprep.subr.bf16.mxu0 0
    %824 = vmatpush1.bf16.xpose.msra.mxu0 0
    %825 = vmatprep.subr.bf16.mxu0 0
    %826 = vmatpush1.bf16.xpose.msra.mxu0 0
    %827 = vmatprep.subr.bf16.mxu0 0
    %828 = vmatpush1.bf16.xpose.msra.mxu0 0
    %829 = vmatprep.subr.bf16.mxu0 0
    %830 = vmatpush1.bf16.xpose.msra.mxu0 0
    %831 = vmatprep.subr.bf16.mxu0 0
    %832 = vmatpush1.bf16.xpose.msra.mxu0 0
    %833 = vmatprep.subr.bf16.mxu0 0
    %834 = vmatpush1.bf16.xpose.msra.mxu0 0
    %835 = vmatprep.subr.bf16.mxu0 0
    %836 = vmatpush1.bf16.xpose.msra.mxu0 0
    %837 = vmatprep.subr.bf16.mxu0 0
    %838 = vmatpush1.bf16.xpose.msra.mxu0 0
    %839 = vmatprep.subr.bf16.mxu0 0
    %840 = vmatpush1.bf16.xpose.msra.mxu0 0
    %841 = vmatprep.mubr.bf16.mxu0 0
    %842 = vmatmul.mubr.bf16.gmra.mrb[0].mxu0 %v804
    %v843 = vpop.f32.mrb[0].mxu0
    %v844 = vadd.f32 %v691, %v843
    %v845 = vpop.f32.mrb[0].mxu0
    %v846 = vpop.f32.mrb[0].mxu0
    %v847 = vpop.f32.mrb[0].mxu0
    %848 = vdwg.mxu0
    %v849 = vsel %vm229, %v844, -inf
    %850 = vmax.xlane.f32.xlu0 %v849
    %v851 = vpop.xlane.xlu0 %850
    %v852 = vsub.f32 %v844, %v851
    %v853 = vmul.f32 %v852, 1.442695
    %v854 = vpow.pop %v853
    %v855 = vsel %vm229, %v854, 0.0
    %856 = vadd.xlane.f32.xlu0 %v855
    %v857 = vpop.xlane.xlu0 %856
    %v858 = vrcp.pop %v857
    %v859 = vmul.f32 %v854, %v858
    %v860 = vpack.c.bf16 %v859, %v859
    %862 = vrot.lane.b32.xlu0 %v750, 120
    %v863 = vpop.permute.xlu0 %862
    %v865 = vsel %vm229, %v860, 0
    %v868 = vsel %vm292, %v863, 0
    %870 = vmatprep.subr.bf16.mxu0 0
    %871 = vmatpush1.bf16.msra.mxu0 %v868
    %872 = vmatprep.subr.bf16.mxu0 0
    %873 = vmatpush1.bf16.msra.mxu0 0
    %874 = vmatprep.subr.bf16.mxu0 0
    %875 = vmatpush1.bf16.msra.mxu0 0
    %876 = vmatprep.subr.bf16.mxu0 0
    %877 = vmatpush1.bf16.msra.mxu0 0
    %878 = vmatprep.subr.bf16.mxu0 0
    %879 = vmatpush1.bf16.msra.mxu0 0
    %880 = vmatprep.subr.bf16.mxu0 0
    %881 = vmatpush1.bf16.msra.mxu0 0
    %882 = vmatprep.subr.bf16.mxu0 0
    %883 = vmatpush1.bf16.msra.mxu0 0
    %884 = vmatprep.subr.bf16.mxu0 0
    %885 = vmatpush1.bf16.msra.mxu0 0
    %886 = vmatprep.subr.bf16.mxu0 0
    %887 = vmatpush1.bf16.msra.mxu0 0
    %888 = vmatprep.subr.bf16.mxu0 0
    %889 = vmatpush1.bf16.msra.mxu0 0
    %890 = vmatprep.subr.bf16.mxu0 0
    %891 = vmatpush1.bf16.msra.mxu0 0
    %892 = vmatprep.subr.bf16.mxu0 0
    %893 = vmatpush1.bf16.msra.mxu0 0
    %894 = vmatprep.subr.bf16.mxu0 0
    %895 = vmatpush1.bf16.msra.mxu0 0
    %896 = vmatprep.subr.bf16.mxu0 0
    %897 = vmatpush1.bf16.msra.mxu0 0
    %898 = vmatprep.subr.bf16.mxu0 0
    %899 = vmatpush1.bf16.msra.mxu0 0
    %900 = vmatprep.subr.bf16.mxu0 0
    %901 = vmatpush1.bf16.msra.mxu0 0
    %902 = vmatprep.mubr.bf16.mxu0 0
    %903 = vmatmul.mubr.bf16.gmra.mrb[0].mxu0 %v865
    %v904 = vpop.f32.mrb[0].mxu0
    %v905 = vadd.f32 0.0, %v904
    %v906 = vpop.f32.mrb[0].mxu0
    %v907 = vpop.f32.mrb[0].mxu0
    %v908 = vpop.f32.mrb[0].mxu0
    %909 = vdwg.mxu0
    %910 = vrot.lane.b32.xlu0 %v686, 112
    %v911 = vpop.permute.xlu0 %910
    %912 = vrot.lane.b32.xlu0 %v687, 112
    %v913 = vpop.permute.xlu0 %912
    %v915 = vsel %vm229, %v911, 0
    %v918 = vsel %vm229, %v913, 0
    %920 = vmatprep.subr.bf16.mxu0 0
    %921 = vmatpush1.bf16.xpose.msra.mxu0 %v918
    %922 = vmatprep.subr.bf16.mxu0 0
    %923 = vmatpush1.bf16.xpose.msra.mxu0 0
    %924 = vmatprep.subr.bf16.mxu0 0
    %925 = vmatpush1.bf16.xpose.msra.mxu0 0
    %926 = vmatprep.subr.bf16.mxu0 0
    %927 = vmatpush1.bf16.xpose.msra.mxu0 0
    %928 = vmatprep.subr.bf16.mxu0 0
    %929 = vmatpush1.bf16.xpose.msra.mxu0 0
    %930 = vmatprep.subr.bf16.mxu0 0
    %931 = vmatpush1.bf16.xpose.msra.mxu0 0
    %932 = vmatprep.subr.bf16.mxu0 0
    %933 = vmatpush1.bf16.xpose.msra.mxu0 0
    %934 = vmatprep.subr.bf16.mxu0 0
    %935 = vmatpush1.bf16.xpose.msra.mxu0 0
    %936 = vmatprep.subr.bf16.mxu0 0
    %937 = vmatpush1.bf16.xpose.msra.mxu0 0
    %938 = vmatprep.subr.bf16.mxu0 0
    %939 = vmatpush1.bf16.xpose.msra.mxu0 0
    %940 = vmatprep.subr.bf16.mxu0 0
    %941 = vmatpush1.bf16.xpose.msra.mxu0 0
    %942 = vmatprep.subr.bf16.mxu0 0
    %943 = vmatpush1.bf16.xpose.msra.mxu0 0
    %944 = vmatprep.subr.bf16.mxu0 0
    %945 = vmatpush1.bf16.xpose.msra.mxu0 0
    %946 = vmatprep.subr.bf16.mxu0 0
    %947 = vmatpush1.bf16.xpose.msra.mxu0 0
    %948 = vmatprep.subr.bf16.mxu0 0
    %949 = vmatpush1.bf16.xpose.msra.mxu0 0
    %950 = vmatprep.subr.bf16.mxu0 0
    %951 = vmatpush1.bf16.xpose.msra.mxu0 0
    %952 = vmatprep.mubr.bf16.mxu0 0
    %953 = vmatmul.mubr.bf16.gmra.mrb[0].mxu0 %v915
    %v954 = vpop.f32.mrb[0].mxu0
    %v955 = vadd.f32 %v691, %v954
    %v956 = vpop.f32.mrb[0].mxu0
    %v957 = vpop.f32.mrb[0].mxu0
    %v958 = vpop.f32.mrb[0].mxu0
    %959 = vdwg.mxu0
    %v960 = vsel %vm229, %v955, -inf
    %961 = vmax.xlane.f32.xlu0 %v960
    %v962 = vpop.xlane.xlu0 %961
    %v963 = vsub.f32 %v955, %v962
    %v964 = vmul.f32 %v963, 1.442695
    %v965 = vpow.pop %v964
    %v966 = vsel %vm229, %v965, 0.0
    %967 = vadd.xlane.f32.xlu0 %v966
    %v968 = vpop.xlane.xlu0 %967
    %v969 = vrcp.pop %v968
    %v970 = vmul.f32 %v965, %v969
    %v971 = vpack.c.bf16 %v970, %v970
    %972 = vrot.lane.b32.xlu0 %v750, 112
    %v973 = vpop.permute.xlu0 %972
    %v975 = vsel %vm229, %v971, 0
    %v978 = vsel %vm292, %v973, 0
    %980 = vmatprep.subr.bf16.mxu0 0
    %981 = vmatpush1.bf16.msra.mxu0 %v978
    %982 = vmatprep.subr.bf16.mxu0 0
    %983 = vmatpush1.bf16.msra.mxu0 0
    %984 = vmatprep.subr.bf16.mxu0 0
    %985 = vmatpush1.bf16.msra.mxu0 0
    %986 = vmatprep.subr.bf16.mxu0 0
    %987 = vmatpush1.bf16.msra.mxu0 0
    %988 = vmatprep.subr.bf16.mxu0 0
    %989 = vmatpush1.bf16.msra.mxu0 0
    %990 = vmatprep.subr.bf16.mxu0 0
    %991 = vmatpush1.bf16.msra.mxu0 0
    %992 = vmatprep.subr.bf16.mxu0 0
    %993 = vmatpush1.bf16.msra.mxu0 0
    %994 = vmatprep.subr.bf16.mxu0 0
    %995 = vmatpush1.bf16.msra.mxu0 0
    %996 = vmatprep.subr.bf16.mxu0 0
    %997 = vmatpush1.bf16.msra.mxu0 0
    %998 = vmatprep.subr.bf16.mxu0 0
    %999 = vmatpush1.bf16.msra.mxu0 0
    %1000 = vmatprep.subr.bf16.mxu0 0
    %1001 = vmatpush1.bf16.msra.mxu0 0
    %1002 = vmatprep.subr.bf16.mxu0 0
    %1003 = vmatpush1.bf16.msra.mxu0 0
    %1004 = vmatprep.subr.bf16.mxu0 0
    %1005 = vmatpush1.bf16.msra.mxu0 0
    %1006 = vmatprep.subr.bf16.mxu0 0
    %1007 = vmatpush1.bf16.msra.mxu0 0
    %1008 = vmatprep.subr.bf16.mxu0 0
    %1009 = vmatpush1.bf16.msra.mxu0 0
    %1010 = vmatprep.subr.bf16.mxu0 0
    %1011 = vmatpush1.bf16.msra.mxu0 0
    %1012 = vmatprep.mubr.bf16.mxu0 0
    %1013 = vmatmul.mubr.bf16.gmra.mrb[0].mxu0 %v975
    %v1014 = vpop.f32.mrb[0].mxu0
    %v1015 = vadd.f32 0.0, %v1014
    %v1016 = vpop.f32.mrb[0].mxu0
    %v1017 = vpop.f32.mrb[0].mxu0
    %v1018 = vpop.f32.mrb[0].mxu0
    %1019 = vdwg.mxu0
    %1020 = vrot.lane.b32.xlu0 %v686, 104
    %v1021 = vpop.permute.xlu0 %1020
    %1022 = vrot.lane.b32.xlu0 %v687, 104
    %v1023 = vpop.permute.xlu0 %1022
    %v1025 = vsel %vm229, %v1021, 0
    %v1028 = vsel %vm229, %v1023, 0
    %1030 = vmatprep.subr.bf16.mxu0 0
    %1031 = vmatpush1.bf16.xpose.msra.mxu0 %v1028
    %1032 = vmatprep.subr.bf16.mxu0 0
    %1033 = vmatpush1.bf16.xpose.msra.mxu0 0
    %1034 = vmatprep.subr.bf16.mxu0 0
    %1035 = vmatpush1.bf16.xpose.msra.mxu0 0
    %1036 = vmatprep.subr.bf16.mxu0 0
    %1037 = vmatpush1.bf16.xpose.msra.mxu0 0
    %1038 = vmatprep.subr.bf16.mxu0 0
    %1039 = vmatpush1.bf16.xpose.msra.mxu0 0
    %1040 = vmatprep.subr.bf16.mxu0 0
    %1041 = vmatpush1.bf16.xpose.msra.mxu0 0
    %1042 = vmatprep.subr.bf16.mxu0 0
    %1043 = vmatpush1.bf16.xpose.msra.mxu0 0
    %1044 = vmatprep.subr.bf16.mxu0 0
    %1045 = vmatpush1.bf16.xpose.msra.mxu0 0
    %1046 = vmatprep.subr.bf16.mxu0 0
    %1047 = vmatpush1.bf16.xpose.msra.mxu0 0
    %1048 = vmatprep.subr.bf16.mxu0 0
    %1049 = vmatpush1.bf16.xpose.msra.mxu0 0
    %1050 = vmatprep.subr.bf16.mxu0 0
    %1051 = vmatpush1.bf16.xpose.msra.mxu0 0
    %1052 = vmatprep.subr.bf16.mxu0 0
    %1053 = vmatpush1.bf16.xpose.msra.mxu0 0
    %1054 = vmatprep.subr.bf16.mxu0 0
    %1055 = vmatpush1.bf16.xpose.msra.mxu0 0
    %1056 = vmatprep.subr.bf16.mxu0 0
    %1057 = vmatpush1.bf16.xpose.msra.mxu0 0
    %1058 = vmatprep.subr.bf16.mxu0 0
    %1059 = vmatpush1.bf16.xpose.msra.mxu0 0
    %1060 = vmatprep.subr.bf16.mxu0 0
    %1061 = vmatpush1.bf16.xpose.msra.mxu0 0
    %1062 = vmatprep.mubr.bf16.mxu0 0
    %1063 = vmatmul.mubr.bf16.gmra.mrb[0].mxu0 %v1025
    %v1064 = vpop.f32.mrb[0].mxu0
    %v1065 = vadd.f32 %v691, %v1064
    %v1066 = vpop.f32.mrb[0].mxu0
    %v1067 = vpop.f32.mrb[0].mxu0
    %v1068 = vpop.f32.mrb[0].mxu0
    %1069 = vdwg.mxu0
    %v1070 = vsel %vm229, %v1065, -inf
    %1071 = vmax.xlane.f32.xlu0 %v1070
    %v1072 = vpop.xlane.xlu0 %1071
    %v1073 = vsub.f32 %v1065, %v1072
    %v1074 = vmul.f32 %v1073, 1.442695
    %v1075 = vpow.pop %v1074
    %v1076 = vsel %vm229, %v1075, 0.0
    %1077 = vadd.xlane.f32.xlu0 %v1076
    %v1078 = vpop.xlane.xlu0 %1077
    %v1079 = vrcp.pop %v1078
    %v1080 = vmul.f32 %v1075, %v1079
    %v1081 = vpack.c.bf16 %v1080, %v1080
    %1082 = vrot.lane.b32.xlu0 %v750, 104
    %v1083 = vpop.permute.xlu0 %1082
    %v1085 = vsel %vm229, %v1081, 0
    %v1088 = vsel %vm292, %v1083, 0
    %1090 = vmatprep.subr.bf16.mxu0 0
    %1091 = vmatpush1.bf16.msra.mxu0 %v1088
    %1092 = vmatprep.subr.bf16.mxu0 0
    %1093 = vmatpush1.bf16.msra.mxu0 0
    %1094 = vmatprep.subr.bf16.mxu0 0
    %1095 = vmatpush1.bf16.msra.mxu0 0
    %1096 = vmatprep.subr.bf16.mxu0 0
    %1097 = vmatpush1.bf16.msra.mxu0 0
    %1098 = vmatprep.subr.bf16.mxu0 0
    %1099 = vmatpush1.bf16.msra.mxu0 0
    %1100 = vmatprep.subr.bf16.mxu0 0
    %1101 = vmatpush1.bf16.msra.mxu0 0
    %1102 = vmatprep.subr.bf16.mxu0 0
    %1103 = vmatpush1.bf16.msra.mxu0 0
    %1104 = vmatprep.subr.bf16.mxu0 0
    %1105 = vmatpush1.bf16.msra.mxu0 0
    %1106 = vmatprep.subr.bf16.mxu0 0
    %1107 = vmatpush1.bf16.msra.mxu0 0
    %1108 = vmatprep.subr.bf16.mxu0 0
    %1109 = vmatpush1.bf16.msra.mxu0 0
    %1110 = vmatprep.subr.bf16.mxu0 0
    %1111 = vmatpush1.bf16.msra.mxu0 0
    %1112 = vmatprep.subr.bf16.mxu0 0
    %1113 = vmatpush1.bf16.msra.mxu0 0
    %1114 = vmatprep.subr.bf16.mxu0 0
    %1115 = vmatpush1.bf16.msra.mxu0 0
    %1116 = vmatprep.subr.bf16.mxu0 0
    %1117 = vmatpush1.bf16.msra.mxu0 0
    %1118 = vmatprep.subr.bf16.mxu0 0
    %1119 = vmatpush1.bf16.msra.mxu0 0
    %1120 = vmatprep.subr.bf16.mxu0 0
    %1121 = vmatpush1.bf16.msra.mxu0 0
    %1122 = vmatprep.mubr.bf16.mxu0 0
    %1123 = vmatmul.mubr.bf16.gmra.mrb[0].mxu0 %v1085
    %v1124 = vpop.f32.mrb[0].mxu0
    %v1125 = vadd.f32 0.0, %v1124
    %v1126 = vpop.f32.mrb[0].mxu0
    %v1127 = vpop.f32.mrb[0].mxu0
    %v1128 = vpop.f32.mrb[0].mxu0
    %1129 = vdwg.mxu0
    %1131 = vrot.lane.b32.xlu0 %v905, 8
    %v1132 = vpop.permute.xlu0 %1131
    %1135 = vrot.lane.b32.xlu0 %v1015, 16
    %v1136 = vpop.permute.xlu0 %1135
    %1139 = vrot.lane.b32.xlu0 %v1125, 24
    %v1140 = vpop.permute.xlu0 %1139
    %v1142 = vsel %vm229, %v792, %v1132
    %v1143 = vsel %vm682, %v1142, %v1136
    %v1144 = vsel %vm684, %v1143, %v1140
    %v1145 = vld [vmem:[%s5] sm:$0xf]
    %v1146 = vld [vmem:[%s5 + $0x4] sm:$0xf]
    %v1147 = vld [vmem:[%s5 + $0x8] sm:$0xf]
    %v1148 = vld [vmem:[%s5 + $0xc] sm:$0xf]
    %v1149 = vpack.c.bf16 %v1144, %v685
    %v1150 = vlaneseq
    %v1151 = vshrl.u32 %v1150, 7
    %v1152 = vsub.s32 1, %v1151
    %v1153 = vrot.slane %v80, %v1152
    %v1158 = vunpack.c.l.b16 %v1145
    %v1159 = vunpack.c.l.b16 %v1146
    %v1160 = vunpack.c.l.b16 %v1147
    %v1161 = vunpack.c.l.b16 %v1148
    %v1162 = vpack.c.b16 %v1159, %v1158
    %v1163 = vpack.c.b16 %v1161, %v1160
    %v1167 = vsel %vm37, %v1149, 0
    %1169 = vmatprep.subr.bf16.mxu0 0
    %1170 = vmatpush1.bf16.msra.mxu0 %v1162
    %1171 = vmatprep.subr.bf16.mxu0 0
    %1172 = vmatpush1.bf16.msra.mxu0 %v1163
    %1173 = vmatprep.subr.bf16.mxu0 0
    %1174 = vmatpush1.bf16.msra.mxu0 0
    %1175 = vmatprep.subr.bf16.mxu0 0
    %1176 = vmatpush1.bf16.msra.mxu0 0
    %1177 = vmatprep.subr.bf16.mxu0 0
    %1178 = vmatpush1.bf16.msra.mxu0 0
    %1179 = vmatprep.subr.bf16.mxu0 0
    %1180 = vmatpush1.bf16.msra.mxu0 0
    %1181 = vmatprep.subr.bf16.mxu0 0
    %1182 = vmatpush1.bf16.msra.mxu0 0
    %1183 = vmatprep.subr.bf16.mxu0 0
    %1184 = vmatpush1.bf16.msra.mxu0 0
    %1185 = vmatprep.subr.bf16.mxu0 0
    %1186 = vmatpush1.bf16.msra.mxu0 0
    %1187 = vmatprep.subr.bf16.mxu0 0
    %1188 = vmatpush1.bf16.msra.mxu0 0
    %1189 = vmatprep.subr.bf16.mxu0 0
    %1190 = vmatpush1.bf16.msra.mxu0 0
    %1191 = vmatprep.subr.bf16.mxu0 0
    %1192 = vmatpush1.bf16.msra.mxu0 0
    %1193 = vmatprep.subr.bf16.mxu0 0
    %1194 = vmatpush1.bf16.msra.mxu0 0
    %1195 = vmatprep.subr.bf16.mxu0 0
    %1196 = vmatpush1.bf16.msra.mxu0 0
    %1197 = vmatprep.subr.bf16.mxu0 0
    %1198 = vmatpush1.bf16.msra.mxu0 0
    %1199 = vmatprep.subr.bf16.mxu0 0
    %1200 = vmatpush1.bf16.msra.mxu0 0
    %1201 = vmatprep.mubr.bf16.mxu0 0
    %1202 = vmatmul.mubr.bf16.gmra.mrb[0].mxu0 %v1167
    %v1203 = vpop.f32.mrb[0].mxu0
    %v1204 = vadd.f32 %v1153, %v1203
    %v1205 = vpop.f32.mrb[0].mxu0
    %v1206 = vpop.f32.mrb[0].mxu0
    %v1207 = vadd.f32 %v1153, %v1206
    %v1208 = vpop.f32.mrb[0].mxu0
    %1209 = vdwg.mxu0
    %v1210 = vadd.f32 %v1204, %v75
    %v1211 = vadd.f32 %v1207, %v76
    %v1212 = vsel %vm37, %v1210, 0.0
    %1213 = vadd.xlane.f32.xlu0 %v1212
    %v1214 = vpop.xlane.xlu0 %1213
    %v1215 = vsel %vm37, %v1211, 0.0
    %1216 = vadd.xlane.f32.xlu0 %v1215
    %v1217 = vpop.xlane.xlu0 %1216
    %v1218 = vmul.f32 %v1214, %v44
    %v1219 = vmul.f32 %v1217, %v44
    %v1220 = vsub.f32 %v1210, %v1218
    %v1221 = vsub.f32 %v1211, %v1219
    %v1222 = vmul.f32 %v1220, %v1220
    %v1223 = vmul.f32 %v1221, %v1221
    %v1224 = vsel %vm37, %v1222, 0.0
    %1225 = vadd.xlane.f32.xlu0 %v1224
    %v1226 = vpop.xlane.xlu0 %1225
    %v1227 = vsel %vm37, %v1223, 0.0
    %1228 = vadd.xlane.f32.xlu0 %v1227
    %v1229 = vpop.xlane.xlu0 %1228
    %v1230 = vmul.f32 %v1226, %v44
    %v1231 = vmul.f32 %v1229, %v44
    %v1232 = vadd.f32 %v1230, 1e-05
    %v1233 = vadd.f32 %v1231, 1e-05
    %v1234 = vrsqrt.pop %v1232
    %v1235 = vrsqrt.pop %v1233
    %v1236 = vmul.f32 %v1220, %v1234
    %v1237 = vmul.f32 %v1221, %v1235
    %v1238 = vlaneseq
    %v1239 = vshrl.u32 %v1238, 7
    %v1240 = vsub.s32 2, %v1239
    %v1241 = vrot.slane %v80, %v1240
    %v1242 = vmul.f32 %v1236, %v1241
    %v1243 = vmul.f32 %v1237, %v1241
    %v1244 = vlaneseq
    %v1245 = vshrl.u32 %v1244, 7
    %v1246 = vsub.s32 3, %v1245
    %v1247 = vrot.slane %v80, %v1246
    %v1248 = vadd.f32 %v1242, %v1247
    %v1249 = vadd.f32 %v1243, %v1247
    %v1250 = vld [vmem:[%s6] sm:$0xf]
    %v1251 = vld [vmem:[%s6 + $0x4] sm:$0xf]
    %v1252 = vld [vmem:[%s6 + $0x8] sm:$0xf]
    %v1253 = vld [vmem:[%s6 + $0xc] sm:$0xf]
    %v1254 = vpack.c.bf16 %v1249, %v1248
    %v1255 = vlaneseq
    %v1256 = vshrl.u32 %v1255, 7
    %v1257 = vsub.s32 4, %v1256
    %v1258 = vrot.slane %v80, %v1257
    %v1263 = vunpack.c.l.b16 %v1250
    %v1264 = vunpack.c.l.b16 %v1251
    %v1265 = vunpack.c.l.b16 %v1252
    %v1266 = vunpack.c.l.b16 %v1253
    %v1267 = vpack.c.b16 %v1264, %v1263
    %v1268 = vpack.c.b16 %v1266, %v1265
    %v1272 = vsel %vm37, %v1254, 0
    %1274 = vmatprep.subr.bf16.mxu0 0
    %1275 = vmatpush1.bf16.msra.mxu0 %v1267
    %1276 = vmatprep.subr.bf16.mxu0 0
    %1277 = vmatpush1.bf16.msra.mxu0 %v1268
    %1278 = vmatprep.subr.bf16.mxu0 0
    %1279 = vmatpush1.bf16.msra.mxu0 0
    %1280 = vmatprep.subr.bf16.mxu0 0
    %1281 = vmatpush1.bf16.msra.mxu0 0
    %1282 = vmatprep.subr.bf16.mxu0 0
    %1283 = vmatpush1.bf16.msra.mxu0 0
    %1284 = vmatprep.subr.bf16.mxu0 0
    %1285 = vmatpush1.bf16.msra.mxu0 0
    %1286 = vmatprep.subr.bf16.mxu0 0
    %1287 = vmatpush1.bf16.msra.mxu0 0
    %1288 = vmatprep.subr.bf16.mxu0 0
    %1289 = vmatpush1.bf16.msra.mxu0 0
    %1290 = vmatprep.subr.bf16.mxu0 0
    %1291 = vmatpush1.bf16.msra.mxu0 0
    %1292 = vmatprep.subr.bf16.mxu0 0
    %1293 = vmatpush1.bf16.msra.mxu0 0
    %1294 = vmatprep.subr.bf16.mxu0 0
    %1295 = vmatpush1.bf16.msra.mxu0 0
    %1296 = vmatprep.subr.bf16.mxu0 0
    %1297 = vmatpush1.bf16.msra.mxu0 0
    %1298 = vmatprep.subr.bf16.mxu0 0
    %1299 = vmatpush1.bf16.msra.mxu0 0
    %1300 = vmatprep.subr.bf16.mxu0 0
    %1301 = vmatpush1.bf16.msra.mxu0 0
    %1302 = vmatprep.subr.bf16.mxu0 0
    %1303 = vmatpush1.bf16.msra.mxu0 0
    %1304 = vmatprep.subr.bf16.mxu0 0
    %1305 = vmatpush1.bf16.msra.mxu0 0
    %1306 = vmatprep.mubr.bf16.mxu0 0
    %1307 = vmatmul.mubr.bf16.gmra.mrb[0].mxu0 %v1272
    %v1308 = vpop.f32.mrb[0].mxu0
    %v1309 = vadd.f32 %v1258, %v1308
    %v1310 = vpop.f32.mrb[0].mxu0
    %v1311 = vpop.f32.mrb[0].mxu0
    %v1312 = vadd.f32 %v1258, %v1311
    %v1313 = vpop.f32.mrb[0].mxu0
    %1314 = vdwg.mxu0
    %v1315 = vmul.f32 %v1309, %v1309
    %v1316 = vmul.f32 %v1312, %v1312
    %v1317 = vmul.f32 %v1309, %v1315
    %v1318 = vmul.f32 %v1312, %v1316
    %v1319 = vmul.f32 %v1317, 0.044715
    %v1320 = vmul.f32 %v1318, 0.044715
    %v1321 = vadd.f32 %v1309, %v1319
    %v1322 = vadd.f32 %v1312, %v1320
    %v1323 = vmul.f32 %v1321, 0.7978846
    %v1324 = vmul.f32 %v1322, 0.7978846
    %v1325 = vtanh.pop %v1323
    %v1326 = vtanh.pop %v1324
    %v1327 = vadd.f32 %v1325, 1.0
    %v1328 = vadd.f32 %v1326, 1.0
    %v1329 = vmul.f32 %v1327, 0.5
    %v1330 = vmul.f32 %v1328, 0.5
    %v1331 = vmul.f32 %v1309, %v1329
    %v1332 = vmul.f32 %v1312, %v1330
    %v1333 = vld [vmem:[%s7] sm:$0xf]
    %v1334 = vld [vmem:[%s7 + $0x4] sm:$0xf]
    %v1335 = vld [vmem:[%s7 + $0x8] sm:$0xf]
    %v1336 = vld [vmem:[%s7 + $0xc] sm:$0xf]
    %v1337 = vld [vmem:[%s7 + $0x10] sm:$0xf]
    %v1338 = vld [vmem:[%s7 + $0x14] sm:$0xf]
    %v1339 = vld [vmem:[%s7 + $0x18] sm:$0xf]
    %v1340 = vld [vmem:[%s7 + $0x1c] sm:$0xf]
    %v1341 = vpack.c.bf16 %v1332, %v1331
    %v1342 = vlaneseq
    %v1343 = vshrl.u32 %v1342, 7
    %v1344 = vsub.s32 5, %v1343
    %v1345 = vrot.slane %v80, %v1344
    %v1354 = vunpack.c.l.b16 %v1333
    %v1355 = vunpack.c.l.b16 %v1334
    %v1356 = vunpack.c.l.b16 %v1335
    %v1357 = vunpack.c.l.b16 %v1336
    %v1358 = vunpack.c.l.b16 %v1337
    %v1359 = vunpack.c.l.b16 %v1338
    %v1360 = vunpack.c.l.b16 %v1339
    %v1361 = vunpack.c.l.b16 %v1340
    %v1362 = vpack.c.b16 %v1355, %v1354
    %v1363 = vpack.c.b16 %v1357, %v1356
    %v1364 = vpack.c.b16 %v1359, %v1358
    %v1365 = vpack.c.b16 %v1361, %v1360
    %vm1370 = vcmask 523264
    %v1372 = vsel %vm1370, %v1341, 0
    %1374 = vmatprep.subr.bf16.mxu0 0
    %1375 = vmatpush1.bf16.msra.mxu0 %v1362
    %1376 = vmatprep.subr.bf16.mxu0 0
    %1377 = vmatpush1.bf16.msra.mxu0 %v1363
    %1378 = vmatprep.subr.bf16.mxu0 0
    %1379 = vmatpush1.bf16.msra.mxu0 %v1364
    %1380 = vmatprep.subr.bf16.mxu0 0
    %1381 = vmatpush1.bf16.msra.mxu0 %v1365
    %1382 = vmatprep.subr.bf16.mxu0 0
    %1383 = vmatpush1.bf16.msra.mxu0 0
    %1384 = vmatprep.subr.bf16.mxu0 0
    %1385 = vmatpush1.bf16.msra.mxu0 0
    %1386 = vmatprep.subr.bf16.mxu0 0
    %1387 = vmatpush1.bf16.msra.mxu0 0
    %1388 = vmatprep.subr.bf16.mxu0 0
    %1389 = vmatpush1.bf16.msra.mxu0 0
    %1390 = vmatprep.subr.bf16.mxu0 0
    %1391 = vmatpush1.bf16.msra.mxu0 0
    %1392 = vmatprep.subr.bf16.mxu0 0
    %1393 = vmatpush1.bf16.msra.mxu0 0
    %1394 = vmatprep.subr.bf16.mxu0 0
    %1395 = vmatpush1.bf16.msra.mxu0 0
    %1396 = vmatprep.subr.bf16.mxu0 0
    %1397 = vmatpush1.bf16.msra.mxu0 0
    %1398 = vmatprep.subr.bf16.mxu0 0
    %1399 = vmatpush1.bf16.msra.mxu0 0
    %1400 = vmatprep.subr.bf16.mxu0 0
    %1401 = vmatpush1.bf16.msra.mxu0 0
    %1402 = vmatprep.subr.bf16.mxu0 0
    %1403 = vmatpush1.bf16.msra.mxu0 0
    %1404 = vmatprep.subr.bf16.mxu0 0
    %1405 = vmatpush1.bf16.msra.mxu0 0
    %1406 = vmatprep.mubr.bf16.mxu0 0
    %1407 = vmatmul.mubr.bf16.gmra.mrb[0].mxu0 %v1372
    %v1408 = vpop.f32.mrb[0].mxu0
    %v1409 = vadd.f32 %v1345, %v1408
    %v1410 = vpop.f32.mrb[0].mxu0
    %v1411 = vpop.f32.mrb[0].mxu0
    %v1412 = vadd.f32 %v1345, %v1411
    %v1413 = vpop.f32.mrb[0].mxu0
    %1414 = vdwg.mxu0
    %v1415 = vadd.f32 %v1409, %v1248
    %v1416 = vadd.f32 %v1412, %v1249
    %v1417 = vsel %vm37, %v1415, 0.0
    %1418 = vadd.xlane.f32.xlu0 %v1417
    %v1419 = vpop.xlane.xlu0 %1418
    %v1420 = vsel %vm37, %v1416, 0.0
    %1421 = vadd.xlane.f32.xlu0 %v1420
    %v1422 = vpop.xlane.xlu0 %1421
    %v1423 = vmul.f32 %v1419, %v44
    %v1424 = vmul.f32 %v1422, %v44
    %v1425 = vsub.f32 %v1415, %v1423
    %v1426 = vsub.f32 %v1416, %v1424
    %v1427 = vmul.f32 %v1425, %v1425
    %v1428 = vmul.f32 %v1426, %v1426
    %v1429 = vsel %vm37, %v1427, 0.0
    %1430 = vadd.xlane.f32.xlu0 %v1429
    %v1431 = vpop.xlane.xlu0 %1430
    %v1432 = vsel %vm37, %v1428, 0.0
    %1433 = vadd.xlane.f32.xlu0 %v1432
    %v1434 = vpop.xlane.xlu0 %1433
    %v1435 = vmul.f32 %v1431, %v44
    %v1436 = vmul.f32 %v1434, %v44
    %v1437 = vadd.f32 %v1435, 1e-05
    %v1438 = vadd.f32 %v1436, 1e-05
    %v1439 = vrsqrt.pop %v1437
    %v1440 = vrsqrt.pop %v1438
    %v1441 = vmul.f32 %v1425, %v1439
    %v1442 = vmul.f32 %v1426, %v1440
    %v1443 = vlaneseq
    %v1444 = vshrl.u32 %v1443, 7
    %v1445 = vsub.s32 6, %v1444
    %v1446 = vrot.slane %v80, %v1445
    %v1447 = vmul.f32 %v1441, %v1446
    %v1448 = vmul.f32 %v1442, %v1446
    %v1449 = vlaneseq
    %v1450 = vshrl.u32 %v1449, 7
    %v1451 = vsub.s32 7, %v1450
    %v1452 = vrot.slane %v80, %v1451
    %v1453 = vadd.f32 %v1447, %v1452
    %v1454 = vadd.f32 %v1448, %v1452
    %s1455 = scalar_lea.vmem %s3, 24
    %v1456 = vld [vmem:[%s1455] sm:$0xff]
    %v1457 = vld [vmem:[%s1455 + $0x8] sm:$0xff]
    %v1458 = vld [vmem:[%s1455 + $0x10] sm:$0xff]
    %s1459 = scalar_lea.vmem %s4, 48
    %v1460 = vld [vmem:[%s1459] sm:$0xff]
    %v1461 = vld [vmem:[%s1459 + $0x8] sm:$0xf]
    %v1462 = vld [vmem:[%s1459 + $0xc] sm:$0xff]
    %v1463 = vld [vmem:[%s1459 + $0x14] sm:$0xf]
    %v1464 = vld [vmem:[%s1459 + $0x18] sm:$0xff]
    %v1465 = vld [vmem:[%s1459 + $0x20] sm:$0xf]
    %v1466 = vld [vmem:[%s1459 + $0x24] sm:$0xff]
    %v1467 = vld [vmem:[%s1459 + $0x2c] sm:$0xf]
    %v1468 = vpack.c.bf16 %v1454, %v1453
    %v1469 = vlaneseq
    %v1470 = vshrl.u32 %v1469, 7
    %v1471 = vsub.s32 0, %v1470
    %v1472 = vrot.slane %v1456, %v1471
    %v1473 = vlaneseq
    %v1474 = vshrl.u32 %v1473, 7
    %v1475 = vsub.s32 0, %v1474
    %v1476 = vrot.slane %v1457, %v1475
    %v1477 = vlaneseq
    %v1478 = vshrl.u32 %v1477, 7
    %v1479 = vsub.s32 0, %v1478
    %v1480 = vrot.slane %v1458, %v1479
    %v1489 = vunpack.c.l.b16 %v1460
    %v1490 = vunpack.c.h.b16 %v1460
    %v1491 = vunpack.c.l.b16 %v1461
    %v1492 = vunpack.c.l.b16 %v1462
    %v1493 = vunpack.c.h.b16 %v1462
    %v1494 = vunpack.c.l.b16 %v1463
    %v1495 = vunpack.c.l.b16 %v1464
    %v1496 = vunpack.c.h.b16 %v1464
    %v1497 = vunpack.c.l.b16 %v1465
    %v1498 = vunpack.c.l.b16 %v1466
    %v1499 = vunpack.c.h.b16 %v1466
    %v1500 = vunpack.c.l.b16 %v1467
    %v1501 = vpack.c.b16 %v1492, %v1489
    %v1502 = vpack.c.b16 %v1493, %v1490
    %v1503 = vpack.c.b16 %v1494, %v1491
    %v1504 = vpack.c.b16 %v1498, %v1495
    %v1505 = vpack.c.b16 %v1499, %v1496
    %v1506 = vpack.c.b16 %v1500, %v1497
    %v1514 = vsel %vm37, %v1468, 0
    %1516 = vmatprep.subr.bf16.mxu0 %v1502
    %1517 = vmatpush1.bf16.msra.mxu0 %v1501
    %1518 = vmatprep.subr.bf16.mxu0 %v1505
    %1519 = vmatpush1.bf16.msra.mxu0 %v1504
    %1520 = vmatprep.subr.bf16.mxu0 0
    %1521 = vmatpush1.bf16.msra.mxu0 0
    %1522 = vmatprep.subr.bf16.mxu0 0
    %1523 = vmatpush1.bf16.msra.mxu0 0
    %1524 = vmatprep.subr.bf16.mxu0 0
    %1525 = vmatpush1.bf16.msra.mxu0 0
    %1526 = vmatprep.subr.bf16.mxu0 0
    %1527 = vmatpush1.bf16.msra.mxu0 0
    %1528 = vmatprep.subr.bf16.mxu0 0
    %1529 = vmatpush1.bf16.msra.mxu0 0
    %1530 = vmatprep.subr.bf16.mxu0 0
    %1531 = vmatpush1.bf16.msra.mxu0 0
    %1532 = vmatprep.subr.bf16.mxu0 0
    %1533 = vmatpush1.bf16.msra.mxu0 0
    %1534 = vmatprep.subr.bf16.mxu0 0
    %1535 = vmatpush1.bf16.msra.mxu0 0
    %1536 = vmatprep.subr.bf16.mxu0 0
    %1537 = vmatpush1.bf16.msra.mxu0 0
    %1538 = vmatprep.subr.bf16.mxu0 0
    %1539 = vmatpush1.bf16.msra.mxu0 0
    %1540 = vmatprep.subr.bf16.mxu0 0
    %1541 = vmatpush1.bf16.msra.mxu0 0
    %1542 = vmatprep.subr.bf16.mxu0 0
    %1543 = vmatpush1.bf16.msra.mxu0 0
    %1544 = vmatprep.subr.bf16.mxu0 0
    %1545 = vmatpush1.bf16.msra.mxu0 0
    %1546 = vmatprep.subr.bf16.mxu0 0
    %1547 = vmatpush1.bf16.msra.mxu0 0
    %1548 = vmatprep.mubr.bf16.mxu0 0
    %1549 = vmatmul.mubr.bf16.gmra.mrb[0].mxu0 %v1514
    %v1550 = vpop.f32.mrb[0].mxu0
    %v1551 = vadd.f32 %v1472, %v1550
    %v1552 = vpop.f32.mrb[0].mxu0
    %v1553 = vadd.f32 %v1476, %v1552
    %v1554 = vpop.f32.mrb[0].mxu0
    %v1555 = vadd.f32 %v1472, %v1554
    %v1556 = vpop.f32.mrb[0].mxu0
    %v1557 = vadd.f32 %v1476, %v1556
    %1558 = vdwg.mxu0
    %1559 = vmatprep.subr.bf16.mxu0 0
    %1560 = vmatpush1.bf16.msra.mxu0 %v1503
    %1561 = vmatprep.subr.bf16.mxu0 0
    %1562 = vmatpush1.bf16.msra.mxu0 %v1506
    %1563 = vmatprep.subr.bf16.mxu0 0
    %1564 = vmatpush1.bf16.msra.mxu0 0
    %1565 = vmatprep.subr.bf16.mxu0 0
    %1566 = vmatpush1.bf16.msra.mxu0 0
    %1567 = vmatprep.subr.bf16.mxu0 0
    %1568 = vmatpush1.bf16.msra.mxu0 0
    %1569 = vmatprep.subr.bf16.mxu0 0
    %1570 = vmatpush1.bf16.msra.mxu0 0
    %1571 = vmatprep.subr.bf16.mxu0 0
    %1572 = vmatpush1.bf16.msra.mxu0 0
    %1573 = vmatprep.subr.bf16.mxu0 0
    %1574 = vmatpush1.bf16.msra.mxu0 0
    %1575 = vmatprep.subr.bf16.mxu0 0
    %1576 = vmatpush1.bf16.msra.mxu0 0
    %1577 = vmatprep.subr.bf16.mxu0 0
    %1578 = vmatpush1.bf16.msra.mxu0 0
    %1579 = vmatprep.subr.bf16.mxu0 0
    %1580 = vmatpush1.bf16.msra.mxu0 0
    %1581 = vmatprep.subr.bf16.mxu0 0
    %1582 = vmatpush1.bf16.msra.mxu0 0
    %1583 = vmatprep.subr.bf16.mxu0 0
    %1584 = vmatpush1.bf16.msra.mxu0 0
    %1585 = vmatprep.subr.bf16.mxu0 0
    %1586 = vmatpush1.bf16.msra.mxu0 0
    %1587 = vmatprep.subr.bf16.mxu0 0
    %1588 = vmatpush1.bf16.msra.mxu0 0
    %1589 = vmatprep.subr.bf16.mxu0 0
    %1590 = vmatpush1.bf16.msra.mxu0 0
    %1591 = vmatprep.mubr.bf16.mxu0 0
    %1592 = vmatmul.mubr.bf16.gmra.mrb[0].mxu0 %v1514
    %v1593 = vpop.f32.mrb[0].mxu0
    %v1594 = vadd.f32 %v1480, %v1593
    %v1595 = vpop.f32.mrb[0].mxu0
    %v1596 = vpop.f32.mrb[0].mxu0
    %v1597 = vadd.f32 %v1480, %v1596
    %v1598 = vpop.f32.mrb[0].mxu0
    %1599 = vdwg.mxu0
    %v1600 = vpack.c.bf16 %v1551, %v1551
    %v1601 = vpack.c.bf16 %v1553, %v1553
    %v1603 = vsel %vm229, %v1600, 0
    %v1606 = vsel %vm229, %v1601, 0
    %1608 = vmatprep.subr.bf16.mxu0 0
    %1609 = vmatpush1.bf16.xpose.msra.mxu0 %v1606
    %1610 = vmatprep.subr.bf16.mxu0 0
    %1611 = vmatpush1.bf16.xpose.msra.mxu0 0
    %1612 = vmatprep.subr.bf16.mxu0 0
    %1613 = vmatpush1.bf16.xpose.msra.mxu0 0
    %1614 = vmatprep.subr.bf16.mxu0 0
    %1615 = vmatpush1.bf16.xpose.msra.mxu0 0
    %1616 = vmatprep.subr.bf16.mxu0 0
    %1617 = vmatpush1.bf16.xpose.msra.mxu0 0
    %1618 = vmatprep.subr.bf16.mxu0 0
    %1619 = vmatpush1.bf16.xpose.msra.mxu0 0
    %1620 = vmatprep.subr.bf16.mxu0 0
    %1621 = vmatpush1.bf16.xpose.msra.mxu0 0
    %1622 = vmatprep.subr.bf16.mxu0 0
    %1623 = vmatpush1.bf16.xpose.msra.mxu0 0
    %1624 = vmatprep.subr.bf16.mxu0 0
    %1625 = vmatpush1.bf16.xpose.msra.mxu0 0
    %1626 = vmatprep.subr.bf16.mxu0 0
    %1627 = vmatpush1.bf16.xpose.msra.mxu0 0
    %1628 = vmatprep.subr.bf16.mxu0 0
    %1629 = vmatpush1.bf16.xpose.msra.mxu0 0
    %1630 = vmatprep.subr.bf16.mxu0 0
    %1631 = vmatpush1.bf16.xpose.msra.mxu0 0
    %1632 = vmatprep.subr.bf16.mxu0 0
    %1633 = vmatpush1.bf16.xpose.msra.mxu0 0
    %1634 = vmatprep.subr.bf16.mxu0 0
    %1635 = vmatpush1.bf16.xpose.msra.mxu0 0
    %1636 = vmatprep.subr.bf16.mxu0 0
    %1637 = vmatpush1.bf16.xpose.msra.mxu0 0
    %1638 = vmatprep.subr.bf16.mxu0 0
    %1639 = vmatpush1.bf16.xpose.msra.mxu0 0
    %1640 = vmatprep.mubr.bf16.mxu0 0
    %1641 = vmatmul.mubr.bf16.gmra.mrb[0].mxu0 %v1603
    %v1642 = vpop.f32.mrb[0].mxu0
    %v1643 = vadd.f32 %v228, %v1642
    %v1644 = vpop.f32.mrb[0].mxu0
    %v1645 = vpop.f32.mrb[0].mxu0
    %v1646 = vpop.f32.mrb[0].mxu0
    %1647 = vdwg.mxu0
    %v1648 = vsel %vm229, %v1643, -inf
    %1649 = vmax.xlane.f32.xlu0 %v1648
    %v1650 = vpop.xlane.xlu0 %1649
    %v1651 = vsub.f32 %v1643, %v1650
    %v1652 = vmul.f32 %v1651, 1.442695
    %v1653 = vpow.pop %v1652
    %v1654 = vsel %vm229, %v1653, 0.0
    %1655 = vadd.xlane.f32.xlu0 %v1654
    %v1656 = vpop.xlane.xlu0 %1655
    %v1657 = vrcp.pop %v1656
    %v1658 = vmul.f32 %v1653, %v1657
    %v1659 = vpack.c.bf16 %v1658, %v1658
    %v1660 = vpack.c.bf16 %v1594, %v1594
    %v1662 = vsel %vm229, %v1659, 0
    %v1665 = vsel %vm292, %v1660, 0
    %1667 = vmatprep.subr.bf16.mxu0 0
    %1668 = vmatpush1.bf16.msra.mxu0 %v1665
    %1669 = vmatprep.subr.bf16.mxu0 0
    %1670 = vmatpush1.bf16.msra.mxu0 0
    %1671 = vmatprep.subr.bf16.mxu0 0
    %1672 = vmatpush1.bf16.msra.mxu0 0
    %1673 = vmatprep.subr.bf16.mxu0 0
    %1674 = vmatpush1.bf16.msra.mxu0 0
    %1675 = vmatprep.subr.bf16.mxu0 0
    %1676 = vmatpush1.bf16.msra.mxu0 0
    %1677 = vmatprep.subr.bf16.mxu0 0
    %1678 = vmatpush1.bf16.msra.mxu0 0
    %1679 = vmatprep.subr.bf16.mxu0 0
    %1680 = vmatpush1.bf16.msra.mxu0 0
    %1681 = vmatprep.subr.bf16.mxu0 0
    %1682 = vmatpush1.bf16.msra.mxu0 0
    %1683 = vmatprep.subr.bf16.mxu0 0
    %1684 = vmatpush1.bf16.msra.mxu0 0
    %1685 = vmatprep.subr.bf16.mxu0 0
    %1686 = vmatpush1.bf16.msra.mxu0 0
    %1687 = vmatprep.subr.bf16.mxu0 0
    %1688 = vmatpush1.bf16.msra.mxu0 0
    %1689 = vmatprep.subr.bf16.mxu0 0
    %1690 = vmatpush1.bf16.msra.mxu0 0
    %1691 = vmatprep.subr.bf16.mxu0 0
    %1692 = vmatpush1.bf16.msra.mxu0 0
    %1693 = vmatprep.subr.bf16.mxu0 0
    %1694 = vmatpush1.bf16.msra.mxu0 0
    %1695 = vmatprep.subr.bf16.mxu0 0
    %1696 = vmatpush1.bf16.msra.mxu0 0
    %1697 = vmatprep.subr.bf16.mxu0 0
    %1698 = vmatpush1.bf16.msra.mxu0 0
    %1699 = vmatprep.mubr.bf16.mxu0 0
    %1700 = vmatmul.mubr.bf16.gmra.mrb[0].mxu0 %v1662
    %v1701 = vpop.f32.mrb[0].mxu0
    %v1702 = vadd.f32 0.0, %v1701
    %v1703 = vpop.f32.mrb[0].mxu0
    %v1704 = vpop.f32.mrb[0].mxu0
    %v1705 = vpop.f32.mrb[0].mxu0
    %1706 = vdwg.mxu0
    %1708 = vrot.lane.b32.xlu0 %v1600, 120
    %v1709 = vpop.permute.xlu0 %1708
    %1711 = vrot.lane.b32.xlu0 %v1601, 120
    %v1712 = vpop.permute.xlu0 %1711
    %v1714 = vsel %vm229, %v1709, 0
    %v1717 = vsel %vm229, %v1712, 0
    %1719 = vmatprep.subr.bf16.mxu0 0
    %1720 = vmatpush1.bf16.xpose.msra.mxu0 %v1717
    %1721 = vmatprep.subr.bf16.mxu0 0
    %1722 = vmatpush1.bf16.xpose.msra.mxu0 0
    %1723 = vmatprep.subr.bf16.mxu0 0
    %1724 = vmatpush1.bf16.xpose.msra.mxu0 0
    %1725 = vmatprep.subr.bf16.mxu0 0
    %1726 = vmatpush1.bf16.xpose.msra.mxu0 0
    %1727 = vmatprep.subr.bf16.mxu0 0
    %1728 = vmatpush1.bf16.xpose.msra.mxu0 0
    %1729 = vmatprep.subr.bf16.mxu0 0
    %1730 = vmatpush1.bf16.xpose.msra.mxu0 0
    %1731 = vmatprep.subr.bf16.mxu0 0
    %1732 = vmatpush1.bf16.xpose.msra.mxu0 0
    %1733 = vmatprep.subr.bf16.mxu0 0
    %1734 = vmatpush1.bf16.xpose.msra.mxu0 0
    %1735 = vmatprep.subr.bf16.mxu0 0
    %1736 = vmatpush1.bf16.xpose.msra.mxu0 0
    %1737 = vmatprep.subr.bf16.mxu0 0
    %1738 = vmatpush1.bf16.xpose.msra.mxu0 0
    %1739 = vmatprep.subr.bf16.mxu0 0
    %1740 = vmatpush1.bf16.xpose.msra.mxu0 0
    %1741 = vmatprep.subr.bf16.mxu0 0
    %1742 = vmatpush1.bf16.xpose.msra.mxu0 0
    %1743 = vmatprep.subr.bf16.mxu0 0
    %1744 = vmatpush1.bf16.xpose.msra.mxu0 0
    %1745 = vmatprep.subr.bf16.mxu0 0
    %1746 = vmatpush1.bf16.xpose.msra.mxu0 0
    %1747 = vmatprep.subr.bf16.mxu0 0
    %1748 = vmatpush1.bf16.xpose.msra.mxu0 0
    %1749 = vmatprep.subr.bf16.mxu0 0
    %1750 = vmatpush1.bf16.xpose.msra.mxu0 0
    %1751 = vmatprep.mubr.bf16.mxu0 0
    %1752 = vmatmul.mubr.bf16.gmra.mrb[0].mxu0 %v1714
    %v1753 = vpop.f32.mrb[0].mxu0
    %v1754 = vadd.f32 %v228, %v1753
    %v1755 = vpop.f32.mrb[0].mxu0
    %v1756 = vpop.f32.mrb[0].mxu0
    %v1757 = vpop.f32.mrb[0].mxu0
    %1758 = vdwg.mxu0
    %v1759 = vsel %vm229, %v1754, -inf
    %1760 = vmax.xlane.f32.xlu0 %v1759
    %v1761 = vpop.xlane.xlu0 %1760
    %v1762 = vsub.f32 %v1754, %v1761
    %v1763 = vmul.f32 %v1762, 1.442695
    %v1764 = vpow.pop %v1763
    %v1765 = vsel %vm229, %v1764, 0.0
    %1766 = vadd.xlane.f32.xlu0 %v1765
    %v1767 = vpop.xlane.xlu0 %1766
    %v1768 = vrcp.pop %v1767
    %v1769 = vmul.f32 %v1764, %v1768
    %v1770 = vpack.c.bf16 %v1769, %v1769
    %1772 = vrot.lane.b32.xlu0 %v1660, 120
    %v1773 = vpop.permute.xlu0 %1772
    %v1775 = vsel %vm229, %v1770, 0
    %v1778 = vsel %vm292, %v1773, 0
    %1780 = vmatprep.subr.bf16.mxu0 0
    %1781 = vmatpush1.bf16.msra.mxu0 %v1778
    %1782 = vmatprep.subr.bf16.mxu0 0
    %1783 = vmatpush1.bf16.msra.mxu0 0
    %1784 = vmatprep.subr.bf16.mxu0 0
    %1785 = vmatpush1.bf16.msra.mxu0 0
    %1786 = vmatprep.subr.bf16.mxu0 0
    %1787 = vmatpush1.bf16.msra.mxu0 0
    %1788 = vmatprep.subr.bf16.mxu0 0
    %1789 = vmatpush1.bf16.msra.mxu0 0
    %1790 = vmatprep.subr.bf16.mxu0 0
    %1791 = vmatpush1.bf16.msra.mxu0 0
    %1792 = vmatprep.subr.bf16.mxu0 0
    %1793 = vmatpush1.bf16.msra.mxu0 0
    %1794 = vmatprep.subr.bf16.mxu0 0
    %1795 = vmatpush1.bf16.msra.mxu0 0
    %1796 = vmatprep.subr.bf16.mxu0 0
    %1797 = vmatpush1.bf16.msra.mxu0 0
    %1798 = vmatprep.subr.bf16.mxu0 0
    %1799 = vmatpush1.bf16.msra.mxu0 0
    %1800 = vmatprep.subr.bf16.mxu0 0
    %1801 = vmatpush1.bf16.msra.mxu0 0
    %1802 = vmatprep.subr.bf16.mxu0 0
    %1803 = vmatpush1.bf16.msra.mxu0 0
    %1804 = vmatprep.subr.bf16.mxu0 0
    %1805 = vmatpush1.bf16.msra.mxu0 0
    %1806 = vmatprep.subr.bf16.mxu0 0
    %1807 = vmatpush1.bf16.msra.mxu0 0
    %1808 = vmatprep.subr.bf16.mxu0 0
    %1809 = vmatpush1.bf16.msra.mxu0 0
    %1810 = vmatprep.subr.bf16.mxu0 0
    %1811 = vmatpush1.bf16.msra.mxu0 0
    %1812 = vmatprep.mubr.bf16.mxu0 0
    %1813 = vmatmul.mubr.bf16.gmra.mrb[0].mxu0 %v1775
    %v1814 = vpop.f32.mrb[0].mxu0
    %v1815 = vadd.f32 0.0, %v1814
    %v1816 = vpop.f32.mrb[0].mxu0
    %v1817 = vpop.f32.mrb[0].mxu0
    %v1818 = vpop.f32.mrb[0].mxu0
    %1819 = vdwg.mxu0
    %1820 = vrot.lane.b32.xlu0 %v1600, 112
    %v1821 = vpop.permute.xlu0 %1820
    %1822 = vrot.lane.b32.xlu0 %v1601, 112
    %v1823 = vpop.permute.xlu0 %1822
    %v1825 = vsel %vm229, %v1821, 0
    %v1828 = vsel %vm229, %v1823, 0
    %1830 = vmatprep.subr.bf16.mxu0 0
    %1831 = vmatpush1.bf16.xpose.msra.mxu0 %v1828
    %1832 = vmatprep.subr.bf16.mxu0 0
    %1833 = vmatpush1.bf16.xpose.msra.mxu0 0
    %1834 = vmatprep.subr.bf16.mxu0 0
    %1835 = vmatpush1.bf16.xpose.msra.mxu0 0
    %1836 = vmatprep.subr.bf16.mxu0 0
    %1837 = vmatpush1.bf16.xpose.msra.mxu0 0
    %1838 = vmatprep.subr.bf16.mxu0 0
    %1839 = vmatpush1.bf16.xpose.msra.mxu0 0
    %1840 = vmatprep.subr.bf16.mxu0 0
    %1841 = vmatpush1.bf16.xpose.msra.mxu0 0
    %1842 = vmatprep.subr.bf16.mxu0 0
    %1843 = vmatpush1.bf16.xpose.msra.mxu0 0
    %1844 = vmatprep.subr.bf16.mxu0 0
    %1845 = vmatpush1.bf16.xpose.msra.mxu0 0
    %1846 = vmatprep.subr.bf16.mxu0 0
    %1847 = vmatpush1.bf16.xpose.msra.mxu0 0
    %1848 = vmatprep.subr.bf16.mxu0 0
    %1849 = vmatpush1.bf16.xpose.msra.mxu0 0
    %1850 = vmatprep.subr.bf16.mxu0 0
    %1851 = vmatpush1.bf16.xpose.msra.mxu0 0
    %1852 = vmatprep.subr.bf16.mxu0 0
    %1853 = vmatpush1.bf16.xpose.msra.mxu0 0
    %1854 = vmatprep.subr.bf16.mxu0 0
    %1855 = vmatpush1.bf16.xpose.msra.mxu0 0
    %1856 = vmatprep.subr.bf16.mxu0 0
    %1857 = vmatpush1.bf16.xpose.msra.mxu0 0
    %1858 = vmatprep.subr.bf16.mxu0 0
    %1859 = vmatpush1.bf16.xpose.msra.mxu0 0
    %1860 = vmatprep.subr.bf16.mxu0 0
    %1861 = vmatpush1.bf16.xpose.msra.mxu0 0
    %1862 = vmatprep.mubr.bf16.mxu0 0
    %1863 = vmatmul.mubr.bf16.gmra.mrb[0].mxu0 %v1825
    %v1864 = vpop.f32.mrb[0].mxu0
    %v1865 = vadd.f32 %v228, %v1864
    %v1866 = vpop.f32.mrb[0].mxu0
    %v1867 = vpop.f32.mrb[0].mxu0
    %v1868 = vpop.f32.mrb[0].mxu0
    %1869 = vdwg.mxu0
    %v1870 = vsel %vm229, %v1865, -inf
    %1871 = vmax.xlane.f32.xlu0 %v1870
    %v1872 = vpop.xlane.xlu0 %1871
    %v1873 = vsub.f32 %v1865, %v1872
    %v1874 = vmul.f32 %v1873, 1.442695
    %v1875 = vpow.pop %v1874
    %v1876 = vsel %vm229, %v1875, 0.0
    %1877 = vadd.xlane.f32.xlu0 %v1876
    %v1878 = vpop.xlane.xlu0 %1877
    %v1879 = vrcp.pop %v1878
    %v1880 = vmul.f32 %v1875, %v1879
    %v1881 = vpack.c.bf16 %v1880, %v1880
    %1882 = vrot.lane.b32.xlu0 %v1660, 112
    %v1883 = vpop.permute.xlu0 %1882
    %v1885 = vsel %vm229, %v1881, 0
    %v1888 = vsel %vm292, %v1883, 0
    %1890 = vmatprep.subr.bf16.mxu0 0
    %1891 = vmatpush1.bf16.msra.mxu0 %v1888
    %1892 = vmatprep.subr.bf16.mxu0 0
    %1893 = vmatpush1.bf16.msra.mxu0 0
    %1894 = vmatprep.subr.bf16.mxu0 0
    %1895 = vmatpush1.bf16.msra.mxu0 0
    %1896 = vmatprep.subr.bf16.mxu0 0
    %1897 = vmatpush1.bf16.msra.mxu0 0
    %1898 = vmatprep.subr.bf16.mxu0 0
    %1899 = vmatpush1.bf16.msra.mxu0 0
    %1900 = vmatprep.subr.bf16.mxu0 0
    %1901 = vmatpush1.bf16.msra.mxu0 0
    %1902 = vmatprep.subr.bf16.mxu0 0
    %1903 = vmatpush1.bf16.msra.mxu0 0
    %1904 = vmatprep.subr.bf16.mxu0 0
    %1905 = vmatpush1.bf16.msra.mxu0 0
    %1906 = vmatprep.subr.bf16.mxu0 0
    %1907 = vmatpush1.bf16.msra.mxu0 0
    %1908 = vmatprep.subr.bf16.mxu0 0
    %1909 = vmatpush1.bf16.msra.mxu0 0
    %1910 = vmatprep.subr.bf16.mxu0 0
    %1911 = vmatpush1.bf16.msra.mxu0 0
    %1912 = vmatprep.subr.bf16.mxu0 0
    %1913 = vmatpush1.bf16.msra.mxu0 0
    %1914 = vmatprep.subr.bf16.mxu0 0
    %1915 = vmatpush1.bf16.msra.mxu0 0
    %1916 = vmatprep.subr.bf16.mxu0 0
    %1917 = vmatpush1.bf16.msra.mxu0 0
    %1918 = vmatprep.subr.bf16.mxu0 0
    %1919 = vmatpush1.bf16.msra.mxu0 0
    %1920 = vmatprep.subr.bf16.mxu0 0
    %1921 = vmatpush1.bf16.msra.mxu0 0
    %1922 = vmatprep.mubr.bf16.mxu0 0
    %1923 = vmatmul.mubr.bf16.gmra.mrb[0].mxu0 %v1885
    %v1924 = vpop.f32.mrb[0].mxu0
    %v1925 = vadd.f32 0.0, %v1924
    %v1926 = vpop.f32.mrb[0].mxu0
    %v1927 = vpop.f32.mrb[0].mxu0
    %v1928 = vpop.f32.mrb[0].mxu0
    %1929 = vdwg.mxu0
    %1930 = vrot.lane.b32.xlu0 %v1600, 104
    %v1931 = vpop.permute.xlu0 %1930
    %1932 = vrot.lane.b32.xlu0 %v1601, 104
    %v1933 = vpop.permute.xlu0 %1932
    %v1935 = vsel %vm229, %v1931, 0
    %v1938 = vsel %vm229, %v1933, 0
    %1940 = vmatprep.subr.bf16.mxu0 0
    %1941 = vmatpush1.bf16.xpose.msra.mxu0 %v1938
    %1942 = vmatprep.subr.bf16.mxu0 0
    %1943 = vmatpush1.bf16.xpose.msra.mxu0 0
    %1944 = vmatprep.subr.bf16.mxu0 0
    %1945 = vmatpush1.bf16.xpose.msra.mxu0 0
    %1946 = vmatprep.subr.bf16.mxu0 0
    %1947 = vmatpush1.bf16.xpose.msra.mxu0 0
    %1948 = vmatprep.subr.bf16.mxu0 0
    %1949 = vmatpush1.bf16.xpose.msra.mxu0 0
    %1950 = vmatprep.subr.bf16.mxu0 0
    %1951 = vmatpush1.bf16.xpose.msra.mxu0 0
    %1952 = vmatprep.subr.bf16.mxu0 0
    %1953 = vmatpush1.bf16.xpose.msra.mxu0 0
    %1954 = vmatprep.subr.bf16.mxu0 0
    %1955 = vmatpush1.bf16.xpose.msra.mxu0 0
    %1956 = vmatprep.subr.bf16.mxu0 0
    %1957 = vmatpush1.bf16.xpose.msra.mxu0 0
    %1958 = vmatprep.subr.bf16.mxu0 0
    %1959 = vmatpush1.bf16.xpose.msra.mxu0 0
    %1960 = vmatprep.subr.bf16.mxu0 0
    %1961 = vmatpush1.bf16.xpose.msra.mxu0 0
    %1962 = vmatprep.subr.bf16.mxu0 0
    %1963 = vmatpush1.bf16.xpose.msra.mxu0 0
    %1964 = vmatprep.subr.bf16.mxu0 0
    %1965 = vmatpush1.bf16.xpose.msra.mxu0 0
    %1966 = vmatprep.subr.bf16.mxu0 0
    %1967 = vmatpush1.bf16.xpose.msra.mxu0 0
    %1968 = vmatprep.subr.bf16.mxu0 0
    %1969 = vmatpush1.bf16.xpose.msra.mxu0 0
    %1970 = vmatprep.subr.bf16.mxu0 0
    %1971 = vmatpush1.bf16.xpose.msra.mxu0 0
    %1972 = vmatprep.mubr.bf16.mxu0 0
    %1973 = vmatmul.mubr.bf16.gmra.mrb[0].mxu0 %v1935
    %v1974 = vpop.f32.mrb[0].mxu0
    %v1975 = vadd.f32 %v228, %v1974
    %v1976 = vpop.f32.mrb[0].mxu0
    %v1977 = vpop.f32.mrb[0].mxu0
    %v1978 = vpop.f32.mrb[0].mxu0
    %1979 = vdwg.mxu0
    %v1980 = vsel %vm229, %v1975, -inf
    %1981 = vmax.xlane.f32.xlu0 %v1980
    %v1982 = vpop.xlane.xlu0 %1981
    %v1983 = vsub.f32 %v1975, %v1982
    %v1984 = vmul.f32 %v1983, 1.442695
    %v1985 = vpow.pop %v1984
    %v1986 = vsel %vm229, %v1985, 0.0
    %1987 = vadd.xlane.f32.xlu0 %v1986
    %v1988 = vpop.xlane.xlu0 %1987
    %v1989 = vrcp.pop %v1988
    %v1990 = vmul.f32 %v1985, %v1989
    %v1991 = vpack.c.bf16 %v1990, %v1990
    %1992 = vrot.lane.b32.xlu0 %v1660, 104
    %v1993 = vpop.permute.xlu0 %1992
    %v1995 = vsel %vm229, %v1991, 0
    %v1998 = vsel %vm292, %v1993, 0
    %2000 = vmatprep.subr.bf16.mxu0 0
    %2001 = vmatpush1.bf16.msra.mxu0 %v1998
    %2002 = vmatprep.subr.bf16.mxu0 0
    %2003 = vmatpush1.bf16.msra.mxu0 0
    %2004 = vmatprep.subr.bf16.mxu0 0
    %2005 = vmatpush1.bf16.msra.mxu0 0
    %2006 = vmatprep.subr.bf16.mxu0 0
    %2007 = vmatpush1.bf16.msra.mxu0 0
    %2008 = vmatprep.subr.bf16.mxu0 0
    %2009 = vmatpush1.bf16.msra.mxu0 0
    %2010 = vmatprep.subr.bf16.mxu0 0
    %2011 = vmatpush1.bf16.msra.mxu0 0
    %2012 = vmatprep.subr.bf16.mxu0 0
    %2013 = vmatpush1.bf16.msra.mxu0 0
    %2014 = vmatprep.subr.bf16.mxu0 0
    %2015 = vmatpush1.bf16.msra.mxu0 0
    %2016 = vmatprep.subr.bf16.mxu0 0
    %2017 = vmatpush1.bf16.msra.mxu0 0
    %2018 = vmatprep.subr.bf16.mxu0 0
    %2019 = vmatpush1.bf16.msra.mxu0 0
    %2020 = vmatprep.subr.bf16.mxu0 0
    %2021 = vmatpush1.bf16.msra.mxu0 0
    %2022 = vmatprep.subr.bf16.mxu0 0
    %2023 = vmatpush1.bf16.msra.mxu0 0
    %2024 = vmatprep.subr.bf16.mxu0 0
    %2025 = vmatpush1.bf16.msra.mxu0 0
    %2026 = vmatprep.subr.bf16.mxu0 0
    %2027 = vmatpush1.bf16.msra.mxu0 0
    %2028 = vmatprep.subr.bf16.mxu0 0
    %2029 = vmatpush1.bf16.msra.mxu0 0
    %2030 = vmatprep.subr.bf16.mxu0 0
    %2031 = vmatpush1.bf16.msra.mxu0 0
    %2032 = vmatprep.mubr.bf16.mxu0 0
    %2033 = vmatmul.mubr.bf16.gmra.mrb[0].mxu0 %v1995
    %v2034 = vpop.f32.mrb[0].mxu0
    %v2035 = vadd.f32 0.0, %v2034
    %v2036 = vpop.f32.mrb[0].mxu0
    %v2037 = vpop.f32.mrb[0].mxu0
    %v2038 = vpop.f32.mrb[0].mxu0
    %2039 = vdwg.mxu0
    %2041 = vrot.lane.b32.xlu0 %v1815, 8
    %v2042 = vpop.permute.xlu0 %2041
    %2045 = vrot.lane.b32.xlu0 %v1925, 16
    %v2046 = vpop.permute.xlu0 %2045
    %2049 = vrot.lane.b32.xlu0 %v2035, 24
    %v2050 = vpop.permute.xlu0 %2049
    %v2052 = vsel %vm229, %v1702, %v2042
    %v2053 = vsel %vm682, %v2052, %v2046
    %v2054 = vsel %vm684, %v2053, %v2050
    %v2055 = vpack.c.bf16 %v1555, %v1555
    %v2056 = vpack.c.bf16 %v1557, %v1557
    %v2058 = vsel %vm229, %v2055, 0
    %v2061 = vsel %vm229, %v2056, 0
    %2063 = vmatprep.subr.bf16.mxu0 0
    %2064 = vmatpush1.bf16.xpose.msra.mxu0 %v2061
    %2065 = vmatprep.subr.bf16.mxu0 0
    %2066 = vmatpush1.bf16.xpose.msra.mxu0 0
    %2067 = vmatprep.subr.bf16.mxu0 0
    %2068 = vmatpush1.bf16.xpose.msra.mxu0 0
    %2069 = vmatprep.subr.bf16.mxu0 0
    %2070 = vmatpush1.bf16.xpose.msra.mxu0 0
    %2071 = vmatprep.subr.bf16.mxu0 0
    %2072 = vmatpush1.bf16.xpose.msra.mxu0 0
    %2073 = vmatprep.subr.bf16.mxu0 0
    %2074 = vmatpush1.bf16.xpose.msra.mxu0 0
    %2075 = vmatprep.subr.bf16.mxu0 0
    %2076 = vmatpush1.bf16.xpose.msra.mxu0 0
    %2077 = vmatprep.subr.bf16.mxu0 0
    %2078 = vmatpush1.bf16.xpose.msra.mxu0 0
    %2079 = vmatprep.subr.bf16.mxu0 0
    %2080 = vmatpush1.bf16.xpose.msra.mxu0 0
    %2081 = vmatprep.subr.bf16.mxu0 0
    %2082 = vmatpush1.bf16.xpose.msra.mxu0 0
    %2083 = vmatprep.subr.bf16.mxu0 0
    %2084 = vmatpush1.bf16.xpose.msra.mxu0 0
    %2085 = vmatprep.subr.bf16.mxu0 0
    %2086 = vmatpush1.bf16.xpose.msra.mxu0 0
    %2087 = vmatprep.subr.bf16.mxu0 0
    %2088 = vmatpush1.bf16.xpose.msra.mxu0 0
    %2089 = vmatprep.subr.bf16.mxu0 0
    %2090 = vmatpush1.bf16.xpose.msra.mxu0 0
    %2091 = vmatprep.subr.bf16.mxu0 0
    %2092 = vmatpush1.bf16.xpose.msra.mxu0 0
    %2093 = vmatprep.subr.bf16.mxu0 0
    %2094 = vmatpush1.bf16.xpose.msra.mxu0 0
    %2095 = vmatprep.mubr.bf16.mxu0 0
    %2096 = vmatmul.mubr.bf16.gmra.mrb[0].mxu0 %v2058
    %v2097 = vpop.f32.mrb[0].mxu0
    %v2098 = vadd.f32 %v691, %v2097
    %v2099 = vpop.f32.mrb[0].mxu0
    %v2100 = vpop.f32.mrb[0].mxu0
    %v2101 = vpop.f32.mrb[0].mxu0
    %2102 = vdwg.mxu0
    %v2103 = vsel %vm229, %v2098, -inf
    %2104 = vmax.xlane.f32.xlu0 %v2103
    %v2105 = vpop.xlane.xlu0 %2104
    %v2106 = vsub.f32 %v2098, %v2105
    %v2107 = vmul.f32 %v2106, 1.442695
    %v2108 = vpow.pop %v2107
    %v2109 = vsel %vm229, %v2108, 0.0
    %2110 = vadd.xlane.f32.xlu0 %v2109
    %v2111 = vpop.xlane.xlu0 %2110
    %v2112 = vrcp.pop %v2111
    %v2113 = vmul.f32 %v2108, %v2112
    %v2114 = vpack.c.bf16 %v2113, %v2113
    %v2115 = vpack.c.bf16 %v1597, %v1597
    %v2117 = vsel %vm229, %v2114, 0
    %v2120 = vsel %vm292, %v2115, 0
    %2122 = vmatprep.subr.bf16.mxu0 0
    %2123 = vmatpush1.bf16.msra.mxu0 %v2120
    %2124 = vmatprep.subr.bf16.mxu0 0
    %2125 = vmatpush1.bf16.msra.mxu0 0
    %2126 = vmatprep.subr.bf16.mxu0 0
    %2127 = vmatpush1.bf16.msra.mxu0 0
    %2128 = vmatprep.subr.bf16.mxu0 0
    %2129 = vmatpush1.bf16.msra.mxu0 0
    %2130 = vmatprep.subr.bf16.mxu0 0
    %2131 = vmatpush1.bf16.msra.mxu0 0
    %2132 = vmatprep.subr.bf16.mxu0 0
    %2133 = vmatpush1.bf16.msra.mxu0 0
    %2134 = vmatprep.subr.bf16.mxu0 0
    %2135 = vmatpush1.bf16.msra.mxu0 0
    %2136 = vmatprep.subr.bf16.mxu0 0
    %2137 = vmatpush1.bf16.msra.mxu0 0
    %2138 = vmatprep.subr.bf16.mxu0 0
    %2139 = vmatpush1.bf16.msra.mxu0 0
    %2140 = vmatprep.subr.bf16.mxu0 0
    %2141 = vmatpush1.bf16.msra.mxu0 0
    %2142 = vmatprep.subr.bf16.mxu0 0
    %2143 = vmatpush1.bf16.msra.mxu0 0
    %2144 = vmatprep.subr.bf16.mxu0 0
    %2145 = vmatpush1.bf16.msra.mxu0 0
    %2146 = vmatprep.subr.bf16.mxu0 0
    %2147 = vmatpush1.bf16.msra.mxu0 0
    %2148 = vmatprep.subr.bf16.mxu0 0
    %2149 = vmatpush1.bf16.msra.mxu0 0
    %2150 = vmatprep.subr.bf16.mxu0 0
    %2151 = vmatpush1.bf16.msra.mxu0 0
    %2152 = vmatprep.subr.bf16.mxu0 0
    %2153 = vmatpush1.bf16.msra.mxu0 0
    %2154 = vmatprep.mubr.bf16.mxu0 0
    %2155 = vmatmul.mubr.bf16.gmra.mrb[0].mxu0 %v2117
    %v2156 = vpop.f32.mrb[0].mxu0
    %v2157 = vadd.f32 0.0, %v2156
    %v2158 = vpop.f32.mrb[0].mxu0
    %v2159 = vpop.f32.mrb[0].mxu0
    %v2160 = vpop.f32.mrb[0].mxu0
    %2161 = vdwg.mxu0
    %2163 = vrot.lane.b32.xlu0 %v2055, 120
    %v2164 = vpop.permute.xlu0 %2163
    %2166 = vrot.lane.b32.xlu0 %v2056, 120
    %v2167 = vpop.permute.xlu0 %2166
    %v2169 = vsel %vm229, %v2164, 0
    %v2172 = vsel %vm229, %v2167, 0
    %2174 = vmatprep.subr.bf16.mxu0 0
    %2175 = vmatpush1.bf16.xpose.msra.mxu0 %v2172
    %2176 = vmatprep.subr.bf16.mxu0 0
    %2177 = vmatpush1.bf16.xpose.msra.mxu0 0
    %2178 = vmatprep.subr.bf16.mxu0 0
    %2179 = vmatpush1.bf16.xpose.msra.mxu0 0
    %2180 = vmatprep.subr.bf16.mxu0 0
    %2181 = vmatpush1.bf16.xpose.msra.mxu0 0
    %2182 = vmatprep.subr.bf16.mxu0 0
    %2183 = vmatpush1.bf16.xpose.msra.mxu0 0
    %2184 = vmatprep.subr.bf16.mxu0 0
    %2185 = vmatpush1.bf16.xpose.msra.mxu0 0
    %2186 = vmatprep.subr.bf16.mxu0 0
    %2187 = vmatpush1.bf16.xpose.msra.mxu0 0
    %2188 = vmatprep.subr.bf16.mxu0 0
    %2189 = vmatpush1.bf16.xpose.msra.mxu0 0
    %2190 = vmatprep.subr.bf16.mxu0 0
    %2191 = vmatpush1.bf16.xpose.msra.mxu0 0
    %2192 = vmatprep.subr.bf16.mxu0 0
    %2193 = vmatpush1.bf16.xpose.msra.mxu0 0
    %2194 = vmatprep.subr.bf16.mxu0 0
    %2195 = vmatpush1.bf16.xpose.msra.mxu0 0
    %2196 = vmatprep.subr.bf16.mxu0 0
    %2197 = vmatpush1.bf16.xpose.msra.mxu0 0
    %2198 = vmatprep.subr.bf16.mxu0 0
    %2199 = vmatpush1.bf16.xpose.msra.mxu0 0
    %2200 = vmatprep.subr.bf16.mxu0 0
    %2201 = vmatpush1.bf16.xpose.msra.mxu0 0
    %2202 = vmatprep.subr.bf16.mxu0 0
    %2203 = vmatpush1.bf16.xpose.msra.mxu0 0
    %2204 = vmatprep.subr.bf16.mxu0 0
    %2205 = vmatpush1.bf16.xpose.msra.mxu0 0
    %2206 = vmatprep.mubr.bf16.mxu0 0
    %2207 = vmatmul.mubr.bf16.gmra.mrb[0].mxu0 %v2169
    %v2208 = vpop.f32.mrb[0].mxu0
    %v2209 = vadd.f32 %v691, %v2208
    %v2210 = vpop.f32.mrb[0].mxu0
    %v2211 = vpop.f32.mrb[0].mxu0
    %v2212 = vpop.f32.mrb[0].mxu0
    %2213 = vdwg.mxu0
    %v2214 = vsel %vm229, %v2209, -inf
    %2215 = vmax.xlane.f32.xlu0 %v2214
    %v2216 = vpop.xlane.xlu0 %2215
    %v2217 = vsub.f32 %v2209, %v2216
    %v2218 = vmul.f32 %v2217, 1.442695
    %v2219 = vpow.pop %v2218
    %v2220 = vsel %vm229, %v2219, 0.0
    %2221 = vadd.xlane.f32.xlu0 %v2220
    %v2222 = vpop.xlane.xlu0 %2221
    %v2223 = vrcp.pop %v2222
    %v2224 = vmul.f32 %v2219, %v2223
    %v2225 = vpack.c.bf16 %v2224, %v2224
    %2227 = vrot.lane.b32.xlu0 %v2115, 120
    %v2228 = vpop.permute.xlu0 %2227
    %v2230 = vsel %vm229, %v2225, 0
    %v2233 = vsel %vm292, %v2228, 0
    %2235 = vmatprep.subr.bf16.mxu0 0
    %2236 = vmatpush1.bf16.msra.mxu0 %v2233
    %2237 = vmatprep.subr.bf16.mxu0 0
    %2238 = vmatpush1.bf16.msra.mxu0 0
    %2239 = vmatprep.subr.bf16.mxu0 0
    %2240 = vmatpush1.bf16.msra.mxu0 0
    %2241 = vmatprep.subr.bf16.mxu0 0
    %2242 = vmatpush1.bf16.msra.mxu0 0
    %2243 = vmatprep.subr.bf16.mxu0 0
    %2244 = vmatpush1.bf16.msra.mxu0 0
    %2245 = vmatprep.subr.bf16.mxu0 0
    %2246 = vmatpush1.bf16.msra.mxu0 0
    %2247 = vmatprep.subr.bf16.mxu0 0
    %2248 = vmatpush1.bf16.msra.mxu0 0
    %2249 = vmatprep.subr.bf16.mxu0 0
    %2250 = vmatpush1.bf16.msra.mxu0 0
    %2251 = vmatprep.subr.bf16.mxu0 0
    %2252 = vmatpush1.bf16.msra.mxu0 0
    %2253 = vmatprep.subr.bf16.mxu0 0
    %2254 = vmatpush1.bf16.msra.mxu0 0
    %2255 = vmatprep.subr.bf16.mxu0 0
    %2256 = vmatpush1.bf16.msra.mxu0 0
    %2257 = vmatprep.subr.bf16.mxu0 0
    %2258 = vmatpush1.bf16.msra.mxu0 0
    %2259 = vmatprep.subr.bf16.mxu0 0
    %2260 = vmatpush1.bf16.msra.mxu0 0
    %2261 = vmatprep.subr.bf16.mxu0 0
    %2262 = vmatpush1.bf16.msra.mxu0 0
    %2263 = vmatprep.subr.bf16.mxu0 0
    %2264 = vmatpush1.bf16.msra.mxu0 0
    %2265 = vmatprep.subr.bf16.mxu0 0
    %2266 = vmatpush1.bf16.msra.mxu0 0
    %2267 = vmatprep.mubr.bf16.mxu0 0
    %2268 = vmatmul.mubr.bf16.gmra.mrb[0].mxu0 %v2230
    %v2269 = vpop.f32.mrb[0].mxu0
    %v2270 = vadd.f32 0.0, %v2269
    %v2271 = vpop.f32.mrb[0].mxu0
    %v2272 = vpop.f32.mrb[0].mxu0
    %v2273 = vpop.f32.mrb[0].mxu0
    %2274 = vdwg.mxu0
    %2275 = vrot.lane.b32.xlu0 %v2055, 112
    %v2276 = vpop.permute.xlu0 %2275
    %2277 = vrot.lane.b32.xlu0 %v2056, 112
    %v2278 = vpop.permute.xlu0 %2277
    %v2280 = vsel %vm229, %v2276, 0
    %v2283 = vsel %vm229, %v2278, 0
    %2285 = vmatprep.subr.bf16.mxu0 0
    %2286 = vmatpush1.bf16.xpose.msra.mxu0 %v2283
    %2287 = vmatprep.subr.bf16.mxu0 0
    %2288 = vmatpush1.bf16.xpose.msra.mxu0 0
    %2289 = vmatprep.subr.bf16.mxu0 0
    %2290 = vmatpush1.bf16.xpose.msra.mxu0 0
    %2291 = vmatprep.subr.bf16.mxu0 0
    %2292 = vmatpush1.bf16.xpose.msra.mxu0 0
    %2293 = vmatprep.subr.bf16.mxu0 0
    %2294 = vmatpush1.bf16.xpose.msra.mxu0 0
    %2295 = vmatprep.subr.bf16.mxu0 0
    %2296 = vmatpush1.bf16.xpose.msra.mxu0 0
    %2297 = vmatprep.subr.bf16.mxu0 0
    %2298 = vmatpush1.bf16.xpose.msra.mxu0 0
    %2299 = vmatprep.subr.bf16.mxu0 0
    %2300 = vmatpush1.bf16.xpose.msra.mxu0 0
    %2301 = vmatprep.subr.bf16.mxu0 0
    %2302 = vmatpush1.bf16.xpose.msra.mxu0 0
    %2303 = vmatprep.subr.bf16.mxu0 0
    %2304 = vmatpush1.bf16.xpose.msra.mxu0 0
    %2305 = vmatprep.subr.bf16.mxu0 0
    %2306 = vmatpush1.bf16.xpose.msra.mxu0 0
    %2307 = vmatprep.subr.bf16.mxu0 0
    %2308 = vmatpush1.bf16.xpose.msra.mxu0 0
    %2309 = vmatprep.subr.bf16.mxu0 0
    %2310 = vmatpush1.bf16.xpose.msra.mxu0 0
    %2311 = vmatprep.subr.bf16.mxu0 0
    %2312 = vmatpush1.bf16.xpose.msra.mxu0 0
    %2313 = vmatprep.subr.bf16.mxu0 0
    %2314 = vmatpush1.bf16.xpose.msra.mxu0 0
    %2315 = vmatprep.subr.bf16.mxu0 0
    %2316 = vmatpush1.bf16.xpose.msra.mxu0 0
    %2317 = vmatprep.mubr.bf16.mxu0 0
    %2318 = vmatmul.mubr.bf16.gmra.mrb[0].mxu0 %v2280
    %v2319 = vpop.f32.mrb[0].mxu0
    %v2320 = vadd.f32 %v691, %v2319
    %v2321 = vpop.f32.mrb[0].mxu0
    %v2322 = vpop.f32.mrb[0].mxu0
    %v2323 = vpop.f32.mrb[0].mxu0
    %2324 = vdwg.mxu0
    %v2325 = vsel %vm229, %v2320, -inf
    %2326 = vmax.xlane.f32.xlu0 %v2325
    %v2327 = vpop.xlane.xlu0 %2326
    %v2328 = vsub.f32 %v2320, %v2327
    %v2329 = vmul.f32 %v2328, 1.442695
    %v2330 = vpow.pop %v2329
    %v2331 = vsel %vm229, %v2330, 0.0
    %2332 = vadd.xlane.f32.xlu0 %v2331
    %v2333 = vpop.xlane.xlu0 %2332
    %v2334 = vrcp.pop %v2333
    %v2335 = vmul.f32 %v2330, %v2334
    %v2336 = vpack.c.bf16 %v2335, %v2335
    %2337 = vrot.lane.b32.xlu0 %v2115, 112
    %v2338 = vpop.permute.xlu0 %2337
    %v2340 = vsel %vm229, %v2336, 0
    %v2343 = vsel %vm292, %v2338, 0
    %2345 = vmatprep.subr.bf16.mxu0 0
    %2346 = vmatpush1.bf16.msra.mxu0 %v2343
    %2347 = vmatprep.subr.bf16.mxu0 0
    %2348 = vmatpush1.bf16.msra.mxu0 0
    %2349 = vmatprep.subr.bf16.mxu0 0
    %2350 = vmatpush1.bf16.msra.mxu0 0
    %2351 = vmatprep.subr.bf16.mxu0 0
    %2352 = vmatpush1.bf16.msra.mxu0 0
    %2353 = vmatprep.subr.bf16.mxu0 0
    %2354 = vmatpush1.bf16.msra.mxu0 0
    %2355 = vmatprep.subr.bf16.mxu0 0
    %2356 = vmatpush1.bf16.msra.mxu0 0
    %2357 = vmatprep.subr.bf16.mxu0 0
    %2358 = vmatpush1.bf16.msra.mxu0 0
    %2359 = vmatprep.subr.bf16.mxu0 0
    %2360 = vmatpush1.bf16.msra.mxu0 0
    %2361 = vmatprep.subr.bf16.mxu0 0
    %2362 = vmatpush1.bf16.msra.mxu0 0
    %2363 = vmatprep.subr.bf16.mxu0 0
    %2364 = vmatpush1.bf16.msra.mxu0 0
    %2365 = vmatprep.subr.bf16.mxu0 0
    %2366 = vmatpush1.bf16.msra.mxu0 0
    %2367 = vmatprep.subr.bf16.mxu0 0
    %2368 = vmatpush1.bf16.msra.mxu0 0
    %2369 = vmatprep.subr.bf16.mxu0 0
    %2370 = vmatpush1.bf16.msra.mxu0 0
    %2371 = vmatprep.subr.bf16.mxu0 0
    %2372 = vmatpush1.bf16.msra.mxu0 0
    %2373 = vmatprep.subr.bf16.mxu0 0
    %2374 = vmatpush1.bf16.msra.mxu0 0
    %2375 = vmatprep.subr.bf16.mxu0 0
    %2376 = vmatpush1.bf16.msra.mxu0 0
    %2377 = vmatprep.mubr.bf16.mxu0 0
    %2378 = vmatmul.mubr.bf16.gmra.mrb[0].mxu0 %v2340
    %v2379 = vpop.f32.mrb[0].mxu0
    %v2380 = vadd.f32 0.0, %v2379
    %v2381 = vpop.f32.mrb[0].mxu0
    %v2382 = vpop.f32.mrb[0].mxu0
    %v2383 = vpop.f32.mrb[0].mxu0
    %2384 = vdwg.mxu0
    %2385 = vrot.lane.b32.xlu0 %v2055, 104
    %v2386 = vpop.permute.xlu0 %2385
    %2387 = vrot.lane.b32.xlu0 %v2056, 104
    %v2388 = vpop.permute.xlu0 %2387
    %v2390 = vsel %vm229, %v2386, 0
    %v2393 = vsel %vm229, %v2388, 0
    %2395 = vmatprep.subr.bf16.mxu0 0
    %2396 = vmatpush1.bf16.xpose.msra.mxu0 %v2393
    %2397 = vmatprep.subr.bf16.mxu0 0
    %2398 = vmatpush1.bf16.xpose.msra.mxu0 0
    %2399 = vmatprep.subr.bf16.mxu0 0
    %2400 = vmatpush1.bf16.xpose.msra.mxu0 0
    %2401 = vmatprep.subr.bf16.mxu0 0
    %2402 = vmatpush1.bf16.xpose.msra.mxu0 0
    %2403 = vmatprep.subr.bf16.mxu0 0
    %2404 = vmatpush1.bf16.xpose.msra.mxu0 0
    %2405 = vmatprep.subr.bf16.mxu0 0
    %2406 = vmatpush1.bf16.xpose.msra.mxu0 0
    %2407 = vmatprep.subr.bf16.mxu0 0
    %2408 = vmatpush1.bf16.xpose.msra.mxu0 0
    %2409 = vmatprep.subr.bf16.mxu0 0
    %2410 = vmatpush1.bf16.xpose.msra.mxu0 0
    %2411 = vmatprep.subr.bf16.mxu0 0
    %2412 = vmatpush1.bf16.xpose.msra.mxu0 0
    %2413 = vmatprep.subr.bf16.mxu0 0
    %2414 = vmatpush1.bf16.xpose.msra.mxu0 0
    %2415 = vmatprep.subr.bf16.mxu0 0
    %2416 = vmatpush1.bf16.xpose.msra.mxu0 0
    %2417 = vmatprep.subr.bf16.mxu0 0
    %2418 = vmatpush1.bf16.xpose.msra.mxu0 0
    %2419 = vmatprep.subr.bf16.mxu0 0
    %2420 = vmatpush1.bf16.xpose.msra.mxu0 0
    %2421 = vmatprep.subr.bf16.mxu0 0
    %2422 = vmatpush1.bf16.xpose.msra.mxu0 0
    %2423 = vmatprep.subr.bf16.mxu0 0
    %2424 = vmatpush1.bf16.xpose.msra.mxu0 0
    %2425 = vmatprep.subr.bf16.mxu0 0
    %2426 = vmatpush1.bf16.xpose.msra.mxu0 0
    %2427 = vmatprep.mubr.bf16.mxu0 0
    %2428 = vmatmul.mubr.bf16.gmra.mrb[0].mxu0 %v2390
    %v2429 = vpop.f32.mrb[0].mxu0
    %v2430 = vadd.f32 %v691, %v2429
    %v2431 = vpop.f32.mrb[0].mxu0
    %v2432 = vpop.f32.mrb[0].mxu0
    %v2433 = vpop.f32.mrb[0].mxu0
    %2434 = vdwg.mxu0
    %v2435 = vsel %vm229, %v2430, -inf
    %2436 = vmax.xlane.f32.xlu0 %v2435
    %v2437 = vpop.xlane.xlu0 %2436
    %v2438 = vsub.f32 %v2430, %v2437
    %v2439 = vmul.f32 %v2438, 1.442695
    %v2440 = vpow.pop %v2439
    %v2441 = vsel %vm229, %v2440, 0.0
    %2442 = vadd.xlane.f32.xlu0 %v2441
    %v2443 = vpop.xlane.xlu0 %2442
    %v2444 = vrcp.pop %v2443
    %v2445 = vmul.f32 %v2440, %v2444
    %v2446 = vpack.c.bf16 %v2445, %v2445
    %2447 = vrot.lane.b32.xlu0 %v2115, 104
    %v2448 = vpop.permute.xlu0 %2447
    %v2450 = vsel %vm229, %v2446, 0
    %v2453 = vsel %vm292, %v2448, 0
    %2455 = vmatprep.subr.bf16.mxu0 0
    %2456 = vmatpush1.bf16.msra.mxu0 %v2453
    %2457 = vmatprep.subr.bf16.mxu0 0
    %2458 = vmatpush1.bf16.msra.mxu0 0
    %2459 = vmatprep.subr.bf16.mxu0 0
    %2460 = vmatpush1.bf16.msra.mxu0 0
    %2461 = vmatprep.subr.bf16.mxu0 0
    %2462 = vmatpush1.bf16.msra.mxu0 0
    %2463 = vmatprep.subr.bf16.mxu0 0
    %2464 = vmatpush1.bf16.msra.mxu0 0
    %2465 = vmatprep.subr.bf16.mxu0 0
    %2466 = vmatpush1.bf16.msra.mxu0 0
    %2467 = vmatprep.subr.bf16.mxu0 0
    %2468 = vmatpush1.bf16.msra.mxu0 0
    %2469 = vmatprep.subr.bf16.mxu0 0
    %2470 = vmatpush1.bf16.msra.mxu0 0
    %2471 = vmatprep.subr.bf16.mxu0 0
    %2472 = vmatpush1.bf16.msra.mxu0 0
    %2473 = vmatprep.subr.bf16.mxu0 0
    %2474 = vmatpush1.bf16.msra.mxu0 0
    %2475 = vmatprep.subr.bf16.mxu0 0
    %2476 = vmatpush1.bf16.msra.mxu0 0
    %2477 = vmatprep.subr.bf16.mxu0 0
    %2478 = vmatpush1.bf16.msra.mxu0 0
    %2479 = vmatprep.subr.bf16.mxu0 0
    %2480 = vmatpush1.bf16.msra.mxu0 0
    %2481 = vmatprep.subr.bf16.mxu0 0
    %2482 = vmatpush1.bf16.msra.mxu0 0
    %2483 = vmatprep.subr.bf16.mxu0 0
    %2484 = vmatpush1.bf16.msra.mxu0 0
    %2485 = vmatprep.subr.bf16.mxu0 0
    %2486 = vmatpush1.bf16.msra.mxu0 0
    %2487 = vmatprep.mubr.bf16.mxu0 0
    %2488 = vmatmul.mubr.bf16.gmra.mrb[0].mxu0 %v2450
    %v2489 = vpop.f32.mrb[0].mxu0
    %v2490 = vadd.f32 0.0, %v2489
    %v2491 = vpop.f32.mrb[0].mxu0
    %v2492 = vpop.f32.mrb[0].mxu0
    %v2493 = vpop.f32.mrb[0].mxu0
    %2494 = vdwg.mxu0
    %2496 = vrot.lane.b32.xlu0 %v2270, 8
    %v2497 = vpop.permute.xlu0 %2496
    %2500 = vrot.lane.b32.xlu0 %v2380, 16
    %v2501 = vpop.permute.xlu0 %2500
    %2504 = vrot.lane.b32.xlu0 %v2490, 24
    %v2505 = vpop.permute.xlu0 %2504
    %v2507 = vsel %vm229, %v2157, %v2497
    %v2508 = vsel %vm682, %v2507, %v2501
    %v2509 = vsel %vm684, %v2508, %v2505
    %s2510 = scalar_lea.vmem %s5, 16
    %v2511 = vld [vmem:[%s2510] sm:$0xf]
    %v2512 = vld [vmem:[%s2510 + $0x4] sm:$0xf]
    %v2513 = vld [vmem:[%s2510 + $0x8] sm:$0xf]
    %v2514 = vld [vmem:[%s2510 + $0xc] sm:$0xf]
    %v2515 = vpack.c.bf16 %v2509, %v2054
    %v2516 = vlaneseq
    %v2517 = vshrl.u32 %v2516, 7
    %v2518 = vsub.s32 1, %v2517
    %v2519 = vrot.slane %v1456, %v2518
    %v2524 = vunpack.c.l.b16 %v2511
    %v2525 = vunpack.c.l.b16 %v2512
    %v2526 = vunpack.c.l.b16 %v2513
    %v2527 = vunpack.c.l.b16 %v2514
    %v2528 = vpack.c.b16 %v2525, %v2524
    %v2529 = vpack.c.b16 %v2527, %v2526
    %v2533 = vsel %vm37, %v2515, 0
    %2535 = vmatprep.subr.bf16.mxu0 0
    %2536 = vmatpush1.bf16.msra.mxu0 %v2528
    %2537 = vmatprep.subr.bf16.mxu0 0
    %2538 = vmatpush1.bf16.msra.mxu0 %v2529
    %2539 = vmatprep.subr.bf16.mxu0 0
    %2540 = vmatpush1.bf16.msra.mxu0 0
    %2541 = vmatprep.subr.bf16.mxu0 0
    %2542 = vmatpush1.bf16.msra.mxu0 0
    %2543 = vmatprep.subr.bf16.mxu0 0
    %2544 = vmatpush1.bf16.msra.mxu0 0
    %2545 = vmatprep.subr.bf16.mxu0 0
    %2546 = vmatpush1.bf16.msra.mxu0 0
    %2547 = vmatprep.subr.bf16.mxu0 0
    %2548 = vmatpush1.bf16.msra.mxu0 0
    %2549 = vmatprep.subr.bf16.mxu0 0
    %2550 = vmatpush1.bf16.msra.mxu0 0
    %2551 = vmatprep.subr.bf16.mxu0 0
    %2552 = vmatpush1.bf16.msra.mxu0 0
    %2553 = vmatprep.subr.bf16.mxu0 0
    %2554 = vmatpush1.bf16.msra.mxu0 0
    %2555 = vmatprep.subr.bf16.mxu0 0
    %2556 = vmatpush1.bf16.msra.mxu0 0
    %2557 = vmatprep.subr.bf16.mxu0 0
    %2558 = vmatpush1.bf16.msra.mxu0 0
    %2559 = vmatprep.subr.bf16.mxu0 0
    %2560 = vmatpush1.bf16.msra.mxu0 0
    %2561 = vmatprep.subr.bf16.mxu0 0
    %2562 = vmatpush1.bf16.msra.mxu0 0
    %2563 = vmatprep.subr.bf16.mxu0 0
    %2564 = vmatpush1.bf16.msra.mxu0 0
    %2565 = vmatprep.subr.bf16.mxu0 0
    %2566 = vmatpush1.bf16.msra.mxu0 0
    %2567 = vmatprep.mubr.bf16.mxu0 0
    %2568 = vmatmul.mubr.bf16.gmra.mrb[0].mxu0 %v2533
    %v2569 = vpop.f32.mrb[0].mxu0
    %v2570 = vadd.f32 %v2519, %v2569
    %v2571 = vpop.f32.mrb[0].mxu0
    %v2572 = vpop.f32.mrb[0].mxu0
    %v2573 = vadd.f32 %v2519, %v2572
    %v2574 = vpop.f32.mrb[0].mxu0
    %2575 = vdwg.mxu0
    %v2576 = vadd.f32 %v2570, %v1453
    %v2577 = vadd.f32 %v2573, %v1454
    %v2578 = vsel %vm37, %v2576, 0.0
    %2579 = vadd.xlane.f32.xlu0 %v2578
    %v2580 = vpop.xlane.xlu0 %2579
    %v2581 = vsel %vm37, %v2577, 0.0
    %2582 = vadd.xlane.f32.xlu0 %v2581
    %v2583 = vpop.xlane.xlu0 %2582
    %v2584 = vmul.f32 %v2580, %v44
    %v2585 = vmul.f32 %v2583, %v44
    %v2586 = vsub.f32 %v2576, %v2584
    %v2587 = vsub.f32 %v2577, %v2585
    %v2588 = vmul.f32 %v2586, %v2586
    %v2589 = vmul.f32 %v2587, %v2587
    %v2590 = vsel %vm37, %v2588, 0.0
    %2591 = vadd.xlane.f32.xlu0 %v2590
    %v2592 = vpop.xlane.xlu0 %2591
    %v2593 = vsel %vm37, %v2589, 0.0
    %2594 = vadd.xlane.f32.xlu0 %v2593
    %v2595 = vpop.xlane.xlu0 %2594
    %v2596 = vmul.f32 %v2592, %v44
    %v2597 = vmul.f32 %v2595, %v44
    %v2598 = vadd.f32 %v2596, 1e-05
    %v2599 = vadd.f32 %v2597, 1e-05
    %v2600 = vrsqrt.pop %v2598
    %v2601 = vrsqrt.pop %v2599
    %v2602 = vmul.f32 %v2586, %v2600
    %v2603 = vmul.f32 %v2587, %v2601
    %v2604 = vlaneseq
    %v2605 = vshrl.u32 %v2604, 7
    %v2606 = vsub.s32 2, %v2605
    %v2607 = vrot.slane %v1456, %v2606
    %v2608 = vmul.f32 %v2602, %v2607
    %v2609 = vmul.f32 %v2603, %v2607
    %v2610 = vlaneseq
    %v2611 = vshrl.u32 %v2610, 7
    %v2612 = vsub.s32 3, %v2611
    %v2613 = vrot.slane %v1456, %v2612
    %v2614 = vadd.f32 %v2608, %v2613
    %v2615 = vadd.f32 %v2609, %v2613
    %s2616 = scalar_lea.vmem %s6, 16
    %v2617 = vld [vmem:[%s2616] sm:$0xf]
    %v2618 = vld [vmem:[%s2616 + $0x4] sm:$0xf]
    %v2619 = vld [vmem:[%s2616 + $0x8] sm:$0xf]
    %v2620 = vld [vmem:[%s2616 + $0xc] sm:$0xf]
    %v2621 = vpack.c.bf16 %v2615, %v2614
    %v2622 = vlaneseq
    %v2623 = vshrl.u32 %v2622, 7
    %v2624 = vsub.s32 4, %v2623
    %v2625 = vrot.slane %v1456, %v2624
    %v2630 = vunpack.c.l.b16 %v2617
    %v2631 = vunpack.c.l.b16 %v2618
    %v2632 = vunpack.c.l.b16 %v2619
    %v2633 = vunpack.c.l.b16 %v2620
    %v2634 = vpack.c.b16 %v2631, %v2630
    %v2635 = vpack.c.b16 %v2633, %v2632
    %v2639 = vsel %vm37, %v2621, 0
    %2641 = vmatprep.subr.bf16.mxu0 0
    %2642 = vmatpush1.bf16.msra.mxu0 %v2634
    %2643 = vmatprep.subr.bf16.mxu0 0
    %2644 = vmatpush1.bf16.msra.mxu0 %v2635
    %2645 = vmatprep.subr.bf16.mxu0 0
    %2646 = vmatpush1.bf16.msra.mxu0 0
    %2647 = vmatprep.subr.bf16.mxu0 0
    %2648 = vmatpush1.bf16.msra.mxu0 0
    %2649 = vmatprep.subr.bf16.mxu0 0
    %2650 = vmatpush1.bf16.msra.mxu0 0
    %2651 = vmatprep.subr.bf16.mxu0 0
    %2652 = vmatpush1.bf16.msra.mxu0 0
    %2653 = vmatprep.subr.bf16.mxu0 0
    %2654 = vmatpush1.bf16.msra.mxu0 0
    %2655 = vmatprep.subr.bf16.mxu0 0
    %2656 = vmatpush1.bf16.msra.mxu0 0
    %2657 = vmatprep.subr.bf16.mxu0 0
    %2658 = vmatpush1.bf16.msra.mxu0 0
    %2659 = vmatprep.subr.bf16.mxu0 0
    %2660 = vmatpush1.bf16.msra.mxu0 0
    %2661 = vmatprep.subr.bf16.mxu0 0
    %2662 = vmatpush1.bf16.msra.mxu0 0
    %2663 = vmatprep.subr.bf16.mxu0 0
    %2664 = vmatpush1.bf16.msra.mxu0 0
    %2665 = vmatprep.subr.bf16.mxu0 0
    %2666 = vmatpush1.bf16.msra.mxu0 0
    %2667 = vmatprep.subr.bf16.mxu0 0
    %2668 = vmatpush1.bf16.msra.mxu0 0
    %2669 = vmatprep.subr.bf16.mxu0 0
    %2670 = vmatpush1.bf16.msra.mxu0 0
    %2671 = vmatprep.subr.bf16.mxu0 0
    %2672 = vmatpush1.bf16.msra.mxu0 0
    %2673 = vmatprep.mubr.bf16.mxu0 0
    %2674 = vmatmul.mubr.bf16.gmra.mrb[0].mxu0 %v2639
    %v2675 = vpop.f32.mrb[0].mxu0
    %v2676 = vadd.f32 %v2625, %v2675
    %v2677 = vpop.f32.mrb[0].mxu0
    %v2678 = vpop.f32.mrb[0].mxu0
    %v2679 = vadd.f32 %v2625, %v2678
    %v2680 = vpop.f32.mrb[0].mxu0
    %2681 = vdwg.mxu0
    %v2682 = vmul.f32 %v2676, %v2676
    %v2683 = vmul.f32 %v2679, %v2679
    %v2684 = vmul.f32 %v2676, %v2682
    %v2685 = vmul.f32 %v2679, %v2683
    %v2686 = vmul.f32 %v2684, 0.044715
    %v2687 = vmul.f32 %v2685, 0.044715
    %v2688 = vadd.f32 %v2676, %v2686
    %v2689 = vadd.f32 %v2679, %v2687
    %v2690 = vmul.f32 %v2688, 0.7978846
    %v2691 = vmul.f32 %v2689, 0.7978846
    %v2692 = vtanh.pop %v2690
    %v2693 = vtanh.pop %v2691
    %v2694 = vadd.f32 %v2692, 1.0
    %v2695 = vadd.f32 %v2693, 1.0
    %v2696 = vmul.f32 %v2694, 0.5
    %v2697 = vmul.f32 %v2695, 0.5
    %v2698 = vmul.f32 %v2676, %v2696
    %v2699 = vmul.f32 %v2679, %v2697
    %s2700 = scalar_lea.vmem %s7, 32
    %v2701 = vld [vmem:[%s2700] sm:$0xf]
    %v2702 = vld [vmem:[%s2700 + $0x4] sm:$0xf]
    %v2703 = vld [vmem:[%s2700 + $0x8] sm:$0xf]
    %v2704 = vld [vmem:[%s2700 + $0xc] sm:$0xf]
    %v2705 = vld [vmem:[%s2700 + $0x10] sm:$0xf]
    %v2706 = vld [vmem:[%s2700 + $0x14] sm:$0xf]
    %v2707 = vld [vmem:[%s2700 + $0x18] sm:$0xf]
    %v2708 = vld [vmem:[%s2700 + $0x1c] sm:$0xf]
    %v2709 = vpack.c.bf16 %v2699, %v2698
    %v2710 = vlaneseq
    %v2711 = vshrl.u32 %v2710, 7
    %v2712 = vsub.s32 5, %v2711
    %v2713 = vrot.slane %v1456, %v2712
    %v2722 = vunpack.c.l.b16 %v2701
    %v2723 = vunpack.c.l.b16 %v2702
    %v2724 = vunpack.c.l.b16 %v2703
    %v2725 = vunpack.c.l.b16 %v2704
    %v2726 = vunpack.c.l.b16 %v2705
    %v2727 = vunpack.c.l.b16 %v2706
    %v2728 = vunpack.c.l.b16 %v2707
    %v2729 = vunpack.c.l.b16 %v2708
    %v2730 = vpack.c.b16 %v2723, %v2722
    %v2731 = vpack.c.b16 %v2725, %v2724
    %v2732 = vpack.c.b16 %v2727, %v2726
    %v2733 = vpack.c.b16 %v2729, %v2728
    %v2739 = vsel %vm1370, %v2709, 0
    %2741 = vmatprep.subr.bf16.mxu0 0
    %2742 = vmatpush1.bf16.msra.mxu0 %v2730
    %2743 = vmatprep.subr.bf16.mxu0 0
    %2744 = vmatpush1.bf16.msra.mxu0 %v2731
    %2745 = vmatprep.subr.bf16.mxu0 0
    %2746 = vmatpush1.bf16.msra.mxu0 %v2732
    %2747 = vmatprep.subr.bf16.mxu0 0
    %2748 = vmatpush1.bf16.msra.mxu0 %v2733
    %2749 = vmatprep.subr.bf16.mxu0 0
    %2750 = vmatpush1.bf16.msra.mxu0 0
    %2751 = vmatprep.subr.bf16.mxu0 0
    %2752 = vmatpush1.bf16.msra.mxu0 0
    %2753 = vmatprep.subr.bf16.mxu0 0
    %2754 = vmatpush1.bf16.msra.mxu0 0
    %2755 = vmatprep.subr.bf16.mxu0 0
    %2756 = vmatpush1.bf16.msra.mxu0 0
    %2757 = vmatprep.subr.bf16.mxu0 0
    %2758 = vmatpush1.bf16.msra.mxu0 0
    %2759 = vmatprep.subr.bf16.mxu0 0
    %2760 = vmatpush1.bf16.msra.mxu0 0
    %2761 = vmatprep.subr.bf16.mxu0 0
    %2762 = vmatpush1.bf16.msra.mxu0 0
    %2763 = vmatprep.subr.bf16.mxu0 0
    %2764 = vmatpush1.bf16.msra.mxu0 0
    %2765 = vmatprep.subr.bf16.mxu0 0
    %2766 = vmatpush1.bf16.msra.mxu0 0
    %2767 = vmatprep.subr.bf16.mxu0 0
    %2768 = vmatpush1.bf16.msra.mxu0 0
    %2769 = vmatprep.subr.bf16.mxu0 0
    %2770 = vmatpush1.bf16.msra.mxu0 0
    %2771 = vmatprep.subr.bf16.mxu0 0
    %2772 = vmatpush1.bf16.msra.mxu0 0
    %2773 = vmatprep.mubr.bf16.mxu0 0
    %2774 = vmatmul.mubr.bf16.gmra.mrb[0].mxu0 %v2739
    %v2775 = vpop.f32.mrb[0].mxu0
    %v2776 = vadd.f32 %v2713, %v2775
    %v2777 = vpop.f32.mrb[0].mxu0
    %v2778 = vpop.f32.mrb[0].mxu0
    %v2779 = vadd.f32 %v2713, %v2778
    %v2780 = vpop.f32.mrb[0].mxu0
    %2781 = vdwg.mxu0
    %v2782 = vadd.f32 %v2776, %v2614
    %v2783 = vadd.f32 %v2779, %v2615
    %v2784 = vsel %vm37, %v2782, 0.0
    %2785 = vadd.xlane.f32.xlu0 %v2784
    %v2786 = vpop.xlane.xlu0 %2785
    %v2787 = vsel %vm37, %v2783, 0.0
    %2788 = vadd.xlane.f32.xlu0 %v2787
    %v2789 = vpop.xlane.xlu0 %2788
    %v2790 = vmul.f32 %v2786, %v44
    %v2791 = vmul.f32 %v2789, %v44
    %v2792 = vsub.f32 %v2782, %v2790
    %v2793 = vsub.f32 %v2783, %v2791
    %v2794 = vmul.f32 %v2792, %v2792
    %v2795 = vmul.f32 %v2793, %v2793
    %v2796 = vsel %vm37, %v2794, 0.0
    %2797 = vadd.xlane.f32.xlu0 %v2796
    %v2798 = vpop.xlane.xlu0 %2797
    %v2799 = vsel %vm37, %v2795, 0.0
    %2800 = vadd.xlane.f32.xlu0 %v2799
    %v2801 = vpop.xlane.xlu0 %2800
    %v2802 = vmul.f32 %v2798, %v44
    %v2803 = vmul.f32 %v2801, %v44
    %v2804 = vadd.f32 %v2802, 1e-05
    %v2805 = vadd.f32 %v2803, 1e-05
    %v2806 = vrsqrt.pop %v2804
    %v2807 = vrsqrt.pop %v2805
    %v2808 = vmul.f32 %v2792, %v2806
    %v2809 = vmul.f32 %v2793, %v2807
    %v2810 = vlaneseq
    %v2811 = vshrl.u32 %v2810, 7
    %v2812 = vsub.s32 6, %v2811
    %v2813 = vrot.slane %v1456, %v2812
    %v2814 = vmul.f32 %v2808, %v2813
    %v2815 = vmul.f32 %v2809, %v2813
    %v2816 = vlaneseq
    %v2817 = vshrl.u32 %v2816, 7
    %v2818 = vsub.s32 7, %v2817
    %v2819 = vrot.slane %v1456, %v2818
    %v2820 = vadd.f32 %v2814, %v2819
    %v2821 = vadd.f32 %v2815, %v2819
    %v2823 = vrot.slane %v2821, 7
    %vm2825 = vcmask 1040384
    %v2826 = vsel %vm2825, %v2820, %v2823
    %v2827 = vld [vmem:[%s8] sm:$0xff]
    %v2828 = vld [vmem:[%s8 + $0x8] sm:$0xff]
    %v2829 = vld [vmem:[%s8 + $0x10] sm:$0xff]
    %v2830 = vld [vmem:[%s8 + $0x18] sm:$0xff]
    %v2831 = vpack.c.bf16 %v2826, %v2826
    %v2832 = vlaneseq
    %v2833 = vshrl.u32 %v2832, 7
    %v2834 = vsub.s32 2, %v2833
    %v2835 = vrot.slane %v34, %v2834
    %v2840 = vunpack.c.l.b16 %v2827
    %v2841 = vunpack.c.l.b16 %v2828
    %v2842 = vunpack.c.l.b16 %v2829
    %v2843 = vunpack.c.l.b16 %v2830
    %v2844 = vpack.c.b16 %v2841, %v2840
    %v2845 = vpack.c.b16 %v2843, %v2842
    %v2849 = vsel %vm37, %v2831, 0
    %2851 = vmatprep.subr.bf16.mxu0 0
    %2852 = vmatpush1.bf16.msra.mxu0 %v2844
    %2853 = vmatprep.subr.bf16.mxu0 0
    %2854 = vmatpush1.bf16.msra.mxu0 %v2845
    %2855 = vmatprep.subr.bf16.mxu0 0
    %2856 = vmatpush1.bf16.msra.mxu0 0
    %2857 = vmatprep.subr.bf16.mxu0 0
    %2858 = vmatpush1.bf16.msra.mxu0 0
    %2859 = vmatprep.subr.bf16.mxu0 0
    %2860 = vmatpush1.bf16.msra.mxu0 0
    %2861 = vmatprep.subr.bf16.mxu0 0
    %2862 = vmatpush1.bf16.msra.mxu0 0
    %2863 = vmatprep.subr.bf16.mxu0 0
    %2864 = vmatpush1.bf16.msra.mxu0 0
    %2865 = vmatprep.subr.bf16.mxu0 0
    %2866 = vmatpush1.bf16.msra.mxu0 0
    %2867 = vmatprep.subr.bf16.mxu0 0
    %2868 = vmatpush1.bf16.msra.mxu0 0
    %2869 = vmatprep.subr.bf16.mxu0 0
    %2870 = vmatpush1.bf16.msra.mxu0 0
    %2871 = vmatprep.subr.bf16.mxu0 0
    %2872 = vmatpush1.bf16.msra.mxu0 0
    %2873 = vmatprep.subr.bf16.mxu0 0
    %2874 = vmatpush1.bf16.msra.mxu0 0
    %2875 = vmatprep.subr.bf16.mxu0 0
    %2876 = vmatpush1.bf16.msra.mxu0 0
    %2877 = vmatprep.subr.bf16.mxu0 0
    %2878 = vmatpush1.bf16.msra.mxu0 0
    %2879 = vmatprep.subr.bf16.mxu0 0
    %2880 = vmatpush1.bf16.msra.mxu0 0
    %2881 = vmatprep.subr.bf16.mxu0 0
    %2882 = vmatpush1.bf16.msra.mxu0 0
    %2883 = vmatprep.mubr.bf16.mxu0 0
    %2884 = vmatmul.mubr.bf16.gmra.mrb[0].mxu0 %v2849
    %v2885 = vpop.f32.mrb[0].mxu0
    %v2886 = vadd.f32 %v2835, %v2885
    %v2887 = vpop.f32.mrb[0].mxu0
    %v2888 = vpop.f32.mrb[0].mxu0
    %v2889 = vpop.f32.mrb[0].mxu0
    %2890 = vdwg.mxu0
    %v2891 = vtanh.pop %v2886
    %v2892 = vpack.c.bf16 %v2891, %v2891
    %v2893 = vlaneseq
    %v2894 = vshrl.u32 %v2893, 7
    %v2895 = vsub.s32 3, %v2894
    %v2896 = vrot.slane %v34, %v2895
    %v2897 = vunpack.c.h.b16 %v2827
    %v2898 = vunpack.c.h.b16 %v2828
    %v2899 = vunpack.c.h.b16 %v2829
    %v2900 = vunpack.c.h.b16 %v2830
    %v2901 = vpack.c.b16 %v2898, %v2897
    %v2902 = vpack.c.b16 %v2900, %v2899
    %v2906 = vsel %vm37, %v2892, 0
    %2908 = vmatprep.subr.bf16.mxu0 0
    %2909 = vmatpush1.bf16.msra.mxu0 %v2901
    %2910 = vmatprep.subr.bf16.mxu0 0
    %2911 = vmatpush1.bf16.msra.mxu0 %v2902
    %2912 = vmatprep.subr.bf16.mxu0 0
    %2913 = vmatpush1.bf16.msra.mxu0 0
    %2914 = vmatprep.subr.bf16.mxu0 0
    %2915 = vmatpush1.bf16.msra.mxu0 0
    %2916 = vmatprep.subr.bf16.mxu0 0
    %2917 = vmatpush1.bf16.msra.mxu0 0
    %2918 = vmatprep.subr.bf16.mxu0 0
    %2919 = vmatpush1.bf16.msra.mxu0 0
    %2920 = vmatprep.subr.bf16.mxu0 0
    %2921 = vmatpush1.bf16.msra.mxu0 0
    %2922 = vmatprep.subr.bf16.mxu0 0
    %2923 = vmatpush1.bf16.msra.mxu0 0
    %2924 = vmatprep.subr.bf16.mxu0 0
    %2925 = vmatpush1.bf16.msra.mxu0 0
    %2926 = vmatprep.subr.bf16.mxu0 0
    %2927 = vmatpush1.bf16.msra.mxu0 0
    %2928 = vmatprep.subr.bf16.mxu0 0
    %2929 = vmatpush1.bf16.msra.mxu0 0
    %2930 = vmatprep.subr.bf16.mxu0 0
    %2931 = vmatpush1.bf16.msra.mxu0 0
    %2932 = vmatprep.subr.bf16.mxu0 0
    %2933 = vmatpush1.bf16.msra.mxu0 0
    %2934 = vmatprep.subr.bf16.mxu0 0
    %2935 = vmatpush1.bf16.msra.mxu0 0
    %2936 = vmatprep.subr.bf16.mxu0 0
    %2937 = vmatpush1.bf16.msra.mxu0 0
    %2938 = vmatprep.subr.bf16.mxu0 0
    %2939 = vmatpush1.bf16.msra.mxu0 0
    %2940 = vmatprep.mubr.bf16.mxu0 0
    %2941 = vmatmul.mubr.bf16.gmra.mrb[0].mxu0 %v2906
    %v2942 = vpop.f32.mrb[0].mxu0
    %v2943 = vadd.f32 %v2896, %v2942
    %v2944 = vpop.f32.mrb[0].mxu0
    %v2945 = vpop.f32.mrb[0].mxu0
    %v2946 = vpop.f32.mrb[0].mxu0
    %2947 = vdwg.mxu0
    %2948 = vst [vmem:[#allocation2] sm:$0x3] %v2943
    // Predicated region
    $region38: #{sentiment_classifier_forward.1} parent=1 // pred_check
      _
    $region39: #{sentiment_classifier_forward.1} parent=1 // pred_check_branch
      %2950 = sbr.rel (0) target = $region41
    $region40: #{sentiment_classifier_forward.1} parent=1 // pred_region
      %s2952 = ssub.s32 32, 32
      %2953 = vsyncadd [#allocation3], %s2952
      %s2955 = sshll.u32 [#allocation2], 4
      %s2956 = int_to_ptr.vmem [resolvable:$true] %s2955
      %2958 = dma.vmem_to_hbm [thread:$0]  %s2956, 32, %s9, [#allocation3]
    $region41: #{sentiment_classifier_forward.1} parent=1 // pred_fallthru
      _
    // Predicated region
    $region42: #{sentiment_classifier_forward.1} parent=1 // pred_check
      _
    $region43: #{sentiment_classifier_forward.1} parent=1 // pred_check_branch
      %2960 = sbr.rel (0) target = $region45
    $region44: #{sentiment_classifier_forward.1} parent=1 // pred_region
      %2961 = dma.done [#allocation3], 32
    $region45: #{sentiment_classifier_forward.1} parent=1 // pred_fallthru
      _
    %2962 = vsyncpa [#allocation3], 1

</llo_original>
